<compile_context>
chip_gen: v7x
topology: tpu7x:2x2x1
jax: 0.10.0
libtpu: 0.0.40
codegen_flags: <defaults>
</compile_context>

<pallas_src>
import jax
import jax.numpy as jnp
from jax.experimental import pallas as pl
from jax.experimental.pallas import tpu as pltpu


T_TILE = 32  # tokens per grid step (multiple of 8 -> full-sublane output tiles)


def _make_gru_seq_kernel(hidden_size: int, t_tile: int, seq_len: int):
    H = hidden_size
    needs_mask = (seq_len % t_tile) != 0  # static: padded rows only in last tile

    def kernel(gi_ref,    # (t_tile, 3H) f32  precomputed x@W_ih^T + fused biases (streamed)
               h0_ref,    # (1, H)      f32   initial hidden state (resident)
               whh_ref,   # (H, 3H)     bf16  W_hh^T (resident, constant index_map)
               bhn_ref,   # (1, H)      f32   b_hh_n (kept separate: sits inside r*(...))
               out_ref,   # (t_tile, H) f32   hidden after each token of this tile
               h_scr):    # VMEM (1, H) f32   hidden-state carry across grid steps
        step = pl.program_id(0)

        @pl.when(step == 0)
        def _():
            h_scr[...] = h0_ref[...]

        w_hh = whh_ref[...]                                   # (H, 3H) bf16
        b_hn = bhn_ref[...]                                   # (1, H)  f32
        h = h_scr[...]                                        # (1, H)  f32
        base = step * t_tile

        rows = []
        # Short fixed recurrence over the tile rows — statically unrolled.
        for r in range(t_tile):
            gh = jnp.dot(h.astype(w_hh.dtype), w_hh,
                         preferred_element_type=jnp.float32)  # (1, 3H)
            gi_r = gi_ref[r:r + 1, :]                         # (1, 3H) static slice
            rz = jax.nn.sigmoid(gi_r[:, :2 * H] + gh[:, :2 * H])
            r_gate = rz[:, :H]
            z_gate = rz[:, H:]
            n_gate = jnp.tanh(gi_r[:, 2 * H:] + r_gate * (gh[:, 2 * H:] + b_hn))
            h_new = n_gate + z_gate * (h - n_gate)            # == (1-z)*n + z*h
            if needs_mask:
                # Freeze h on padded tail positions so h_scr stays clean.
                h = jnp.where(base + r < seq_len, h_new, h)
            else:
                h = h_new
            rows.append(h)

        # ONE unmasked full-tile store instead of t_tile masked row stores.
        out_ref[...] = jnp.concatenate(rows, axis=0).astype(out_ref.dtype)
        h_scr[...] = h

    return kernel


def encoder_rnn_sequence(token_ids, hidden0, params, *, t_tile=T_TILE):
    """Run the EncoderRNN over a whole token sequence in one pallas_call.

    token_ids: int array of shape (T,)
    hidden0:   float32 array of shape (1, 1, H)
    returns:   (outputs (T, 1, H), hidden (1, 1, H))
    """
    emb = params["embedding"]          # (V, H)   f32
    w_ih_t = params["w_ih_t"]          # (H, 3H)  bf16
    w_hh_t = params["w_hh_t"]          # (H, 3H)  bf16
    b_i = params["b_i"]                # (1, 3H)  f32   [bihr+bhhr | bihz+bhhz | bihn]
    b_hn = params["b_hn"]              # (1, H)   f32

    V, H = emb.shape
    token_ids = jnp.asarray(token_ids).reshape(-1).astype(jnp.int32)
    T = int(token_ids.shape[0])
    num_tiles = (T + t_tile - 1) // t_tile
    T_pad = num_tiles * t_tile
    tok_pad = jnp.zeros((T_pad,), jnp.int32).at[:T].set(token_ids)

    # Hoisted embedding gather + input projection: one batched XLA matmul.
    x = jnp.take(emb, tok_pad, axis=0)                              # (T_pad, H) f32
    gi = jnp.dot(x.astype(w_ih_t.dtype), w_ih_t,
                 preferred_element_type=jnp.float32) + b_i          # (T_pad, 3H) f32

    h0 = hidden0.reshape(1, H).astype(jnp.float32)
    kernel = _make_gru_seq_kernel(H, t_tile, T)

    grid_spec = pltpu.PrefetchScalarGridSpec(
        num_scalar_prefetch=0,
        grid=(num_tiles,),
        in_specs=[
            pl.BlockSpec((t_tile, 3 * H), lambda i: (i, 0)),   # gi tiles (pipelined)
            pl.BlockSpec((1, H), lambda i: (0, 0)),            # h0 (resident)
            pl.BlockSpec((H, 3 * H), lambda i: (0, 0)),        # W_hh^T (resident)
            pl.BlockSpec((1, H), lambda i: (0, 0)),            # b_hh_n (resident)
        ],
        out_specs=pl.BlockSpec((t_tile, H), lambda i: (i, 0)),
        scratch_shapes=[pltpu.VMEM((1, H), jnp.float32)],
    )

    out = pl.pallas_call(
        kernel,
        grid_spec=grid_spec,
        out_shape=jax.ShapeDtypeStruct((T_pad, H), jnp.float32),
        compiler_params=pltpu.CompilerParams(
            dimension_semantics=("arbitrary",),     # sequential recurrence
            vmem_limit_bytes=32 * 1024 * 1024,
        ),
    )(gi, h0, w_hh_t, b_hn)

    outputs = out[:T]                                # drop padded rows
    hidden = outputs[T - 1:T]                        # hidden after last real token
    return outputs.reshape(T, 1, H), hidden.reshape(1, 1, H)


def encoder_rnn_forward(token_id, hidden, params):
    """Mirrors EncoderRNN.forward(input, hidden): single token -> (output, hidden),
    both of shape (1, 1, H).  Uses the smallest legal tile (8) to minimize waste."""
    out_seq, h_new = encoder_rnn_sequence(
        jnp.asarray(token_id).reshape(-1), hidden, params, t_tile=8)
    H = h_new.shape[-1]
    return out_seq.reshape(1, 1, H), h_new


# --------------------------------------------------------------------------
# Pure-JAX reference (PyTorch nn.GRU semantics), used for correctness checks.
# Uses the same (bf16-stored) weights upcast to f32; the only deltas vs. the
# kernel are the kernel's bf16 operand casts and MXU accumulation order.
# --------------------------------------------------------------------------
def _reference_step(x, h, params):
    H = h.shape[-1]
    w_ih_t = params["w_ih_t"].astype(jnp.float32)
    w_hh_t = params["w_hh_t"].astype(jnp.float32)
    b_ih = params["b_ih_ref"]
    b_hh = params["b_hh_ref"]
    gi = x @ w_ih_t + b_ih
    gh = h @ w_hh_t + b_hh
    i_r, i_z, i_n = gi[:, :H], gi[:, H:2 * H], gi[:, 2 * H:]
    h_r, h_z, h_n = gh[:, :H], gh[:, H:2 * H], gh[:, 2 * H:]
    r = jax.nn.sigmoid(i_r + h_r)
    z = jax.nn.sigmoid(i_z + h_z)
    n = jnp.tanh(i_n + r * h_n)
    return (1.0 - z) * n + z * h


def _reference_sequence(token_ids, hidden0, params):
    emb = params["embedding"]
    H = emb.shape[1]
    h = hidden0.reshape(1, H)
    outs = []
    for t in range(token_ids.shape[0]):
        x = emb[token_ids[t]].reshape(1, H)
        h = _reference_step(x, h, params)
        outs.append(h)
    out = jnp.concatenate(outs, axis=0)
    return out.reshape(-1, 1, H), h.reshape(1, 1, H)


def init_params(key, input_size, hidden_size, weight_dtype=jnp.bfloat16):
    """Deterministic init mimicking PyTorch defaults
    (Embedding ~ N(0,1); GRU ~ U(-1/sqrt(H), 1/sqrt(H)))."""
    k_emb, k_wih, k_whh, k_bih, k_bhh = jax.random.split(key, 5)
    H = hidden_size
    bound = 1.0 / jnp.sqrt(jnp.float32(H))
    emb = jax.random.normal(k_emb, (input_size, H), jnp.float32)
    w_ih = jax.random.uniform(k_wih, (3 * H, H), jnp.float32, -bound, bound)
    w_hh = jax.random.uniform(k_whh, (3 * H, H), jnp.float32, -bound, bound)
    b_ih = jax.random.uniform(k_bih, (3 * H,), jnp.float32, -bound, bound)
    b_hh = jax.random.uniform(k_bhh, (3 * H,), jnp.float32, -bound, bound)

    # Fuse the r/z gate biases (always summed); keep b_hh_n separate
    # (it sits inside r * (h @ W_hn + b_hh_n)).
    b_i = jnp.concatenate([b_ih[:2 * H] + b_hh[:2 * H], b_ih[2 * H:]]).reshape(1, 3 * H)
    b_hn = b_hh[2 * H:].reshape(1, H)

    return {
        "embedding": emb,                              # (V, H)  f32
        "w_ih_t": w_ih.T.astype(weight_dtype),         # (H, 3H) bf16
        "w_hh_t": w_hh.T.astype(weight_dtype),         # (H, 3H) bf16
        "b_i": b_i,                                    # (1, 3H) f32
        "b_hn": b_hn,                                  # (1, H)  f32
        # unfused copies for the reference implementation
        "b_ih_ref": b_ih,
        "b_hh_ref": b_hh,
    }


if __name__ == "__main__":
    VOCAB = 16      # vocabulary size (input_size)
    HIDDEN = 128    # hidden_size (lane-aligned for TPU)
    SEQ = 8         # small sequence (single tile)
    SEQ2 = 37       # ragged multi-tile sequence (exercises cross-tile carry + tail mask)

    key = jax.random.PRNGKey(0)
    params = init_params(key, VOCAB, HIDDEN)

    tokens = jax.random.randint(jax.random.PRNGKey(1), (SEQ,), 0, VOCAB, dtype=jnp.int32)
    hidden0 = jnp.zeros((1, 1, HIDDEN), jnp.float32)      # initHidden()

    # Whole-sequence encoder: one pallas_call for all SEQ steps.
    out_seq, h_seq = encoder_rnn_sequence(tokens, hidden0, params)
    out_seq = jax.block_until_ready(out_seq)
    h_seq = jax.block_until_ready(h_seq)

    # Single-step call with exact EncoderRNN.forward(input, hidden) semantics.
    out1, h1 = encoder_rnn_forward(tokens[:1], hidden0, params)
    out1 = jax.block_until_ready(out1)
    h1 = jax.block_until_ready(h1)

    # Longer / ragged sequence with a nonzero initial hidden (multi-tile path).
    tokens2 = jax.random.randint(jax.random.PRNGKey(2), (SEQ2,), 0, VOCAB, dtype=jnp.int32)
    hidden0b = 0.1 * jax.random.normal(jax.random.PRNGKey(3), (1, 1, HIDDEN), jnp.float32)
    out_seq2, h_seq2 = encoder_rnn_sequence(tokens2, hidden0b, params)
    out_seq2 = jax.block_until_ready(out_seq2)
    h_seq2 = jax.block_until_ready(h_seq2)

    # Correctness checks (tolerance covers bf16 weight/operand casts).
    ref_out, ref_h = _reference_sequence(tokens, hidden0, params)
    assert out_seq.shape == (SEQ, 1, HIDDEN) and h_seq.shape == (1, 1, HIDDEN)
    assert jnp.allclose(out_seq, ref_out, atol=2e-2, rtol=2e-2)
    assert jnp.allclose(h_seq, ref_h, atol=2e-2, rtol=2e-2)

    assert out1.shape == (1, 1, HIDDEN) and h1.shape == (1, 1, HIDDEN)
    assert jnp.allclose(out1, ref_out[0:1], atol=2e-2, rtol=2e-2)
    assert jnp.allclose(h1, ref_out[0:1], atol=2e-2, rtol=2e-2)

    ref_out2, ref_h2 = _reference_sequence(tokens2, hidden0b, params)
    assert out_seq2.shape == (SEQ2, 1, HIDDEN) and h_seq2.shape == (1, 1, HIDDEN)
    assert jnp.allclose(out_seq2, ref_out2, atol=2e-2, rtol=2e-2)
    assert jnp.allclose(h_seq2, ref_h2, atol=2e-2, rtol=2e-2)

    print("KERNEL_OK")
</pallas_src>

<mosaic_0001>
module attributes {stable_mosaic.version = 11 : i64} {
  func.func @kernel(%arg0: i32, %arg1: memref<32x384xf32, #tpu.memory_space<vmem>>, %arg2: memref<1x128xf32, #tpu.memory_space<vmem>>, %arg3: memref<128x384xbf16, #tpu.memory_space<vmem>>, %arg4: memref<1x128xf32, #tpu.memory_space<vmem>>, %arg5: memref<32x128xf32, #tpu.memory_space<vmem>>, %arg6: memref<1x128xf32, #tpu.memory_space<vmem>>) attributes {dimension_semantics = [#tpu.dimension_semantics<arbitrary>], iteration_bounds = array<i64: 1>, scalar_prefetch = 0 : i64, scratch_operands = 1 : i64, tpu.core_type = #tpu.core_type<tc>, window_params = [{transform_indices = @transform_0, window_bounds = array<i64: 32, 384>}, {pipeline_mode = #tpu.pipeline_mode<synchronous>, transform_indices = @transform_1, window_bounds = array<i64: 1, 128>}, {pipeline_mode = #tpu.pipeline_mode<synchronous>, transform_indices = @transform_2, window_bounds = array<i64: 128, 384>}, {pipeline_mode = #tpu.pipeline_mode<synchronous>, transform_indices = @transform_3, window_bounds = array<i64: 1, 128>}, {transform_indices = @transform_4, window_bounds = array<i64: 32, 128>}]} {
    %c0_i32 = arith.constant 0 : i32
    %0 = arith.cmpi eq, %arg0, %c0_i32 : i32
    %1 = arith.extui %0 : i1 to i32
    %c0_i32_0 = arith.constant 0 : i32
    %2 = arith.cmpi ne, %1, %c0_i32_0 : i32
    scf.if %2 {
      %c0_139 = arith.constant 0 : index
      %c0_140 = arith.constant 0 : index
      %812 = vector.load %arg2[%c0_139, %c0_140] : memref<1x128xf32, #tpu.memory_space<vmem>>, vector<1x128xf32>
      %c0_141 = arith.constant 0 : index
      %c0_142 = arith.constant 0 : index
      %813 = vector.load %arg6[%c0_141, %c0_142] : memref<1x128xf32, #tpu.memory_space<vmem>>, vector<1x128xf32>
      tpu.vector_store %arg6[%c0_141, %c0_142], %812 {strides = array<i32>} : memref<1x128xf32, #tpu.memory_space<vmem>>, vector<1x128xf32>,
    } else {
    }
    %c0 = arith.constant 0 : index
    %c0_1 = arith.constant 0 : index
    %3 = vector.load %arg3[%c0, %c0_1] : memref<128x384xbf16, #tpu.memory_space<vmem>>, vector<128x384xbf16>
    %c0_2 = arith.constant 0 : index
    %c0_3 = arith.constant 0 : index
    %4 = vector.load %arg4[%c0_2, %c0_3] : memref<1x128xf32, #tpu.memory_space<vmem>>, vector<1x128xf32>
    %c0_4 = arith.constant 0 : index
    %c0_5 = arith.constant 0 : index
    %5 = vector.load %arg6[%c0_4, %c0_5] : memref<1x128xf32, #tpu.memory_space<vmem>>, vector<1x128xf32>
    %c32_i32 = arith.constant 32 : i32
    %6 = arith.muli %arg0, %c32_i32 : i32
    %7 = arith.truncf %5 : vector<1x128xf32> to vector<1x128xbf16>
    %cst = arith.constant dense<0.000000e+00> : vector<1x384xf32>
    %8 = tpu.matmul %7, %3, %cst {dimension_numbers = #tpu.dot_dimension_numbers<[1], [0], [0], [1], [0, 0, 1, 1], [], []>} : vector<1x128xbf16>, vector<128x384xbf16>, vector<1x384xf32> -> vector<1x384xf32>
    %c0_6 = arith.constant 0 : index
    %c0_7 = arith.constant 0 : index
    %9 = vector.load %arg1[%c0_6, %c0_7] : memref<32x384xf32, #tpu.memory_space<vmem>>, vector<1x384xf32>
    %10 = vector.extract_strided_slice %9 {offsets = [0, 0], sizes = [1, 256], strides = [1, 1]} : vector<1x384xf32> to vector<1x256xf32>
    %11 = vector.extract_strided_slice %8 {offsets = [0, 0], sizes = [1, 256], strides = [1, 1]} : vector<1x384xf32> to vector<1x256xf32>
    %12 = arith.addf %10, %11 : vector<1x256xf32>
    %13 = arith.negf %12 : vector<1x256xf32>
    %14 = math.exp %13 : vector<1x256xf32>
    %cst_8 = arith.constant 1.000000e+00 : f32
    %15 = vector.broadcast %cst_8 : f32 to vector<1x256xf32>
    %16 = arith.addf %15, %14 : vector<1x256xf32>
    %17 = arith.divf %15, %16 : vector<1x256xf32>
    %18 = vector.extract_strided_slice %17 {offsets = [0, 0], sizes = [1, 128], strides = [1, 1]} : vector<1x256xf32> to vector<1x128xf32>
    %19 = vector.extract_strided_slice %17 {offsets = [0, 128], sizes = [1, 128], strides = [1, 1]} : vector<1x256xf32> to vector<1x128xf32>
    %20 = vector.extract_strided_slice %9 {offsets = [0, 256], sizes = [1, 128], strides = [1, 1]} : vector<1x384xf32> to vector<1x128xf32>
    %21 = vector.extract_strided_slice %8 {offsets = [0, 256], sizes = [1, 128], strides = [1, 1]} : vector<1x384xf32> to vector<1x128xf32>
    %22 = arith.addf %21, %4 : vector<1x128xf32>
    %23 = arith.mulf %18, %22 : vector<1x128xf32>
    %24 = arith.addf %20, %23 : vector<1x128xf32>
    %25 = math.tanh %24 : vector<1x128xf32>
    %26 = arith.subf %5, %25 : vector<1x128xf32>
    %27 = arith.mulf %19, %26 : vector<1x128xf32>
    %28 = arith.addf %25, %27 : vector<1x128xf32>
    %c0_i32_9 = arith.constant 0 : i32
    %29 = arith.addi %6, %c0_i32_9 : i32
    %c8_i32 = arith.constant 8 : i32
    %30 = arith.cmpi slt, %29, %c8_i32 : i32
    %31 = arith.select %30, %28, %5 : vector<1x128xf32>
    %32 = arith.truncf %31 : vector<1x128xf32> to vector<1x128xbf16>
    %cst_10 = arith.constant dense<0.000000e+00> : vector<1x384xf32>
    %33 = tpu.matmul %32, %3, %cst_10 {dimension_numbers = #tpu.dot_dimension_numbers<[1], [0], [0], [1], [0, 0, 1, 1], [], []>} : vector<1x128xbf16>, vector<128x384xbf16>, vector<1x384xf32> -> vector<1x384xf32>
    %c1 = arith.constant 1 : index
    %c0_11 = arith.constant 0 : index
    %34 = vector.load %arg1[%c1, %c0_11] : memref<32x384xf32, #tpu.memory_space<vmem>>, vector<1x384xf32>
    %35 = vector.extract_strided_slice %34 {offsets = [0, 0], sizes = [1, 256], strides = [1, 1]} : vector<1x384xf32> to vector<1x256xf32>
    %36 = vector.extract_strided_slice %33 {offsets = [0, 0], sizes = [1, 256], strides = [1, 1]} : vector<1x384xf32> to vector<1x256xf32>
    %37 = arith.addf %35, %36 : vector<1x256xf32>
    %38 = arith.negf %37 : vector<1x256xf32>
    %39 = math.exp %38 : vector<1x256xf32>
    %cst_12 = arith.constant 1.000000e+00 : f32
    %40 = vector.broadcast %cst_12 : f32 to vector<1x256xf32>
    %41 = arith.addf %40, %39 : vector<1x256xf32>
    %42 = arith.divf %40, %41 : vector<1x256xf32>
    %43 = vector.extract_strided_slice %42 {offsets = [0, 0], sizes = [1, 128], strides = [1, 1]} : vector<1x256xf32> to vector<1x128xf32>
    %44 = vector.extract_strided_slice %42 {offsets = [0, 128], sizes = [1, 128], strides = [1, 1]} : vector<1x256xf32> to vector<1x128xf32>
    %45 = vector.extract_strided_slice %34 {offsets = [0, 256], sizes = [1, 128], strides = [1, 1]} : vector<1x384xf32> to vector<1x128xf32>
    %46 = vector.extract_strided_slice %33 {offsets = [0, 256], sizes = [1, 128], strides = [1, 1]} : vector<1x384xf32> to vector<1x128xf32>
    %47 = arith.addf %46, %4 : vector<1x128xf32>
    %48 = arith.mulf %43, %47 : vector<1x128xf32>
    %49 = arith.addf %45, %48 : vector<1x128xf32>
    %50 = math.tanh %49 : vector<1x128xf32>
    %51 = arith.subf %31, %50 : vector<1x128xf32>
    %52 = arith.mulf %44, %51 : vector<1x128xf32>
    %53 = arith.addf %50, %52 : vector<1x128xf32>
    %c1_i32 = arith.constant 1 : i32
    %54 = arith.addi %6, %c1_i32 : i32
    %c8_i32_13 = arith.constant 8 : i32
    %55 = arith.cmpi slt, %54, %c8_i32_13 : i32
    %56 = arith.select %55, %53, %31 : vector<1x128xf32>
    %57 = arith.truncf %56 : vector<1x128xf32> to vector<1x128xbf16>
    %cst_14 = arith.constant dense<0.000000e+00> : vector<1x384xf32>
    %58 = tpu.matmul %57, %3, %cst_14 {dimension_numbers = #tpu.dot_dimension_numbers<[1], [0], [0], [1], [0, 0, 1, 1], [], []>} : vector<1x128xbf16>, vector<128x384xbf16>, vector<1x384xf32> -> vector<1x384xf32>
    %c2 = arith.constant 2 : index
    %c0_15 = arith.constant 0 : index
    %59 = vector.load %arg1[%c2, %c0_15] : memref<32x384xf32, #tpu.memory_space<vmem>>, vector<1x384xf32>
    %60 = vector.extract_strided_slice %59 {offsets = [0, 0], sizes = [1, 256], strides = [1, 1]} : vector<1x384xf32> to vector<1x256xf32>
    %61 = vector.extract_strided_slice %58 {offsets = [0, 0], sizes = [1, 256], strides = [1, 1]} : vector<1x384xf32> to vector<1x256xf32>
    %62 = arith.addf %60, %61 : vector<1x256xf32>
    %63 = arith.negf %62 : vector<1x256xf32>
    %64 = math.exp %63 : vector<1x256xf32>
    %cst_16 = arith.constant 1.000000e+00 : f32
    %65 = vector.broadcast %cst_16 : f32 to vector<1x256xf32>
    %66 = arith.addf %65, %64 : vector<1x256xf32>
    %67 = arith.divf %65, %66 : vector<1x256xf32>
    %68 = vector.extract_strided_slice %67 {offsets = [0, 0], sizes = [1, 128], strides = [1, 1]} : vector<1x256xf32> to vector<1x128xf32>
    %69 = vector.extract_strided_slice %67 {offsets = [0, 128], sizes = [1, 128], strides = [1, 1]} : vector<1x256xf32> to vector<1x128xf32>
    %70 = vector.extract_strided_slice %59 {offsets = [0, 256], sizes = [1, 128], strides = [1, 1]} : vector<1x384xf32> to vector<1x128xf32>
    %71 = vector.extract_strided_slice %58 {offsets = [0, 256], sizes = [1, 128], strides = [1, 1]} : vector<1x384xf32> to vector<1x128xf32>
    %72 = arith.addf %71, %4 : vector<1x128xf32>
    %73 = arith.mulf %68, %72 : vector<1x128xf32>
    %74 = arith.addf %70, %73 : vector<1x128xf32>
    %75 = math.tanh %74 : vector<1x128xf32>
    %76 = arith.subf %56, %75 : vector<1x128xf32>
    %77 = arith.mulf %69, %76 : vector<1x128xf32>
    %78 = arith.addf %75, %77 : vector<1x128xf32>
    %c2_i32 = arith.constant 2 : i32
    %79 = arith.addi %6, %c2_i32 : i32
    %c8_i32_17 = arith.constant 8 : i32
    %80 = arith.cmpi slt, %79, %c8_i32_17 : i32
    %81 = arith.select %80, %78, %56 : vector<1x128xf32>
    %82 = arith.truncf %81 : vector<1x128xf32> to vector<1x128xbf16>
    %cst_18 = arith.constant dense<0.000000e+00> : vector<1x384xf32>
    %83 = tpu.matmul %82, %3, %cst_18 {dimension_numbers = #tpu.dot_dimension_numbers<[1], [0], [0], [1], [0, 0, 1, 1], [], []>} : vector<1x128xbf16>, vector<128x384xbf16>, vector<1x384xf32> -> vector<1x384xf32>
    %c3 = arith.constant 3 : index
    %c0_19 = arith.constant 0 : index
    %84 = vector.load %arg1[%c3, %c0_19] : memref<32x384xf32, #tpu.memory_space<vmem>>, vector<1x384xf32>
    %85 = vector.extract_strided_slice %84 {offsets = [0, 0], sizes = [1, 256], strides = [1, 1]} : vector<1x384xf32> to vector<1x256xf32>
    %86 = vector.extract_strided_slice %83 {offsets = [0, 0], sizes = [1, 256], strides = [1, 1]} : vector<1x384xf32> to vector<1x256xf32>
    %87 = arith.addf %85, %86 : vector<1x256xf32>
    %88 = arith.negf %87 : vector<1x256xf32>
    %89 = math.exp %88 : vector<1x256xf32>
    %cst_20 = arith.constant 1.000000e+00 : f32
    %90 = vector.broadcast %cst_20 : f32 to vector<1x256xf32>
    %91 = arith.addf %90, %89 : vector<1x256xf32>
    %92 = arith.divf %90, %91 : vector<1x256xf32>
    %93 = vector.extract_strided_slice %92 {offsets = [0, 0], sizes = [1, 128], strides = [1, 1]} : vector<1x256xf32> to vector<1x128xf32>
    %94 = vector.extract_strided_slice %92 {offsets = [0, 128], sizes = [1, 128], strides = [1, 1]} : vector<1x256xf32> to vector<1x128xf32>
    %95 = vector.extract_strided_slice %84 {offsets = [0, 256], sizes = [1, 128], strides = [1, 1]} : vector<1x384xf32> to vector<1x128xf32>
    %96 = vector.extract_strided_slice %83 {offsets = [0, 256], sizes = [1, 128], strides = [1, 1]} : vector<1x384xf32> to vector<1x128xf32>
    %97 = arith.addf %96, %4 : vector<1x128xf32>
    %98 = arith.mulf %93, %97 : vector<1x128xf32>
    %99 = arith.addf %95, %98 : vector<1x128xf32>
    %100 = math.tanh %99 : vector<1x128xf32>
    %101 = arith.subf %81, %100 : vector<1x128xf32>
    %102 = arith.mulf %94, %101 : vector<1x128xf32>
    %103 = arith.addf %100, %102 : vector<1x128xf32>
    %c3_i32 = arith.constant 3 : i32
    %104 = arith.addi %6, %c3_i32 : i32
    %c8_i32_21 = arith.constant 8 : i32
    %105 = arith.cmpi slt, %104, %c8_i32_21 : i32
    %106 = arith.select %105, %103, %81 : vector<1x128xf32>
    %107 = arith.truncf %106 : vector<1x128xf32> to vector<1x128xbf16>
    %cst_22 = arith.constant dense<0.000000e+00> : vector<1x384xf32>
    %108 = tpu.matmul %107, %3, %cst_22 {dimension_numbers = #tpu.dot_dimension_numbers<[1], [0], [0], [1], [0, 0, 1, 1], [], []>} : vector<1x128xbf16>, vector<128x384xbf16>, vector<1x384xf32> -> vector<1x384xf32>
    %c4 = arith.constant 4 : index
    %c0_23 = arith.constant 0 : index
    %109 = vector.load %arg1[%c4, %c0_23] : memref<32x384xf32, #tpu.memory_space<vmem>>, vector<1x384xf32>
    %110 = vector.extract_strided_slice %109 {offsets = [0, 0], sizes = [1, 256], strides = [1, 1]} : vector<1x384xf32> to vector<1x256xf32>
    %111 = vector.extract_strided_slice %108 {offsets = [0, 0], sizes = [1, 256], strides = [1, 1]} : vector<1x384xf32> to vector<1x256xf32>
    %112 = arith.addf %110, %111 : vector<1x256xf32>
    %113 = arith.negf %112 : vector<1x256xf32>
    %114 = math.exp %113 : vector<1x256xf32>
    %cst_24 = arith.constant 1.000000e+00 : f32
    %115 = vector.broadcast %cst_24 : f32 to vector<1x256xf32>
    %116 = arith.addf %115, %114 : vector<1x256xf32>
    %117 = arith.divf %115, %116 : vector<1x256xf32>
    %118 = vector.extract_strided_slice %117 {offsets = [0, 0], sizes = [1, 128], strides = [1, 1]} : vector<1x256xf32> to vector<1x128xf32>
    %119 = vector.extract_strided_slice %117 {offsets = [0, 128], sizes = [1, 128], strides = [1, 1]} : vector<1x256xf32> to vector<1x128xf32>
    %120 = vector.extract_strided_slice %109 {offsets = [0, 256], sizes = [1, 128], strides = [1, 1]} : vector<1x384xf32> to vector<1x128xf32>
    %121 = vector.extract_strided_slice %108 {offsets = [0, 256], sizes = [1, 128], strides = [1, 1]} : vector<1x384xf32> to vector<1x128xf32>
    %122 = arith.addf %121, %4 : vector<1x128xf32>
    %123 = arith.mulf %118, %122 : vector<1x128xf32>
    %124 = arith.addf %120, %123 : vector<1x128xf32>
    %125 = math.tanh %124 : vector<1x128xf32>
    %126 = arith.subf %106, %125 : vector<1x128xf32>
    %127 = arith.mulf %119, %126 : vector<1x128xf32>
    %128 = arith.addf %125, %127 : vector<1x128xf32>
    %c4_i32 = arith.constant 4 : i32
    %129 = arith.addi %6, %c4_i32 : i32
    %c8_i32_25 = arith.constant 8 : i32
    %130 = arith.cmpi slt, %129, %c8_i32_25 : i32
    %131 = arith.select %130, %128, %106 : vector<1x128xf32>
    %132 = arith.truncf %131 : vector<1x128xf32> to vector<1x128xbf16>
    %cst_26 = arith.constant dense<0.000000e+00> : vector<1x384xf32>
    %133 = tpu.matmul %132, %3, %cst_26 {dimension_numbers = #tpu.dot_dimension_numbers<[1], [0], [0], [1], [0, 0, 1, 1], [], []>} : vector<1x128xbf16>, vector<128x384xbf16>, vector<1x384xf32> -> vector<1x384xf32>
    %c5 = arith.constant 5 : index
    %c0_27 = arith.constant 0 : index
    %134 = vector.load %arg1[%c5, %c0_27] : memref<32x384xf32, #tpu.memory_space<vmem>>, vector<1x384xf32>
    %135 = vector.extract_strided_slice %134 {offsets = [0, 0], sizes = [1, 256], strides = [1, 1]} : vector<1x384xf32> to vector<1x256xf32>
    %136 = vector.extract_strided_slice %133 {offsets = [0, 0], sizes = [1, 256], strides = [1, 1]} : vector<1x384xf32> to vector<1x256xf32>
    %137 = arith.addf %135, %136 : vector<1x256xf32>
    %138 = arith.negf %137 : vector<1x256xf32>
    %139 = math.exp %138 : vector<1x256xf32>
    %cst_28 = arith.constant 1.000000e+00 : f32
    %140 = vector.broadcast %cst_28 : f32 to vector<1x256xf32>
    %141 = arith.addf %140, %139 : vector<1x256xf32>
    %142 = arith.divf %140, %141 : vector<1x256xf32>
    %143 = vector.extract_strided_slice %142 {offsets = [0, 0], sizes = [1, 128], strides = [1, 1]} : vector<1x256xf32> to vector<1x128xf32>
    %144 = vector.extract_strided_slice %142 {offsets = [0, 128], sizes = [1, 128], strides = [1, 1]} : vector<1x256xf32> to vector<1x128xf32>
    %145 = vector.extract_strided_slice %134 {offsets = [0, 256], sizes = [1, 128], strides = [1, 1]} : vector<1x384xf32> to vector<1x128xf32>
    %146 = vector.extract_strided_slice %133 {offsets = [0, 256], sizes = [1, 128], strides = [1, 1]} : vector<1x384xf32> to vector<1x128xf32>
    %147 = arith.addf %146, %4 : vector<1x128xf32>
    %148 = arith.mulf %143, %147 : vector<1x128xf32>
    %149 = arith.addf %145, %148 : vector<1x128xf32>
    %150 = math.tanh %149 : vector<1x128xf32>
    %151 = arith.subf %131, %150 : vector<1x128xf32>
    %152 = arith.mulf %144, %151 : vector<1x128xf32>
    %153 = arith.addf %150, %152 : vector<1x128xf32>
    %c5_i32 = arith.constant 5 : i32
    %154 = arith.addi %6, %c5_i32 : i32
    %c8_i32_29 = arith.constant 8 : i32
    %155 = arith.cmpi slt, %154, %c8_i32_29 : i32
    %156 = arith.select %155, %153, %131 : vector<1x128xf32>
    %157 = arith.truncf %156 : vector<1x128xf32> to vector<1x128xbf16>
    %cst_30 = arith.constant dense<0.000000e+00> : vector<1x384xf32>
    %158 = tpu.matmul %157, %3, %cst_30 {dimension_numbers = #tpu.dot_dimension_numbers<[1], [0], [0], [1], [0, 0, 1, 1], [], []>} : vector<1x128xbf16>, vector<128x384xbf16>, vector<1x384xf32> -> vector<1x384xf32>
    %c6 = arith.constant 6 : index
    %c0_31 = arith.constant 0 : index
    %159 = vector.load %arg1[%c6, %c0_31] : memref<32x384xf32, #tpu.memory_space<vmem>>, vector<1x384xf32>
    %160 = vector.extract_strided_slice %159 {offsets = [0, 0], sizes = [1, 256], strides = [1, 1]} : vector<1x384xf32> to vector<1x256xf32>
    %161 = vector.extract_strided_slice %158 {offsets = [0, 0], sizes = [1, 256], strides = [1, 1]} : vector<1x384xf32> to vector<1x256xf32>
    %162 = arith.addf %160, %161 : vector<1x256xf32>
    %163 = arith.negf %162 : vector<1x256xf32>
    %164 = math.exp %163 : vector<1x256xf32>
    %cst_32 = arith.constant 1.000000e+00 : f32
    %165 = vector.broadcast %cst_32 : f32 to vector<1x256xf32>
    %166 = arith.addf %165, %164 : vector<1x256xf32>
    %167 = arith.divf %165, %166 : vector<1x256xf32>
    %168 = vector.extract_strided_slice %167 {offsets = [0, 0], sizes = [1, 128], strides = [1, 1]} : vector<1x256xf32> to vector<1x128xf32>
    %169 = vector.extract_strided_slice %167 {offsets = [0, 128], sizes = [1, 128], strides = [1, 1]} : vector<1x256xf32> to vector<1x128xf32>
    %170 = vector.extract_strided_slice %159 {offsets = [0, 256], sizes = [1, 128], strides = [1, 1]} : vector<1x384xf32> to vector<1x128xf32>
    %171 = vector.extract_strided_slice %158 {offsets = [0, 256], sizes = [1, 128], strides = [1, 1]} : vector<1x384xf32> to vector<1x128xf32>
    %172 = arith.addf %171, %4 : vector<1x128xf32>
    %173 = arith.mulf %168, %172 : vector<1x128xf32>
    %174 = arith.addf %170, %173 : vector<1x128xf32>
    %175 = math.tanh %174 : vector<1x128xf32>
    %176 = arith.subf %156, %175 : vector<1x128xf32>
    %177 = arith.mulf %169, %176 : vector<1x128xf32>
    %178 = arith.addf %175, %177 : vector<1x128xf32>
    %c6_i32 = arith.constant 6 : i32
    %179 = arith.addi %6, %c6_i32 : i32
    %c8_i32_33 = arith.constant 8 : i32
    %180 = arith.cmpi slt, %179, %c8_i32_33 : i32
    %181 = arith.select %180, %178, %156 : vector<1x128xf32>
    %182 = arith.truncf %181 : vector<1x128xf32> to vector<1x128xbf16>
    %cst_34 = arith.constant dense<0.000000e+00> : vector<1x384xf32>
    %183 = tpu.matmul %182, %3, %cst_34 {dimension_numbers = #tpu.dot_dimension_numbers<[1], [0], [0], [1], [0, 0, 1, 1], [], []>} : vector<1x128xbf16>, vector<128x384xbf16>, vector<1x384xf32> -> vector<1x384xf32>
    %c7 = arith.constant 7 : index
    %c0_35 = arith.constant 0 : index
    %184 = vector.load %arg1[%c7, %c0_35] : memref<32x384xf32, #tpu.memory_space<vmem>>, vector<1x384xf32>
    %185 = vector.extract_strided_slice %184 {offsets = [0, 0], sizes = [1, 256], strides = [1, 1]} : vector<1x384xf32> to vector<1x256xf32>
    %186 = vector.extract_strided_slice %183 {offsets = [0, 0], sizes = [1, 256], strides = [1, 1]} : vector<1x384xf32> to vector<1x256xf32>
    %187 = arith.addf %185, %186 : vector<1x256xf32>
    %188 = arith.negf %187 : vector<1x256xf32>
    %189 = math.exp %188 : vector<1x256xf32>
    %cst_36 = arith.constant 1.000000e+00 : f32
    %190 = vector.broadcast %cst_36 : f32 to vector<1x256xf32>
    %191 = arith.addf %190, %189 : vector<1x256xf32>
    %192 = arith.divf %190, %191 : vector<1x256xf32>
    %193 = vector.extract_strided_slice %192 {offsets = [0, 0], sizes = [1, 128], strides = [1, 1]} : vector<1x256xf32> to vector<1x128xf32>
    %194 = vector.extract_strided_slice %192 {offsets = [0, 128], sizes = [1, 128], strides = [1, 1]} : vector<1x256xf32> to vector<1x128xf32>
    %195 = vector.extract_strided_slice %184 {offsets = [0, 256], sizes = [1, 128], strides = [1, 1]} : vector<1x384xf32> to vector<1x128xf32>
    %196 = vector.extract_strided_slice %183 {offsets = [0, 256], sizes = [1, 128], strides = [1, 1]} : vector<1x384xf32> to vector<1x128xf32>
    %197 = arith.addf %196, %4 : vector<1x128xf32>
    %198 = arith.mulf %193, %197 : vector<1x128xf32>
    %199 = arith.addf %195, %198 : vector<1x128xf32>
    %200 = math.tanh %199 : vector<1x128xf32>
    %201 = arith.subf %181, %200 : vector<1x128xf32>
    %202 = arith.mulf %194, %201 : vector<1x128xf32>
    %203 = arith.addf %200, %202 : vector<1x128xf32>
    %c7_i32 = arith.constant 7 : i32
    %204 = arith.addi %6, %c7_i32 : i32
    %c8_i32_37 = arith.constant 8 : i32
    %205 = arith.cmpi slt, %204, %c8_i32_37 : i32
    %206 = arith.select %205, %203, %181 : vector<1x128xf32>
    %207 = arith.truncf %206 : vector<1x128xf32> to vector<1x128xbf16>
    %cst_38 = arith.constant dense<0.000000e+00> : vector<1x384xf32>
    %208 = tpu.matmul %207, %3, %cst_38 {dimension_numbers = #tpu.dot_dimension_numbers<[1], [0], [0], [1], [0, 0, 1, 1], [], []>} : vector<1x128xbf16>, vector<128x384xbf16>, vector<1x384xf32> -> vector<1x384xf32>
    %c8 = arith.constant 8 : index
    %c0_39 = arith.constant 0 : index
    %209 = vector.load %arg1[%c8, %c0_39] : memref<32x384xf32, #tpu.memory_space<vmem>>, vector<1x384xf32>
    %210 = vector.extract_strided_slice %209 {offsets = [0, 0], sizes = [1, 256], strides = [1, 1]} : vector<1x384xf32> to vector<1x256xf32>
    %211 = vector.extract_strided_slice %208 {offsets = [0, 0], sizes = [1, 256], strides = [1, 1]} : vector<1x384xf32> to vector<1x256xf32>
    %212 = arith.addf %210, %211 : vector<1x256xf32>
    %213 = arith.negf %212 : vector<1x256xf32>
    %214 = math.exp %213 : vector<1x256xf32>
    %cst_40 = arith.constant 1.000000e+00 : f32
    %215 = vector.broadcast %cst_40 : f32 to vector<1x256xf32>
    %216 = arith.addf %215, %214 : vector<1x256xf32>
    %217 = arith.divf %215, %216 : vector<1x256xf32>
    %218 = vector.extract_strided_slice %217 {offsets = [0, 0], sizes = [1, 128], strides = [1, 1]} : vector<1x256xf32> to vector<1x128xf32>
    %219 = vector.extract_strided_slice %217 {offsets = [0, 128], sizes = [1, 128], strides = [1, 1]} : vector<1x256xf32> to vector<1x128xf32>
    %220 = vector.extract_strided_slice %209 {offsets = [0, 256], sizes = [1, 128], strides = [1, 1]} : vector<1x384xf32> to vector<1x128xf32>
    %221 = vector.extract_strided_slice %208 {offsets = [0, 256], sizes = [1, 128], strides = [1, 1]} : vector<1x384xf32> to vector<1x128xf32>
    %222 = arith.addf %221, %4 : vector<1x128xf32>
    %223 = arith.mulf %218, %222 : vector<1x128xf32>
    %224 = arith.addf %220, %223 : vector<1x128xf32>
    %225 = math.tanh %224 : vector<1x128xf32>
    %226 = arith.subf %206, %225 : vector<1x128xf32>
    %227 = arith.mulf %219, %226 : vector<1x128xf32>
    %228 = arith.addf %225, %227 : vector<1x128xf32>
    %c8_i32_41 = arith.constant 8 : i32
    %229 = arith.addi %6, %c8_i32_41 : i32
    %c8_i32_42 = arith.constant 8 : i32
    %230 = arith.cmpi slt, %229, %c8_i32_42 : i32
    %231 = arith.select %230, %228, %206 : vector<1x128xf32>
    %232 = arith.truncf %231 : vector<1x128xf32> to vector<1x128xbf16>
    %cst_43 = arith.constant dense<0.000000e+00> : vector<1x384xf32>
    %233 = tpu.matmul %232, %3, %cst_43 {dimension_numbers = #tpu.dot_dimension_numbers<[1], [0], [0], [1], [0, 0, 1, 1], [], []>} : vector<1x128xbf16>, vector<128x384xbf16>, vector<1x384xf32> -> vector<1x384xf32>
    %c9 = arith.constant 9 : index
    %c0_44 = arith.constant 0 : index
    %234 = vector.load %arg1[%c9, %c0_44] : memref<32x384xf32, #tpu.memory_space<vmem>>, vector<1x384xf32>
    %235 = vector.extract_strided_slice %234 {offsets = [0, 0], sizes = [1, 256], strides = [1, 1]} : vector<1x384xf32> to vector<1x256xf32>
    %236 = vector.extract_strided_slice %233 {offsets = [0, 0], sizes = [1, 256], strides = [1, 1]} : vector<1x384xf32> to vector<1x256xf32>
    %237 = arith.addf %235, %236 : vector<1x256xf32>
    %238 = arith.negf %237 : vector<1x256xf32>
    %239 = math.exp %238 : vector<1x256xf32>
    %cst_45 = arith.constant 1.000000e+00 : f32
    %240 = vector.broadcast %cst_45 : f32 to vector<1x256xf32>
    %241 = arith.addf %240, %239 : vector<1x256xf32>
    %242 = arith.divf %240, %241 : vector<1x256xf32>
    %243 = vector.extract_strided_slice %242 {offsets = [0, 0], sizes = [1, 128], strides = [1, 1]} : vector<1x256xf32> to vector<1x128xf32>
    %244 = vector.extract_strided_slice %242 {offsets = [0, 128], sizes = [1, 128], strides = [1, 1]} : vector<1x256xf32> to vector<1x128xf32>
    %245 = vector.extract_strided_slice %234 {offsets = [0, 256], sizes = [1, 128], strides = [1, 1]} : vector<1x384xf32> to vector<1x128xf32>
    %246 = vector.extract_strided_slice %233 {offsets = [0, 256], sizes = [1, 128], strides = [1, 1]} : vector<1x384xf32> to vector<1x128xf32>
    %247 = arith.addf %246, %4 : vector<1x128xf32>
    %248 = arith.mulf %243, %247 : vector<1x128xf32>
    %249 = arith.addf %245, %248 : vector<1x128xf32>
    %250 = math.tanh %249 : vector<1x128xf32>
    %251 = arith.subf %231, %250 : vector<1x128xf32>
    %252 = arith.mulf %244, %251 : vector<1x128xf32>
    %253 = arith.addf %250, %252 : vector<1x128xf32>
    %c9_i32 = arith.constant 9 : i32
    %254 = arith.addi %6, %c9_i32 : i32
    %c8_i32_46 = arith.constant 8 : i32
    %255 = arith.cmpi slt, %254, %c8_i32_46 : i32
    %256 = arith.select %255, %253, %231 : vector<1x128xf32>
    %257 = arith.truncf %256 : vector<1x128xf32> to vector<1x128xbf16>
    %cst_47 = arith.constant dense<0.000000e+00> : vector<1x384xf32>
    %258 = tpu.matmul %257, %3, %cst_47 {dimension_numbers = #tpu.dot_dimension_numbers<[1], [0], [0], [1], [0, 0, 1, 1], [], []>} : vector<1x128xbf16>, vector<128x384xbf16>, vector<1x384xf32> -> vector<1x384xf32>
    %c10 = arith.constant 10 : index
    %c0_48 = arith.constant 0 : index
    %259 = vector.load %arg1[%c10, %c0_48] : memref<32x384xf32, #tpu.memory_space<vmem>>, vector<1x384xf32>
    %260 = vector.extract_strided_slice %259 {offsets = [0, 0], sizes = [1, 256], strides = [1, 1]} : vector<1x384xf32> to vector<1x256xf32>
    %261 = vector.extract_strided_slice %258 {offsets = [0, 0], sizes = [1, 256], strides = [1, 1]} : vector<1x384xf32> to vector<1x256xf32>
    %262 = arith.addf %260, %261 : vector<1x256xf32>
    %263 = arith.negf %262 : vector<1x256xf32>
    %264 = math.exp %263 : vector<1x256xf32>
    %cst_49 = arith.constant 1.000000e+00 : f32
    %265 = vector.broadcast %cst_49 : f32 to vector<1x256xf32>
    %266 = arith.addf %265, %264 : vector<1x256xf32>
    %267 = arith.divf %265, %266 : vector<1x256xf32>
    %268 = vector.extract_strided_slice %267 {offsets = [0, 0], sizes = [1, 128], strides = [1, 1]} : vector<1x256xf32> to vector<1x128xf32>
    %269 = vector.extract_strided_slice %267 {offsets = [0, 128], sizes = [1, 128], strides = [1, 1]} : vector<1x256xf32> to vector<1x128xf32>
    %270 = vector.extract_strided_slice %259 {offsets = [0, 256], sizes = [1, 128], strides = [1, 1]} : vector<1x384xf32> to vector<1x128xf32>
    %271 = vector.extract_strided_slice %258 {offsets = [0, 256], sizes = [1, 128], strides = [1, 1]} : vector<1x384xf32> to vector<1x128xf32>
    %272 = arith.addf %271, %4 : vector<1x128xf32>
    %273 = arith.mulf %268, %272 : vector<1x128xf32>
    %274 = arith.addf %270, %273 : vector<1x128xf32>
    %275 = math.tanh %274 : vector<1x128xf32>
    %276 = arith.subf %256, %275 : vector<1x128xf32>
    %277 = arith.mulf %269, %276 : vector<1x128xf32>
    %278 = arith.addf %275, %277 : vector<1x128xf32>
    %c10_i32 = arith.constant 10 : i32
    %279 = arith.addi %6, %c10_i32 : i32
    %c8_i32_50 = arith.constant 8 : i32
    %280 = arith.cmpi slt, %279, %c8_i32_50 : i32
    %281 = arith.select %280, %278, %256 : vector<1x128xf32>
    %282 = arith.truncf %281 : vector<1x128xf32> to vector<1x128xbf16>
    %cst_51 = arith.constant dense<0.000000e+00> : vector<1x384xf32>
    %283 = tpu.matmul %282, %3, %cst_51 {dimension_numbers = #tpu.dot_dimension_numbers<[1], [0], [0], [1], [0, 0, 1, 1], [], []>} : vector<1x128xbf16>, vector<128x384xbf16>, vector<1x384xf32> -> vector<1x384xf32>
    %c11 = arith.constant 11 : index
    %c0_52 = arith.constant 0 : index
    %284 = vector.load %arg1[%c11, %c0_52] : memref<32x384xf32, #tpu.memory_space<vmem>>, vector<1x384xf32>
    %285 = vector.extract_strided_slice %284 {offsets = [0, 0], sizes = [1, 256], strides = [1, 1]} : vector<1x384xf32> to vector<1x256xf32>
    %286 = vector.extract_strided_slice %283 {offsets = [0, 0], sizes = [1, 256], strides = [1, 1]} : vector<1x384xf32> to vector<1x256xf32>
    %287 = arith.addf %285, %286 : vector<1x256xf32>
    %288 = arith.negf %287 : vector<1x256xf32>
    %289 = math.exp %288 : vector<1x256xf32>
    %cst_53 = arith.constant 1.000000e+00 : f32
    %290 = vector.broadcast %cst_53 : f32 to vector<1x256xf32>
    %291 = arith.addf %290, %289 : vector<1x256xf32>
    %292 = arith.divf %290, %291 : vector<1x256xf32>
    %293 = vector.extract_strided_slice %292 {offsets = [0, 0], sizes = [1, 128], strides = [1, 1]} : vector<1x256xf32> to vector<1x128xf32>
    %294 = vector.extract_strided_slice %292 {offsets = [0, 128], sizes = [1, 128], strides = [1, 1]} : vector<1x256xf32> to vector<1x128xf32>
    %295 = vector.extract_strided_slice %284 {offsets = [0, 256], sizes = [1, 128], strides = [1, 1]} : vector<1x384xf32> to vector<1x128xf32>
    %296 = vector.extract_strided_slice %283 {offsets = [0, 256], sizes = [1, 128], strides = [1, 1]} : vector<1x384xf32> to vector<1x128xf32>
    %297 = arith.addf %296, %4 : vector<1x128xf32>
    %298 = arith.mulf %293, %297 : vector<1x128xf32>
    %299 = arith.addf %295, %298 : vector<1x128xf32>
    %300 = math.tanh %299 : vector<1x128xf32>
    %301 = arith.subf %281, %300 : vector<1x128xf32>
    %302 = arith.mulf %294, %301 : vector<1x128xf32>
    %303 = arith.addf %300, %302 : vector<1x128xf32>
    %c11_i32 = arith.constant 11 : i32
    %304 = arith.addi %6, %c11_i32 : i32
    %c8_i32_54 = arith.constant 8 : i32
    %305 = arith.cmpi slt, %304, %c8_i32_54 : i32
    %306 = arith.select %305, %303, %281 : vector<1x128xf32>
    %307 = arith.truncf %306 : vector<1x128xf32> to vector<1x128xbf16>
    %cst_55 = arith.constant dense<0.000000e+00> : vector<1x384xf32>
    %308 = tpu.matmul %307, %3, %cst_55 {dimension_numbers = #tpu.dot_dimension_numbers<[1], [0], [0], [1], [0, 0, 1, 1], [], []>} : vector<1x128xbf16>, vector<128x384xbf16>, vector<1x384xf32> -> vector<1x384xf32>
    %c12 = arith.constant 12 : index
    %c0_56 = arith.constant 0 : index
    %309 = vector.load %arg1[%c12, %c0_56] : memref<32x384xf32, #tpu.memory_space<vmem>>, vector<1x384xf32>
    %310 = vector.extract_strided_slice %309 {offsets = [0, 0], sizes = [1, 256], strides = [1, 1]} : vector<1x384xf32> to vector<1x256xf32>
    %311 = vector.extract_strided_slice %308 {offsets = [0, 0], sizes = [1, 256], strides = [1, 1]} : vector<1x384xf32> to vector<1x256xf32>
    %312 = arith.addf %310, %311 : vector<1x256xf32>
    %313 = arith.negf %312 : vector<1x256xf32>
    %314 = math.exp %313 : vector<1x256xf32>
    %cst_57 = arith.constant 1.000000e+00 : f32
    %315 = vector.broadcast %cst_57 : f32 to vector<1x256xf32>
    %316 = arith.addf %315, %314 : vector<1x256xf32>
    %317 = arith.divf %315, %316 : vector<1x256xf32>
    %318 = vector.extract_strided_slice %317 {offsets = [0, 0], sizes = [1, 128], strides = [1, 1]} : vector<1x256xf32> to vector<1x128xf32>
    %319 = vector.extract_strided_slice %317 {offsets = [0, 128], sizes = [1, 128], strides = [1, 1]} : vector<1x256xf32> to vector<1x128xf32>
    %320 = vector.extract_strided_slice %309 {offsets = [0, 256], sizes = [1, 128], strides = [1, 1]} : vector<1x384xf32> to vector<1x128xf32>
    %321 = vector.extract_strided_slice %308 {offsets = [0, 256], sizes = [1, 128], strides = [1, 1]} : vector<1x384xf32> to vector<1x128xf32>
    %322 = arith.addf %321, %4 : vector<1x128xf32>
    %323 = arith.mulf %318, %322 : vector<1x128xf32>
    %324 = arith.addf %320, %323 : vector<1x128xf32>
    %325 = math.tanh %324 : vector<1x128xf32>
    %326 = arith.subf %306, %325 : vector<1x128xf32>
    %327 = arith.mulf %319, %326 : vector<1x128xf32>
    %328 = arith.addf %325, %327 : vector<1x128xf32>
    %c12_i32 = arith.constant 12 : i32
    %329 = arith.addi %6, %c12_i32 : i32
    %c8_i32_58 = arith.constant 8 : i32
    %330 = arith.cmpi slt, %329, %c8_i32_58 : i32
    %331 = arith.select %330, %328, %306 : vector<1x128xf32>
    %332 = arith.truncf %331 : vector<1x128xf32> to vector<1x128xbf16>
    %cst_59 = arith.constant dense<0.000000e+00> : vector<1x384xf32>
    %333 = tpu.matmul %332, %3, %cst_59 {dimension_numbers = #tpu.dot_dimension_numbers<[1], [0], [0], [1], [0, 0, 1, 1], [], []>} : vector<1x128xbf16>, vector<128x384xbf16>, vector<1x384xf32> -> vector<1x384xf32>
    %c13 = arith.constant 13 : index
    %c0_60 = arith.constant 0 : index
    %334 = vector.load %arg1[%c13, %c0_60] : memref<32x384xf32, #tpu.memory_space<vmem>>, vector<1x384xf32>
    %335 = vector.extract_strided_slice %334 {offsets = [0, 0], sizes = [1, 256], strides = [1, 1]} : vector<1x384xf32> to vector<1x256xf32>
    %336 = vector.extract_strided_slice %333 {offsets = [0, 0], sizes = [1, 256], strides = [1, 1]} : vector<1x384xf32> to vector<1x256xf32>
    %337 = arith.addf %335, %336 : vector<1x256xf32>
    %338 = arith.negf %337 : vector<1x256xf32>
    %339 = math.exp %338 : vector<1x256xf32>
    %cst_61 = arith.constant 1.000000e+00 : f32
    %340 = vector.broadcast %cst_61 : f32 to vector<1x256xf32>
    %341 = arith.addf %340, %339 : vector<1x256xf32>
    %342 = arith.divf %340, %341 : vector<1x256xf32>
    %343 = vector.extract_strided_slice %342 {offsets = [0, 0], sizes = [1, 128], strides = [1, 1]} : vector<1x256xf32> to vector<1x128xf32>
    %344 = vector.extract_strided_slice %342 {offsets = [0, 128], sizes = [1, 128], strides = [1, 1]} : vector<1x256xf32> to vector<1x128xf32>
    %345 = vector.extract_strided_slice %334 {offsets = [0, 256], sizes = [1, 128], strides = [1, 1]} : vector<1x384xf32> to vector<1x128xf32>
    %346 = vector.extract_strided_slice %333 {offsets = [0, 256], sizes = [1, 128], strides = [1, 1]} : vector<1x384xf32> to vector<1x128xf32>
    %347 = arith.addf %346, %4 : vector<1x128xf32>
    %348 = arith.mulf %343, %347 : vector<1x128xf32>
    %349 = arith.addf %345, %348 : vector<1x128xf32>
    %350 = math.tanh %349 : vector<1x128xf32>
    %351 = arith.subf %331, %350 : vector<1x128xf32>
    %352 = arith.mulf %344, %351 : vector<1x128xf32>
    %353 = arith.addf %350, %352 : vector<1x128xf32>
    %c13_i32 = arith.constant 13 : i32
    %354 = arith.addi %6, %c13_i32 : i32
    %c8_i32_62 = arith.constant 8 : i32
    %355 = arith.cmpi slt, %354, %c8_i32_62 : i32
    %356 = arith.select %355, %353, %331 : vector<1x128xf32>
    %357 = arith.truncf %356 : vector<1x128xf32> to vector<1x128xbf16>
    %cst_63 = arith.constant dense<0.000000e+00> : vector<1x384xf32>
    %358 = tpu.matmul %357, %3, %cst_63 {dimension_numbers = #tpu.dot_dimension_numbers<[1], [0], [0], [1], [0, 0, 1, 1], [], []>} : vector<1x128xbf16>, vector<128x384xbf16>, vector<1x384xf32> -> vector<1x384xf32>
    %c14 = arith.constant 14 : index
    %c0_64 = arith.constant 0 : index
    %359 = vector.load %arg1[%c14, %c0_64] : memref<32x384xf32, #tpu.memory_space<vmem>>, vector<1x384xf32>
    %360 = vector.extract_strided_slice %359 {offsets = [0, 0], sizes = [1, 256], strides = [1, 1]} : vector<1x384xf32> to vector<1x256xf32>
    %361 = vector.extract_strided_slice %358 {offsets = [0, 0], sizes = [1, 256], strides = [1, 1]} : vector<1x384xf32> to vector<1x256xf32>
    %362 = arith.addf %360, %361 : vector<1x256xf32>
    %363 = arith.negf %362 : vector<1x256xf32>
    %364 = math.exp %363 : vector<1x256xf32>
    %cst_65 = arith.constant 1.000000e+00 : f32
    %365 = vector.broadcast %cst_65 : f32 to vector<1x256xf32>
    %366 = arith.addf %365, %364 : vector<1x256xf32>
    %367 = arith.divf %365, %366 : vector<1x256xf32>
    %368 = vector.extract_strided_slice %367 {offsets = [0, 0], sizes = [1, 128], strides = [1, 1]} : vector<1x256xf32> to vector<1x128xf32>
    %369 = vector.extract_strided_slice %367 {offsets = [0, 128], sizes = [1, 128], strides = [1, 1]} : vector<1x256xf32> to vector<1x128xf32>
    %370 = vector.extract_strided_slice %359 {offsets = [0, 256], sizes = [1, 128], strides = [1, 1]} : vector<1x384xf32> to vector<1x128xf32>
    %371 = vector.extract_strided_slice %358 {offsets = [0, 256], sizes = [1, 128], strides = [1, 1]} : vector<1x384xf32> to vector<1x128xf32>
    %372 = arith.addf %371, %4 : vector<1x128xf32>
    %373 = arith.mulf %368, %372 : vector<1x128xf32>
    %374 = arith.addf %370, %373 : vector<1x128xf32>
    %375 = math.tanh %374 : vector<1x128xf32>
    %376 = arith.subf %356, %375 : vector<1x128xf32>
    %377 = arith.mulf %369, %376 : vector<1x128xf32>
    %378 = arith.addf %375, %377 : vector<1x128xf32>
    %c14_i32 = arith.constant 14 : i32
    %379 = arith.addi %6, %c14_i32 : i32
    %c8_i32_66 = arith.constant 8 : i32
    %380 = arith.cmpi slt, %379, %c8_i32_66 : i32
    %381 = arith.select %380, %378, %356 : vector<1x128xf32>
    %382 = arith.truncf %381 : vector<1x128xf32> to vector<1x128xbf16>
    %cst_67 = arith.constant dense<0.000000e+00> : vector<1x384xf32>
    %383 = tpu.matmul %382, %3, %cst_67 {dimension_numbers = #tpu.dot_dimension_numbers<[1], [0], [0], [1], [0, 0, 1, 1], [], []>} : vector<1x128xbf16>, vector<128x384xbf16>, vector<1x384xf32> -> vector<1x384xf32>
    %c15 = arith.constant 15 : index
    %c0_68 = arith.constant 0 : index
    %384 = vector.load %arg1[%c15, %c0_68] : memref<32x384xf32, #tpu.memory_space<vmem>>, vector<1x384xf32>
    %385 = vector.extract_strided_slice %384 {offsets = [0, 0], sizes = [1, 256], strides = [1, 1]} : vector<1x384xf32> to vector<1x256xf32>
    %386 = vector.extract_strided_slice %383 {offsets = [0, 0], sizes = [1, 256], strides = [1, 1]} : vector<1x384xf32> to vector<1x256xf32>
    %387 = arith.addf %385, %386 : vector<1x256xf32>
    %388 = arith.negf %387 : vector<1x256xf32>
    %389 = math.exp %388 : vector<1x256xf32>
    %cst_69 = arith.constant 1.000000e+00 : f32
    %390 = vector.broadcast %cst_69 : f32 to vector<1x256xf32>
    %391 = arith.addf %390, %389 : vector<1x256xf32>
    %392 = arith.divf %390, %391 : vector<1x256xf32>
    %393 = vector.extract_strided_slice %392 {offsets = [0, 0], sizes = [1, 128], strides = [1, 1]} : vector<1x256xf32> to vector<1x128xf32>
    %394 = vector.extract_strided_slice %392 {offsets = [0, 128], sizes = [1, 128], strides = [1, 1]} : vector<1x256xf32> to vector<1x128xf32>
    %395 = vector.extract_strided_slice %384 {offsets = [0, 256], sizes = [1, 128], strides = [1, 1]} : vector<1x384xf32> to vector<1x128xf32>
    %396 = vector.extract_strided_slice %383 {offsets = [0, 256], sizes = [1, 128], strides = [1, 1]} : vector<1x384xf32> to vector<1x128xf32>
    %397 = arith.addf %396, %4 : vector<1x128xf32>
    %398 = arith.mulf %393, %397 : vector<1x128xf32>
    %399 = arith.addf %395, %398 : vector<1x128xf32>
    %400 = math.tanh %399 : vector<1x128xf32>
    %401 = arith.subf %381, %400 : vector<1x128xf32>
    %402 = arith.mulf %394, %401 : vector<1x128xf32>
    %403 = arith.addf %400, %402 : vector<1x128xf32>
    %c15_i32 = arith.constant 15 : i32
    %404 = arith.addi %6, %c15_i32 : i32
    %c8_i32_70 = arith.constant 8 : i32
    %405 = arith.cmpi slt, %404, %c8_i32_70 : i32
    %406 = arith.select %405, %403, %381 : vector<1x128xf32>
    %407 = arith.truncf %406 : vector<1x128xf32> to vector<1x128xbf16>
    %cst_71 = arith.constant dense<0.000000e+00> : vector<1x384xf32>
    %408 = tpu.matmul %407, %3, %cst_71 {dimension_numbers = #tpu.dot_dimension_numbers<[1], [0], [0], [1], [0, 0, 1, 1], [], []>} : vector<1x128xbf16>, vector<128x384xbf16>, vector<1x384xf32> -> vector<1x384xf32>
    %c16 = arith.constant 16 : index
    %c0_72 = arith.constant 0 : index
    %409 = vector.load %arg1[%c16, %c0_72] : memref<32x384xf32, #tpu.memory_space<vmem>>, vector<1x384xf32>
    %410 = vector.extract_strided_slice %409 {offsets = [0, 0], sizes = [1, 256], strides = [1, 1]} : vector<1x384xf32> to vector<1x256xf32>
    %411 = vector.extract_strided_slice %408 {offsets = [0, 0], sizes = [1, 256], strides = [1, 1]} : vector<1x384xf32> to vector<1x256xf32>
    %412 = arith.addf %410, %411 : vector<1x256xf32>
    %413 = arith.negf %412 : vector<1x256xf32>
    %414 = math.exp %413 : vector<1x256xf32>
    %cst_73 = arith.constant 1.000000e+00 : f32
    %415 = vector.broadcast %cst_73 : f32 to vector<1x256xf32>
    %416 = arith.addf %415, %414 : vector<1x256xf32>
    %417 = arith.divf %415, %416 : vector<1x256xf32>
    %418 = vector.extract_strided_slice %417 {offsets = [0, 0], sizes = [1, 128], strides = [1, 1]} : vector<1x256xf32> to vector<1x128xf32>
    %419 = vector.extract_strided_slice %417 {offsets = [0, 128], sizes = [1, 128], strides = [1, 1]} : vector<1x256xf32> to vector<1x128xf32>
    %420 = vector.extract_strided_slice %409 {offsets = [0, 256], sizes = [1, 128], strides = [1, 1]} : vector<1x384xf32> to vector<1x128xf32>
    %421 = vector.extract_strided_slice %408 {offsets = [0, 256], sizes = [1, 128], strides = [1, 1]} : vector<1x384xf32> to vector<1x128xf32>
    %422 = arith.addf %421, %4 : vector<1x128xf32>
    %423 = arith.mulf %418, %422 : vector<1x128xf32>
    %424 = arith.addf %420, %423 : vector<1x128xf32>
    %425 = math.tanh %424 : vector<1x128xf32>
    %426 = arith.subf %406, %425 : vector<1x128xf32>
    %427 = arith.mulf %419, %426 : vector<1x128xf32>
    %428 = arith.addf %425, %427 : vector<1x128xf32>
    %c16_i32 = arith.constant 16 : i32
    %429 = arith.addi %6, %c16_i32 : i32
    %c8_i32_74 = arith.constant 8 : i32
    %430 = arith.cmpi slt, %429, %c8_i32_74 : i32
    %431 = arith.select %430, %428, %406 : vector<1x128xf32>
    %432 = arith.truncf %431 : vector<1x128xf32> to vector<1x128xbf16>
    %cst_75 = arith.constant dense<0.000000e+00> : vector<1x384xf32>
    %433 = tpu.matmul %432, %3, %cst_75 {dimension_numbers = #tpu.dot_dimension_numbers<[1], [0], [0], [1], [0, 0, 1, 1], [], []>} : vector<1x128xbf16>, vector<128x384xbf16>, vector<1x384xf32> -> vector<1x384xf32>
    %c17 = arith.constant 17 : index
    %c0_76 = arith.constant 0 : index
    %434 = vector.load %arg1[%c17, %c0_76] : memref<32x384xf32, #tpu.memory_space<vmem>>, vector<1x384xf32>
    %435 = vector.extract_strided_slice %434 {offsets = [0, 0], sizes = [1, 256], strides = [1, 1]} : vector<1x384xf32> to vector<1x256xf32>
    %436 = vector.extract_strided_slice %433 {offsets = [0, 0], sizes = [1, 256], strides = [1, 1]} : vector<1x384xf32> to vector<1x256xf32>
    %437 = arith.addf %435, %436 : vector<1x256xf32>
    %438 = arith.negf %437 : vector<1x256xf32>
    %439 = math.exp %438 : vector<1x256xf32>
    %cst_77 = arith.constant 1.000000e+00 : f32
    %440 = vector.broadcast %cst_77 : f32 to vector<1x256xf32>
    %441 = arith.addf %440, %439 : vector<1x256xf32>
    %442 = arith.divf %440, %441 : vector<1x256xf32>
    %443 = vector.extract_strided_slice %442 {offsets = [0, 0], sizes = [1, 128], strides = [1, 1]} : vector<1x256xf32> to vector<1x128xf32>
    %444 = vector.extract_strided_slice %442 {offsets = [0, 128], sizes = [1, 128], strides = [1, 1]} : vector<1x256xf32> to vector<1x128xf32>
    %445 = vector.extract_strided_slice %434 {offsets = [0, 256], sizes = [1, 128], strides = [1, 1]} : vector<1x384xf32> to vector<1x128xf32>
    %446 = vector.extract_strided_slice %433 {offsets = [0, 256], sizes = [1, 128], strides = [1, 1]} : vector<1x384xf32> to vector<1x128xf32>
    %447 = arith.addf %446, %4 : vector<1x128xf32>
    %448 = arith.mulf %443, %447 : vector<1x128xf32>
    %449 = arith.addf %445, %448 : vector<1x128xf32>
    %450 = math.tanh %449 : vector<1x128xf32>
    %451 = arith.subf %431, %450 : vector<1x128xf32>
    %452 = arith.mulf %444, %451 : vector<1x128xf32>
    %453 = arith.addf %450, %452 : vector<1x128xf32>
    %c17_i32 = arith.constant 17 : i32
    %454 = arith.addi %6, %c17_i32 : i32
    %c8_i32_78 = arith.constant 8 : i32
    %455 = arith.cmpi slt, %454, %c8_i32_78 : i32
    %456 = arith.select %455, %453, %431 : vector<1x128xf32>
    %457 = arith.truncf %456 : vector<1x128xf32> to vector<1x128xbf16>
    %cst_79 = arith.constant dense<0.000000e+00> : vector<1x384xf32>
    %458 = tpu.matmul %457, %3, %cst_79 {dimension_numbers = #tpu.dot_dimension_numbers<[1], [0], [0], [1], [0, 0, 1, 1], [], []>} : vector<1x128xbf16>, vector<128x384xbf16>, vector<1x384xf32> -> vector<1x384xf32>
    %c18 = arith.constant 18 : index
    %c0_80 = arith.constant 0 : index
    %459 = vector.load %arg1[%c18, %c0_80] : memref<32x384xf32, #tpu.memory_space<vmem>>, vector<1x384xf32>
    %460 = vector.extract_strided_slice %459 {offsets = [0, 0], sizes = [1, 256], strides = [1, 1]} : vector<1x384xf32> to vector<1x256xf32>
    %461 = vector.extract_strided_slice %458 {offsets = [0, 0], sizes = [1, 256], strides = [1, 1]} : vector<1x384xf32> to vector<1x256xf32>
    %462 = arith.addf %460, %461 : vector<1x256xf32>
    %463 = arith.negf %462 : vector<1x256xf32>
    %464 = math.exp %463 : vector<1x256xf32>
    %cst_81 = arith.constant 1.000000e+00 : f32
    %465 = vector.broadcast %cst_81 : f32 to vector<1x256xf32>
    %466 = arith.addf %465, %464 : vector<1x256xf32>
    %467 = arith.divf %465, %466 : vector<1x256xf32>
    %468 = vector.extract_strided_slice %467 {offsets = [0, 0], sizes = [1, 128], strides = [1, 1]} : vector<1x256xf32> to vector<1x128xf32>
    %469 = vector.extract_strided_slice %467 {offsets = [0, 128], sizes = [1, 128], strides = [1, 1]} : vector<1x256xf32> to vector<1x128xf32>
    %470 = vector.extract_strided_slice %459 {offsets = [0, 256], sizes = [1, 128], strides = [1, 1]} : vector<1x384xf32> to vector<1x128xf32>
    %471 = vector.extract_strided_slice %458 {offsets = [0, 256], sizes = [1, 128], strides = [1, 1]} : vector<1x384xf32> to vector<1x128xf32>
    %472 = arith.addf %471, %4 : vector<1x128xf32>
    %473 = arith.mulf %468, %472 : vector<1x128xf32>
    %474 = arith.addf %470, %473 : vector<1x128xf32>
    %475 = math.tanh %474 : vector<1x128xf32>
    %476 = arith.subf %456, %475 : vector<1x128xf32>
    %477 = arith.mulf %469, %476 : vector<1x128xf32>
    %478 = arith.addf %475, %477 : vector<1x128xf32>
    %c18_i32 = arith.constant 18 : i32
    %479 = arith.addi %6, %c18_i32 : i32
    %c8_i32_82 = arith.constant 8 : i32
    %480 = arith.cmpi slt, %479, %c8_i32_82 : i32
    %481 = arith.select %480, %478, %456 : vector<1x128xf32>
    %482 = arith.truncf %481 : vector<1x128xf32> to vector<1x128xbf16>
    %cst_83 = arith.constant dense<0.000000e+00> : vector<1x384xf32>
    %483 = tpu.matmul %482, %3, %cst_83 {dimension_numbers = #tpu.dot_dimension_numbers<[1], [0], [0], [1], [0, 0, 1, 1], [], []>} : vector<1x128xbf16>, vector<128x384xbf16>, vector<1x384xf32> -> vector<1x384xf32>
    %c19 = arith.constant 19 : index
    %c0_84 = arith.constant 0 : index
    %484 = vector.load %arg1[%c19, %c0_84] : memref<32x384xf32, #tpu.memory_space<vmem>>, vector<1x384xf32>
    %485 = vector.extract_strided_slice %484 {offsets = [0, 0], sizes = [1, 256], strides = [1, 1]} : vector<1x384xf32> to vector<1x256xf32>
    %486 = vector.extract_strided_slice %483 {offsets = [0, 0], sizes = [1, 256], strides = [1, 1]} : vector<1x384xf32> to vector<1x256xf32>
    %487 = arith.addf %485, %486 : vector<1x256xf32>
    %488 = arith.negf %487 : vector<1x256xf32>
    %489 = math.exp %488 : vector<1x256xf32>
    %cst_85 = arith.constant 1.000000e+00 : f32
    %490 = vector.broadcast %cst_85 : f32 to vector<1x256xf32>
    %491 = arith.addf %490, %489 : vector<1x256xf32>
    %492 = arith.divf %490, %491 : vector<1x256xf32>
    %493 = vector.extract_strided_slice %492 {offsets = [0, 0], sizes = [1, 128], strides = [1, 1]} : vector<1x256xf32> to vector<1x128xf32>
    %494 = vector.extract_strided_slice %492 {offsets = [0, 128], sizes = [1, 128], strides = [1, 1]} : vector<1x256xf32> to vector<1x128xf32>
    %495 = vector.extract_strided_slice %484 {offsets = [0, 256], sizes = [1, 128], strides = [1, 1]} : vector<1x384xf32> to vector<1x128xf32>
    %496 = vector.extract_strided_slice %483 {offsets = [0, 256], sizes = [1, 128], strides = [1, 1]} : vector<1x384xf32> to vector<1x128xf32>
    %497 = arith.addf %496, %4 : vector<1x128xf32>
    %498 = arith.mulf %493, %497 : vector<1x128xf32>
    %499 = arith.addf %495, %498 : vector<1x128xf32>
    %500 = math.tanh %499 : vector<1x128xf32>
    %501 = arith.subf %481, %500 : vector<1x128xf32>
    %502 = arith.mulf %494, %501 : vector<1x128xf32>
    %503 = arith.addf %500, %502 : vector<1x128xf32>
    %c19_i32 = arith.constant 19 : i32
    %504 = arith.addi %6, %c19_i32 : i32
    %c8_i32_86 = arith.constant 8 : i32
    %505 = arith.cmpi slt, %504, %c8_i32_86 : i32
    %506 = arith.select %505, %503, %481 : vector<1x128xf32>
    %507 = arith.truncf %506 : vector<1x128xf32> to vector<1x128xbf16>
    %cst_87 = arith.constant dense<0.000000e+00> : vector<1x384xf32>
    %508 = tpu.matmul %507, %3, %cst_87 {dimension_numbers = #tpu.dot_dimension_numbers<[1], [0], [0], [1], [0, 0, 1, 1], [], []>} : vector<1x128xbf16>, vector<128x384xbf16>, vector<1x384xf32> -> vector<1x384xf32>
    %c20 = arith.constant 20 : index
    %c0_88 = arith.constant 0 : index
    %509 = vector.load %arg1[%c20, %c0_88] : memref<32x384xf32, #tpu.memory_space<vmem>>, vector<1x384xf32>
    %510 = vector.extract_strided_slice %509 {offsets = [0, 0], sizes = [1, 256], strides = [1, 1]} : vector<1x384xf32> to vector<1x256xf32>
    %511 = vector.extract_strided_slice %508 {offsets = [0, 0], sizes = [1, 256], strides = [1, 1]} : vector<1x384xf32> to vector<1x256xf32>
    %512 = arith.addf %510, %511 : vector<1x256xf32>
    %513 = arith.negf %512 : vector<1x256xf32>
    %514 = math.exp %513 : vector<1x256xf32>
    %cst_89 = arith.constant 1.000000e+00 : f32
    %515 = vector.broadcast %cst_89 : f32 to vector<1x256xf32>
    %516 = arith.addf %515, %514 : vector<1x256xf32>
    %517 = arith.divf %515, %516 : vector<1x256xf32>
    %518 = vector.extract_strided_slice %517 {offsets = [0, 0], sizes = [1, 128], strides = [1, 1]} : vector<1x256xf32> to vector<1x128xf32>
    %519 = vector.extract_strided_slice %517 {offsets = [0, 128], sizes = [1, 128], strides = [1, 1]} : vector<1x256xf32> to vector<1x128xf32>
    %520 = vector.extract_strided_slice %509 {offsets = [0, 256], sizes = [1, 128], strides = [1, 1]} : vector<1x384xf32> to vector<1x128xf32>
    %521 = vector.extract_strided_slice %508 {offsets = [0, 256], sizes = [1, 128], strides = [1, 1]} : vector<1x384xf32> to vector<1x128xf32>
    %522 = arith.addf %521, %4 : vector<1x128xf32>
    %523 = arith.mulf %518, %522 : vector<1x128xf32>
    %524 = arith.addf %520, %523 : vector<1x128xf32>
    %525 = math.tanh %524 : vector<1x128xf32>
    %526 = arith.subf %506, %525 : vector<1x128xf32>
    %527 = arith.mulf %519, %526 : vector<1x128xf32>
    %528 = arith.addf %525, %527 : vector<1x128xf32>
    %c20_i32 = arith.constant 20 : i32
    %529 = arith.addi %6, %c20_i32 : i32
    %c8_i32_90 = arith.constant 8 : i32
    %530 = arith.cmpi slt, %529, %c8_i32_90 : i32
    %531 = arith.select %530, %528, %506 : vector<1x128xf32>
    %532 = arith.truncf %531 : vector<1x128xf32> to vector<1x128xbf16>
    %cst_91 = arith.constant dense<0.000000e+00> : vector<1x384xf32>
    %533 = tpu.matmul %532, %3, %cst_91 {dimension_numbers = #tpu.dot_dimension_numbers<[1], [0], [0], [1], [0, 0, 1, 1], [], []>} : vector<1x128xbf16>, vector<128x384xbf16>, vector<1x384xf32> -> vector<1x384xf32>
    %c21 = arith.constant 21 : index
    %c0_92 = arith.constant 0 : index
    %534 = vector.load %arg1[%c21, %c0_92] : memref<32x384xf32, #tpu.memory_space<vmem>>, vector<1x384xf32>
    %535 = vector.extract_strided_slice %534 {offsets = [0, 0], sizes = [1, 256], strides = [1, 1]} : vector<1x384xf32> to vector<1x256xf32>
    %536 = vector.extract_strided_slice %533 {offsets = [0, 0], sizes = [1, 256], strides = [1, 1]} : vector<1x384xf32> to vector<1x256xf32>
    %537 = arith.addf %535, %536 : vector<1x256xf32>
    %538 = arith.negf %537 : vector<1x256xf32>
    %539 = math.exp %538 : vector<1x256xf32>
    %cst_93 = arith.constant 1.000000e+00 : f32
    %540 = vector.broadcast %cst_93 : f32 to vector<1x256xf32>
    %541 = arith.addf %540, %539 : vector<1x256xf32>
    %542 = arith.divf %540, %541 : vector<1x256xf32>
    %543 = vector.extract_strided_slice %542 {offsets = [0, 0], sizes = [1, 128], strides = [1, 1]} : vector<1x256xf32> to vector<1x128xf32>
    %544 = vector.extract_strided_slice %542 {offsets = [0, 128], sizes = [1, 128], strides = [1, 1]} : vector<1x256xf32> to vector<1x128xf32>
    %545 = vector.extract_strided_slice %534 {offsets = [0, 256], sizes = [1, 128], strides = [1, 1]} : vector<1x384xf32> to vector<1x128xf32>
    %546 = vector.extract_strided_slice %533 {offsets = [0, 256], sizes = [1, 128], strides = [1, 1]} : vector<1x384xf32> to vector<1x128xf32>
    %547 = arith.addf %546, %4 : vector<1x128xf32>
    %548 = arith.mulf %543, %547 : vector<1x128xf32>
    %549 = arith.addf %545, %548 : vector<1x128xf32>
    %550 = math.tanh %549 : vector<1x128xf32>
    %551 = arith.subf %531, %550 : vector<1x128xf32>
    %552 = arith.mulf %544, %551 : vector<1x128xf32>
    %553 = arith.addf %550, %552 : vector<1x128xf32>
    %c21_i32 = arith.constant 21 : i32
    %554 = arith.addi %6, %c21_i32 : i32
    %c8_i32_94 = arith.constant 8 : i32
    %555 = arith.cmpi slt, %554, %c8_i32_94 : i32
    %556 = arith.select %555, %553, %531 : vector<1x128xf32>
    %557 = arith.truncf %556 : vector<1x128xf32> to vector<1x128xbf16>
    %cst_95 = arith.constant dense<0.000000e+00> : vector<1x384xf32>
    %558 = tpu.matmul %557, %3, %cst_95 {dimension_numbers = #tpu.dot_dimension_numbers<[1], [0], [0], [1], [0, 0, 1, 1], [], []>} : vector<1x128xbf16>, vector<128x384xbf16>, vector<1x384xf32> -> vector<1x384xf32>
    %c22 = arith.constant 22 : index
    %c0_96 = arith.constant 0 : index
    %559 = vector.load %arg1[%c22, %c0_96] : memref<32x384xf32, #tpu.memory_space<vmem>>, vector<1x384xf32>
    %560 = vector.extract_strided_slice %559 {offsets = [0, 0], sizes = [1, 256], strides = [1, 1]} : vector<1x384xf32> to vector<1x256xf32>
    %561 = vector.extract_strided_slice %558 {offsets = [0, 0], sizes = [1, 256], strides = [1, 1]} : vector<1x384xf32> to vector<1x256xf32>
    %562 = arith.addf %560, %561 : vector<1x256xf32>
    %563 = arith.negf %562 : vector<1x256xf32>
    %564 = math.exp %563 : vector<1x256xf32>
    %cst_97 = arith.constant 1.000000e+00 : f32
    %565 = vector.broadcast %cst_97 : f32 to vector<1x256xf32>
    %566 = arith.addf %565, %564 : vector<1x256xf32>
    %567 = arith.divf %565, %566 : vector<1x256xf32>
    %568 = vector.extract_strided_slice %567 {offsets = [0, 0], sizes = [1, 128], strides = [1, 1]} : vector<1x256xf32> to vector<1x128xf32>
    %569 = vector.extract_strided_slice %567 {offsets = [0, 128], sizes = [1, 128], strides = [1, 1]} : vector<1x256xf32> to vector<1x128xf32>
    %570 = vector.extract_strided_slice %559 {offsets = [0, 256], sizes = [1, 128], strides = [1, 1]} : vector<1x384xf32> to vector<1x128xf32>
    %571 = vector.extract_strided_slice %558 {offsets = [0, 256], sizes = [1, 128], strides = [1, 1]} : vector<1x384xf32> to vector<1x128xf32>
    %572 = arith.addf %571, %4 : vector<1x128xf32>
    %573 = arith.mulf %568, %572 : vector<1x128xf32>
    %574 = arith.addf %570, %573 : vector<1x128xf32>
    %575 = math.tanh %574 : vector<1x128xf32>
    %576 = arith.subf %556, %575 : vector<1x128xf32>
    %577 = arith.mulf %569, %576 : vector<1x128xf32>
    %578 = arith.addf %575, %577 : vector<1x128xf32>
    %c22_i32 = arith.constant 22 : i32
    %579 = arith.addi %6, %c22_i32 : i32
    %c8_i32_98 = arith.constant 8 : i32
    %580 = arith.cmpi slt, %579, %c8_i32_98 : i32
    %581 = arith.select %580, %578, %556 : vector<1x128xf32>
    %582 = arith.truncf %581 : vector<1x128xf32> to vector<1x128xbf16>
    %cst_99 = arith.constant dense<0.000000e+00> : vector<1x384xf32>
    %583 = tpu.matmul %582, %3, %cst_99 {dimension_numbers = #tpu.dot_dimension_numbers<[1], [0], [0], [1], [0, 0, 1, 1], [], []>} : vector<1x128xbf16>, vector<128x384xbf16>, vector<1x384xf32> -> vector<1x384xf32>
    %c23 = arith.constant 23 : index
    %c0_100 = arith.constant 0 : index
    %584 = vector.load %arg1[%c23, %c0_100] : memref<32x384xf32, #tpu.memory_space<vmem>>, vector<1x384xf32>
    %585 = vector.extract_strided_slice %584 {offsets = [0, 0], sizes = [1, 256], strides = [1, 1]} : vector<1x384xf32> to vector<1x256xf32>
    %586 = vector.extract_strided_slice %583 {offsets = [0, 0], sizes = [1, 256], strides = [1, 1]} : vector<1x384xf32> to vector<1x256xf32>
    %587 = arith.addf %585, %586 : vector<1x256xf32>
    %588 = arith.negf %587 : vector<1x256xf32>
    %589 = math.exp %588 : vector<1x256xf32>
    %cst_101 = arith.constant 1.000000e+00 : f32
    %590 = vector.broadcast %cst_101 : f32 to vector<1x256xf32>
    %591 = arith.addf %590, %589 : vector<1x256xf32>
    %592 = arith.divf %590, %591 : vector<1x256xf32>
    %593 = vector.extract_strided_slice %592 {offsets = [0, 0], sizes = [1, 128], strides = [1, 1]} : vector<1x256xf32> to vector<1x128xf32>
    %594 = vector.extract_strided_slice %592 {offsets = [0, 128], sizes = [1, 128], strides = [1, 1]} : vector<1x256xf32> to vector<1x128xf32>
    %595 = vector.extract_strided_slice %584 {offsets = [0, 256], sizes = [1, 128], strides = [1, 1]} : vector<1x384xf32> to vector<1x128xf32>
    %596 = vector.extract_strided_slice %583 {offsets = [0, 256], sizes = [1, 128], strides = [1, 1]} : vector<1x384xf32> to vector<1x128xf32>
    %597 = arith.addf %596, %4 : vector<1x128xf32>
    %598 = arith.mulf %593, %597 : vector<1x128xf32>
    %599 = arith.addf %595, %598 : vector<1x128xf32>
    %600 = math.tanh %599 : vector<1x128xf32>
    %601 = arith.subf %581, %600 : vector<1x128xf32>
    %602 = arith.mulf %594, %601 : vector<1x128xf32>
    %603 = arith.addf %600, %602 : vector<1x128xf32>
    %c23_i32 = arith.constant 23 : i32
    %604 = arith.addi %6, %c23_i32 : i32
    %c8_i32_102 = arith.constant 8 : i32
    %605 = arith.cmpi slt, %604, %c8_i32_102 : i32
    %606 = arith.select %605, %603, %581 : vector<1x128xf32>
    %607 = arith.truncf %606 : vector<1x128xf32> to vector<1x128xbf16>
    %cst_103 = arith.constant dense<0.000000e+00> : vector<1x384xf32>
    %608 = tpu.matmul %607, %3, %cst_103 {dimension_numbers = #tpu.dot_dimension_numbers<[1], [0], [0], [1], [0, 0, 1, 1], [], []>} : vector<1x128xbf16>, vector<128x384xbf16>, vector<1x384xf32> -> vector<1x384xf32>
    %c24 = arith.constant 24 : index
    %c0_104 = arith.constant 0 : index
    %609 = vector.load %arg1[%c24, %c0_104] : memref<32x384xf32, #tpu.memory_space<vmem>>, vector<1x384xf32>
    %610 = vector.extract_strided_slice %609 {offsets = [0, 0], sizes = [1, 256], strides = [1, 1]} : vector<1x384xf32> to vector<1x256xf32>
    %611 = vector.extract_strided_slice %608 {offsets = [0, 0], sizes = [1, 256], strides = [1, 1]} : vector<1x384xf32> to vector<1x256xf32>
    %612 = arith.addf %610, %611 : vector<1x256xf32>
    %613 = arith.negf %612 : vector<1x256xf32>
    %614 = math.exp %613 : vector<1x256xf32>
    %cst_105 = arith.constant 1.000000e+00 : f32
    %615 = vector.broadcast %cst_105 : f32 to vector<1x256xf32>
    %616 = arith.addf %615, %614 : vector<1x256xf32>
    %617 = arith.divf %615, %616 : vector<1x256xf32>
    %618 = vector.extract_strided_slice %617 {offsets = [0, 0], sizes = [1, 128], strides = [1, 1]} : vector<1x256xf32> to vector<1x128xf32>
    %619 = vector.extract_strided_slice %617 {offsets = [0, 128], sizes = [1, 128], strides = [1, 1]} : vector<1x256xf32> to vector<1x128xf32>
    %620 = vector.extract_strided_slice %609 {offsets = [0, 256], sizes = [1, 128], strides = [1, 1]} : vector<1x384xf32> to vector<1x128xf32>
    %621 = vector.extract_strided_slice %608 {offsets = [0, 256], sizes = [1, 128], strides = [1, 1]} : vector<1x384xf32> to vector<1x128xf32>
    %622 = arith.addf %621, %4 : vector<1x128xf32>
    %623 = arith.mulf %618, %622 : vector<1x128xf32>
    %624 = arith.addf %620, %623 : vector<1x128xf32>
    %625 = math.tanh %624 : vector<1x128xf32>
    %626 = arith.subf %606, %625 : vector<1x128xf32>
    %627 = arith.mulf %619, %626 : vector<1x128xf32>
    %628 = arith.addf %625, %627 : vector<1x128xf32>
    %c24_i32 = arith.constant 24 : i32
    %629 = arith.addi %6, %c24_i32 : i32
    %c8_i32_106 = arith.constant 8 : i32
    %630 = arith.cmpi slt, %629, %c8_i32_106 : i32
    %631 = arith.select %630, %628, %606 : vector<1x128xf32>
    %632 = arith.truncf %631 : vector<1x128xf32> to vector<1x128xbf16>
    %cst_107 = arith.constant dense<0.000000e+00> : vector<1x384xf32>
    %633 = tpu.matmul %632, %3, %cst_107 {dimension_numbers = #tpu.dot_dimension_numbers<[1], [0], [0], [1], [0, 0, 1, 1], [], []>} : vector<1x128xbf16>, vector<128x384xbf16>, vector<1x384xf32> -> vector<1x384xf32>
    %c25 = arith.constant 25 : index
    %c0_108 = arith.constant 0 : index
    %634 = vector.load %arg1[%c25, %c0_108] : memref<32x384xf32, #tpu.memory_space<vmem>>, vector<1x384xf32>
    %635 = vector.extract_strided_slice %634 {offsets = [0, 0], sizes = [1, 256], strides = [1, 1]} : vector<1x384xf32> to vector<1x256xf32>
    %636 = vector.extract_strided_slice %633 {offsets = [0, 0], sizes = [1, 256], strides = [1, 1]} : vector<1x384xf32> to vector<1x256xf32>
    %637 = arith.addf %635, %636 : vector<1x256xf32>
    %638 = arith.negf %637 : vector<1x256xf32>
    %639 = math.exp %638 : vector<1x256xf32>
    %cst_109 = arith.constant 1.000000e+00 : f32
    %640 = vector.broadcast %cst_109 : f32 to vector<1x256xf32>
    %641 = arith.addf %640, %639 : vector<1x256xf32>
    %642 = arith.divf %640, %641 : vector<1x256xf32>
    %643 = vector.extract_strided_slice %642 {offsets = [0, 0], sizes = [1, 128], strides = [1, 1]} : vector<1x256xf32> to vector<1x128xf32>
    %644 = vector.extract_strided_slice %642 {offsets = [0, 128], sizes = [1, 128], strides = [1, 1]} : vector<1x256xf32> to vector<1x128xf32>
    %645 = vector.extract_strided_slice %634 {offsets = [0, 256], sizes = [1, 128], strides = [1, 1]} : vector<1x384xf32> to vector<1x128xf32>
    %646 = vector.extract_strided_slice %633 {offsets = [0, 256], sizes = [1, 128], strides = [1, 1]} : vector<1x384xf32> to vector<1x128xf32>
    %647 = arith.addf %646, %4 : vector<1x128xf32>
    %648 = arith.mulf %643, %647 : vector<1x128xf32>
    %649 = arith.addf %645, %648 : vector<1x128xf32>
    %650 = math.tanh %649 : vector<1x128xf32>
    %651 = arith.subf %631, %650 : vector<1x128xf32>
    %652 = arith.mulf %644, %651 : vector<1x128xf32>
    %653 = arith.addf %650, %652 : vector<1x128xf32>
    %c25_i32 = arith.constant 25 : i32
    %654 = arith.addi %6, %c25_i32 : i32
    %c8_i32_110 = arith.constant 8 : i32
    %655 = arith.cmpi slt, %654, %c8_i32_110 : i32
    %656 = arith.select %655, %653, %631 : vector<1x128xf32>
    %657 = arith.truncf %656 : vector<1x128xf32> to vector<1x128xbf16>
    %cst_111 = arith.constant dense<0.000000e+00> : vector<1x384xf32>
    %658 = tpu.matmul %657, %3, %cst_111 {dimension_numbers = #tpu.dot_dimension_numbers<[1], [0], [0], [1], [0, 0, 1, 1], [], []>} : vector<1x128xbf16>, vector<128x384xbf16>, vector<1x384xf32> -> vector<1x384xf32>
    %c26 = arith.constant 26 : index
    %c0_112 = arith.constant 0 : index
    %659 = vector.load %arg1[%c26, %c0_112] : memref<32x384xf32, #tpu.memory_space<vmem>>, vector<1x384xf32>
    %660 = vector.extract_strided_slice %659 {offsets = [0, 0], sizes = [1, 256], strides = [1, 1]} : vector<1x384xf32> to vector<1x256xf32>
    %661 = vector.extract_strided_slice %658 {offsets = [0, 0], sizes = [1, 256], strides = [1, 1]} : vector<1x384xf32> to vector<1x256xf32>
    %662 = arith.addf %660, %661 : vector<1x256xf32>
    %663 = arith.negf %662 : vector<1x256xf32>
    %664 = math.exp %663 : vector<1x256xf32>
    %cst_113 = arith.constant 1.000000e+00 : f32
    %665 = vector.broadcast %cst_113 : f32 to vector<1x256xf32>
    %666 = arith.addf %665, %664 : vector<1x256xf32>
    %667 = arith.divf %665, %666 : vector<1x256xf32>
    %668 = vector.extract_strided_slice %667 {offsets = [0, 0], sizes = [1, 128], strides = [1, 1]} : vector<1x256xf32> to vector<1x128xf32>
    %669 = vector.extract_strided_slice %667 {offsets = [0, 128], sizes = [1, 128], strides = [1, 1]} : vector<1x256xf32> to vector<1x128xf32>
    %670 = vector.extract_strided_slice %659 {offsets = [0, 256], sizes = [1, 128], strides = [1, 1]} : vector<1x384xf32> to vector<1x128xf32>
    %671 = vector.extract_strided_slice %658 {offsets = [0, 256], sizes = [1, 128], strides = [1, 1]} : vector<1x384xf32> to vector<1x128xf32>
    %672 = arith.addf %671, %4 : vector<1x128xf32>
    %673 = arith.mulf %668, %672 : vector<1x128xf32>
    %674 = arith.addf %670, %673 : vector<1x128xf32>
    %675 = math.tanh %674 : vector<1x128xf32>
    %676 = arith.subf %656, %675 : vector<1x128xf32>
    %677 = arith.mulf %669, %676 : vector<1x128xf32>
    %678 = arith.addf %675, %677 : vector<1x128xf32>
    %c26_i32 = arith.constant 26 : i32
    %679 = arith.addi %6, %c26_i32 : i32
    %c8_i32_114 = arith.constant 8 : i32
    %680 = arith.cmpi slt, %679, %c8_i32_114 : i32
    %681 = arith.select %680, %678, %656 : vector<1x128xf32>
    %682 = arith.truncf %681 : vector<1x128xf32> to vector<1x128xbf16>
    %cst_115 = arith.constant dense<0.000000e+00> : vector<1x384xf32>
    %683 = tpu.matmul %682, %3, %cst_115 {dimension_numbers = #tpu.dot_dimension_numbers<[1], [0], [0], [1], [0, 0, 1, 1], [], []>} : vector<1x128xbf16>, vector<128x384xbf16>, vector<1x384xf32> -> vector<1x384xf32>
    %c27 = arith.constant 27 : index
    %c0_116 = arith.constant 0 : index
    %684 = vector.load %arg1[%c27, %c0_116] : memref<32x384xf32, #tpu.memory_space<vmem>>, vector<1x384xf32>
    %685 = vector.extract_strided_slice %684 {offsets = [0, 0], sizes = [1, 256], strides = [1, 1]} : vector<1x384xf32> to vector<1x256xf32>
    %686 = vector.extract_strided_slice %683 {offsets = [0, 0], sizes = [1, 256], strides = [1, 1]} : vector<1x384xf32> to vector<1x256xf32>
    %687 = arith.addf %685, %686 : vector<1x256xf32>
    %688 = arith.negf %687 : vector<1x256xf32>
    %689 = math.exp %688 : vector<1x256xf32>
    %cst_117 = arith.constant 1.000000e+00 : f32
    %690 = vector.broadcast %cst_117 : f32 to vector<1x256xf32>
    %691 = arith.addf %690, %689 : vector<1x256xf32>
    %692 = arith.divf %690, %691 : vector<1x256xf32>
    %693 = vector.extract_strided_slice %692 {offsets = [0, 0], sizes = [1, 128], strides = [1, 1]} : vector<1x256xf32> to vector<1x128xf32>
    %694 = vector.extract_strided_slice %692 {offsets = [0, 128], sizes = [1, 128], strides = [1, 1]} : vector<1x256xf32> to vector<1x128xf32>
    %695 = vector.extract_strided_slice %684 {offsets = [0, 256], sizes = [1, 128], strides = [1, 1]} : vector<1x384xf32> to vector<1x128xf32>
    %696 = vector.extract_strided_slice %683 {offsets = [0, 256], sizes = [1, 128], strides = [1, 1]} : vector<1x384xf32> to vector<1x128xf32>
    %697 = arith.addf %696, %4 : vector<1x128xf32>
    %698 = arith.mulf %693, %697 : vector<1x128xf32>
    %699 = arith.addf %695, %698 : vector<1x128xf32>
    %700 = math.tanh %699 : vector<1x128xf32>
    %701 = arith.subf %681, %700 : vector<1x128xf32>
    %702 = arith.mulf %694, %701 : vector<1x128xf32>
    %703 = arith.addf %700, %702 : vector<1x128xf32>
    %c27_i32 = arith.constant 27 : i32
    %704 = arith.addi %6, %c27_i32 : i32
    %c8_i32_118 = arith.constant 8 : i32
    %705 = arith.cmpi slt, %704, %c8_i32_118 : i32
    %706 = arith.select %705, %703, %681 : vector<1x128xf32>
    %707 = arith.truncf %706 : vector<1x128xf32> to vector<1x128xbf16>
    %cst_119 = arith.constant dense<0.000000e+00> : vector<1x384xf32>
    %708 = tpu.matmul %707, %3, %cst_119 {dimension_numbers = #tpu.dot_dimension_numbers<[1], [0], [0], [1], [0, 0, 1, 1], [], []>} : vector<1x128xbf16>, vector<128x384xbf16>, vector<1x384xf32> -> vector<1x384xf32>
    %c28 = arith.constant 28 : index
    %c0_120 = arith.constant 0 : index
    %709 = vector.load %arg1[%c28, %c0_120] : memref<32x384xf32, #tpu.memory_space<vmem>>, vector<1x384xf32>
    %710 = vector.extract_strided_slice %709 {offsets = [0, 0], sizes = [1, 256], strides = [1, 1]} : vector<1x384xf32> to vector<1x256xf32>
    %711 = vector.extract_strided_slice %708 {offsets = [0, 0], sizes = [1, 256], strides = [1, 1]} : vector<1x384xf32> to vector<1x256xf32>
    %712 = arith.addf %710, %711 : vector<1x256xf32>
    %713 = arith.negf %712 : vector<1x256xf32>
    %714 = math.exp %713 : vector<1x256xf32>
    %cst_121 = arith.constant 1.000000e+00 : f32
    %715 = vector.broadcast %cst_121 : f32 to vector<1x256xf32>
    %716 = arith.addf %715, %714 : vector<1x256xf32>
    %717 = arith.divf %715, %716 : vector<1x256xf32>
    %718 = vector.extract_strided_slice %717 {offsets = [0, 0], sizes = [1, 128], strides = [1, 1]} : vector<1x256xf32> to vector<1x128xf32>
    %719 = vector.extract_strided_slice %717 {offsets = [0, 128], sizes = [1, 128], strides = [1, 1]} : vector<1x256xf32> to vector<1x128xf32>
    %720 = vector.extract_strided_slice %709 {offsets = [0, 256], sizes = [1, 128], strides = [1, 1]} : vector<1x384xf32> to vector<1x128xf32>
    %721 = vector.extract_strided_slice %708 {offsets = [0, 256], sizes = [1, 128], strides = [1, 1]} : vector<1x384xf32> to vector<1x128xf32>
    %722 = arith.addf %721, %4 : vector<1x128xf32>
    %723 = arith.mulf %718, %722 : vector<1x128xf32>
    %724 = arith.addf %720, %723 : vector<1x128xf32>
    %725 = math.tanh %724 : vector<1x128xf32>
    %726 = arith.subf %706, %725 : vector<1x128xf32>
    %727 = arith.mulf %719, %726 : vector<1x128xf32>
    %728 = arith.addf %725, %727 : vector<1x128xf32>
    %c28_i32 = arith.constant 28 : i32
    %729 = arith.addi %6, %c28_i32 : i32
    %c8_i32_122 = arith.constant 8 : i32
    %730 = arith.cmpi slt, %729, %c8_i32_122 : i32
    %731 = arith.select %730, %728, %706 : vector<1x128xf32>
    %732 = arith.truncf %731 : vector<1x128xf32> to vector<1x128xbf16>
    %cst_123 = arith.constant dense<0.000000e+00> : vector<1x384xf32>
    %733 = tpu.matmul %732, %3, %cst_123 {dimension_numbers = #tpu.dot_dimension_numbers<[1], [0], [0], [1], [0, 0, 1, 1], [], []>} : vector<1x128xbf16>, vector<128x384xbf16>, vector<1x384xf32> -> vector<1x384xf32>
    %c29 = arith.constant 29 : index
    %c0_124 = arith.constant 0 : index
    %734 = vector.load %arg1[%c29, %c0_124] : memref<32x384xf32, #tpu.memory_space<vmem>>, vector<1x384xf32>
    %735 = vector.extract_strided_slice %734 {offsets = [0, 0], sizes = [1, 256], strides = [1, 1]} : vector<1x384xf32> to vector<1x256xf32>
    %736 = vector.extract_strided_slice %733 {offsets = [0, 0], sizes = [1, 256], strides = [1, 1]} : vector<1x384xf32> to vector<1x256xf32>
    %737 = arith.addf %735, %736 : vector<1x256xf32>
    %738 = arith.negf %737 : vector<1x256xf32>
    %739 = math.exp %738 : vector<1x256xf32>
    %cst_125 = arith.constant 1.000000e+00 : f32
    %740 = vector.broadcast %cst_125 : f32 to vector<1x256xf32>
    %741 = arith.addf %740, %739 : vector<1x256xf32>
    %742 = arith.divf %740, %741 : vector<1x256xf32>
    %743 = vector.extract_strided_slice %742 {offsets = [0, 0], sizes = [1, 128], strides = [1, 1]} : vector<1x256xf32> to vector<1x128xf32>
    %744 = vector.extract_strided_slice %742 {offsets = [0, 128], sizes = [1, 128], strides = [1, 1]} : vector<1x256xf32> to vector<1x128xf32>
    %745 = vector.extract_strided_slice %734 {offsets = [0, 256], sizes = [1, 128], strides = [1, 1]} : vector<1x384xf32> to vector<1x128xf32>
    %746 = vector.extract_strided_slice %733 {offsets = [0, 256], sizes = [1, 128], strides = [1, 1]} : vector<1x384xf32> to vector<1x128xf32>
    %747 = arith.addf %746, %4 : vector<1x128xf32>
    %748 = arith.mulf %743, %747 : vector<1x128xf32>
    %749 = arith.addf %745, %748 : vector<1x128xf32>
    %750 = math.tanh %749 : vector<1x128xf32>
    %751 = arith.subf %731, %750 : vector<1x128xf32>
    %752 = arith.mulf %744, %751 : vector<1x128xf32>
    %753 = arith.addf %750, %752 : vector<1x128xf32>
    %c29_i32 = arith.constant 29 : i32
    %754 = arith.addi %6, %c29_i32 : i32
    %c8_i32_126 = arith.constant 8 : i32
    %755 = arith.cmpi slt, %754, %c8_i32_126 : i32
    %756 = arith.select %755, %753, %731 : vector<1x128xf32>
    %757 = arith.truncf %756 : vector<1x128xf32> to vector<1x128xbf16>
    %cst_127 = arith.constant dense<0.000000e+00> : vector<1x384xf32>
    %758 = tpu.matmul %757, %3, %cst_127 {dimension_numbers = #tpu.dot_dimension_numbers<[1], [0], [0], [1], [0, 0, 1, 1], [], []>} : vector<1x128xbf16>, vector<128x384xbf16>, vector<1x384xf32> -> vector<1x384xf32>
    %c30 = arith.constant 30 : index
    %c0_128 = arith.constant 0 : index
    %759 = vector.load %arg1[%c30, %c0_128] : memref<32x384xf32, #tpu.memory_space<vmem>>, vector<1x384xf32>
    %760 = vector.extract_strided_slice %759 {offsets = [0, 0], sizes = [1, 256], strides = [1, 1]} : vector<1x384xf32> to vector<1x256xf32>
    %761 = vector.extract_strided_slice %758 {offsets = [0, 0], sizes = [1, 256], strides = [1, 1]} : vector<1x384xf32> to vector<1x256xf32>
    %762 = arith.addf %760, %761 : vector<1x256xf32>
    %763 = arith.negf %762 : vector<1x256xf32>
    %764 = math.exp %763 : vector<1x256xf32>
    %cst_129 = arith.constant 1.000000e+00 : f32
    %765 = vector.broadcast %cst_129 : f32 to vector<1x256xf32>
    %766 = arith.addf %765, %764 : vector<1x256xf32>
    %767 = arith.divf %765, %766 : vector<1x256xf32>
    %768 = vector.extract_strided_slice %767 {offsets = [0, 0], sizes = [1, 128], strides = [1, 1]} : vector<1x256xf32> to vector<1x128xf32>
    %769 = vector.extract_strided_slice %767 {offsets = [0, 128], sizes = [1, 128], strides = [1, 1]} : vector<1x256xf32> to vector<1x128xf32>
    %770 = vector.extract_strided_slice %759 {offsets = [0, 256], sizes = [1, 128], strides = [1, 1]} : vector<1x384xf32> to vector<1x128xf32>
    %771 = vector.extract_strided_slice %758 {offsets = [0, 256], sizes = [1, 128], strides = [1, 1]} : vector<1x384xf32> to vector<1x128xf32>
    %772 = arith.addf %771, %4 : vector<1x128xf32>
    %773 = arith.mulf %768, %772 : vector<1x128xf32>
    %774 = arith.addf %770, %773 : vector<1x128xf32>
    %775 = math.tanh %774 : vector<1x128xf32>
    %776 = arith.subf %756, %775 : vector<1x128xf32>
    %777 = arith.mulf %769, %776 : vector<1x128xf32>
    %778 = arith.addf %775, %777 : vector<1x128xf32>
    %c30_i32 = arith.constant 30 : i32
    %779 = arith.addi %6, %c30_i32 : i32
    %c8_i32_130 = arith.constant 8 : i32
    %780 = arith.cmpi slt, %779, %c8_i32_130 : i32
    %781 = arith.select %780, %778, %756 : vector<1x128xf32>
    %782 = arith.truncf %781 : vector<1x128xf32> to vector<1x128xbf16>
    %cst_131 = arith.constant dense<0.000000e+00> : vector<1x384xf32>
    %783 = tpu.matmul %782, %3, %cst_131 {dimension_numbers = #tpu.dot_dimension_numbers<[1], [0], [0], [1], [0, 0, 1, 1], [], []>} : vector<1x128xbf16>, vector<128x384xbf16>, vector<1x384xf32> -> vector<1x384xf32>
    %c31 = arith.constant 31 : index
    %c0_132 = arith.constant 0 : index
    %784 = vector.load %arg1[%c31, %c0_132] : memref<32x384xf32, #tpu.memory_space<vmem>>, vector<1x384xf32>
    %785 = vector.extract_strided_slice %784 {offsets = [0, 0], sizes = [1, 256], strides = [1, 1]} : vector<1x384xf32> to vector<1x256xf32>
    %786 = vector.extract_strided_slice %783 {offsets = [0, 0], sizes = [1, 256], strides = [1, 1]} : vector<1x384xf32> to vector<1x256xf32>
    %787 = arith.addf %785, %786 : vector<1x256xf32>
    %788 = arith.negf %787 : vector<1x256xf32>
    %789 = math.exp %788 : vector<1x256xf32>
    %cst_133 = arith.constant 1.000000e+00 : f32
    %790 = vector.broadcast %cst_133 : f32 to vector<1x256xf32>
    %791 = arith.addf %790, %789 : vector<1x256xf32>
    %792 = arith.divf %790, %791 : vector<1x256xf32>
    %793 = vector.extract_strided_slice %792 {offsets = [0, 0], sizes = [1, 128], strides = [1, 1]} : vector<1x256xf32> to vector<1x128xf32>
    %794 = vector.extract_strided_slice %792 {offsets = [0, 128], sizes = [1, 128], strides = [1, 1]} : vector<1x256xf32> to vector<1x128xf32>
    %795 = vector.extract_strided_slice %784 {offsets = [0, 256], sizes = [1, 128], strides = [1, 1]} : vector<1x384xf32> to vector<1x128xf32>
    %796 = vector.extract_strided_slice %783 {offsets = [0, 256], sizes = [1, 128], strides = [1, 1]} : vector<1x384xf32> to vector<1x128xf32>
    %797 = arith.addf %796, %4 : vector<1x128xf32>
    %798 = arith.mulf %793, %797 : vector<1x128xf32>
    %799 = arith.addf %795, %798 : vector<1x128xf32>
    %800 = math.tanh %799 : vector<1x128xf32>
    %801 = arith.subf %781, %800 : vector<1x128xf32>
    %802 = arith.mulf %794, %801 : vector<1x128xf32>
    %803 = arith.addf %800, %802 : vector<1x128xf32>
    %c31_i32 = arith.constant 31 : i32
    %804 = arith.addi %6, %c31_i32 : i32
    %c8_i32_134 = arith.constant 8 : i32
    %805 = arith.cmpi slt, %804, %c8_i32_134 : i32
    %806 = arith.select %805, %803, %781 : vector<1x128xf32>
    %807 = tpu.concatenate %31, %56, %81, %106, %131, %156, %181, %206, %231, %256, %281, %306, %331, %356, %381, %406 in 0 : vector<1x128xf32>, vector<1x128xf32>, vector<1x128xf32>, vector<1x128xf32>, vector<1x128xf32>, vector<1x128xf32>, vector<1x128xf32>, vector<1x128xf32>, vector<1x128xf32>, vector<1x128xf32>, vector<1x128xf32>, vector<1x128xf32>, vector<1x128xf32>, vector<1x128xf32>, vector<1x128xf32>, vector<1x128xf32> -> vector<16x128xf32>
    %808 = tpu.concatenate %431, %456, %481, %506, %531, %556, %581, %606, %631, %656, %681, %706, %731, %756, %781, %806 in 0 : vector<1x128xf32>, vector<1x128xf32>, vector<1x128xf32>, vector<1x128xf32>, vector<1x128xf32>, vector<1x128xf32>, vector<1x128xf32>, vector<1x128xf32>, vector<1x128xf32>, vector<1x128xf32>, vector<1x128xf32>, vector<1x128xf32>, vector<1x128xf32>, vector<1x128xf32>, vector<1x128xf32>, vector<1x128xf32> -> vector<16x128xf32>
    %809 = tpu.concatenate %807, %808 in 0 : vector<16x128xf32>, vector<16x128xf32> -> vector<32x128xf32>
    %c0_135 = arith.constant 0 : index
    %c0_136 = arith.constant 0 : index
    %810 = vector.load %arg5[%c0_135, %c0_136] : memref<32x128xf32, #tpu.memory_space<vmem>>, vector<32x128xf32>
    tpu.vector_store %arg5[%c0_135, %c0_136], %809 {strides = array<i32>} : memref<32x128xf32, #tpu.memory_space<vmem>>, vector<32x128xf32>,
    %c0_137 = arith.constant 0 : index
    %c0_138 = arith.constant 0 : index
    %811 = vector.load %arg6[%c0_137, %c0_138] : memref<1x128xf32, #tpu.memory_space<vmem>>, vector<1x128xf32>
    tpu.vector_store %arg6[%c0_137, %c0_138], %806 {strides = array<i32>} : memref<1x128xf32, #tpu.memory_space<vmem>>, vector<1x128xf32>,
    return
  }
  func.func @transform_0(%arg0: i32) -> (i32, i32) {
    %c0_i32 = arith.constant 0 : i32
    %c0_i32_0 = arith.constant 0 : i32
    return %arg0, %c0_i32 : i32, i32
  }
  func.func @transform_1(%arg0: i32) -> (i32, i32) {
    %c0_i32 = arith.constant 0 : i32
    %c0_i32_0 = arith.constant 0 : i32
    %c0_i32_1 = arith.constant 0 : i32
    return %c0_i32, %c0_i32_0 : i32, i32
  }
  func.func @transform_2(%arg0: i32) -> (i32, i32) {
    %c0_i32 = arith.constant 0 : i32
    %c0_i32_0 = arith.constant 0 : i32
    %c0_i32_1 = arith.constant 0 : i32
    return %c0_i32, %c0_i32_0 : i32, i32
  }
  func.func @transform_3(%arg0: i32) -> (i32, i32) {
    %c0_i32 = arith.constant 0 : i32
    %c0_i32_0 = arith.constant 0 : i32
    %c0_i32_1 = arith.constant 0 : i32
    return %c0_i32, %c0_i32_0 : i32, i32
  }
  func.func @transform_4(%arg0: i32) -> (i32, i32) {
    %c0_i32 = arith.constant 0 : i32
    %c0_i32_0 = arith.constant 0 : i32
    return %arg0, %c0_i32 : i32, i32
  }
}

</mosaic_0001>

<llo_original>
// kernel: tpu_custom_call.1
$region0: #{tpu_custom_call.1}
  #allocation0 [shape = 'u32[]', space=smem, size = 0x4, offset = 0x4, fixed_abs, tag = 'smem constant byte address 0x4 - core index']
  #allocation1 [shape = 'u32[144,128]{1,0:T(1,128)}', space=vmem, size = 0x12000, scoped, tag = 'internal scratch']
  #allocation2 [shape = 'f32[1,128]{1,0:T(1,128)}', space=vmem, size = 0x200, scoped, tag = 'scratch operand']
  %s0 = inlined_call_operand.hbm [shape: f32[32,384], index: 0, kind: input, shape index: {}]
  %s1 = inlined_call_operand.vmem [shape: f32[1,128], index: 1, kind: input, shape index: {}]
  %s2 = inlined_call_operand.hbm [shape: bf16[128,384], index: 2, kind: input, shape index: {}]
  %s3 = inlined_call_operand.vmem [shape: f32[1,128], index: 3, kind: input, shape index: {}]
  %s4 = inlined_call_operand.hbm [shape: f32[32,128], index: 4, kind: output, shape index: {}]
  %s5 = sld [smem:[#allocation0]]
  $region38: #{tpu_custom_call.1} parent=0
    _
  %s7 = ssub.s32 1, %s5
  %s8 = scalar_select 0, %s7, %s5
  $region1: #{tpu_custom_call.1} parent=0
    #allocation3 [shape = 'u8[49152]{0}', space=vmem, size = 0xc000, scoped, tag = 'input window, operand 0, single buffered']
    #allocation4 [shape = 's32[1]{0}', space=sflag, size = 0x4, scoped, tag = 'scoped memory for tpu_custom_call.1']
    #allocation5 [shape = 's32[1]{0}', space=sflag, size = 0x4, scoped, tag = 'scoped memory for tpu_custom_call.1']
    #allocation6 [shape = 'u8[98304]{0}', space=vmem, size = 0x18000, scoped, tag = 'input window, operand 2, single buffered']
    #allocation7 [shape = 's32[1]{0}', space=sflag, size = 0x4, scoped, tag = 'scoped memory for tpu_custom_call.1']
    #allocation8 [shape = 'u8[16384]{0}', space=vmem, size = 0x4000, scoped, tag = 'output window, operand 0, single buffered']
    %9 = vsyncpa [#allocation4], 0
    %10 = vsyncpa [#allocation7], 0
    %11 = vsyncpa [#allocation5], 0
    // Predicated region
    $region2: #{tpu_custom_call.1} parent=1 // pred_check
      _
    $region3: #{tpu_custom_call.1} parent=1 // pred_check_branch
      %13 = sbr.rel (0) target = $region5
    $region4: #{tpu_custom_call.1} parent=1 // pred_region
      %s15 = ssub.s32 1536, 1536
      %16 = vsyncadd [#allocation4], %s15
      %s17 = sshll.u32 [#allocation3], 4
      %s18 = int_to_ptr.vmem [resolvable:$true] %s17
      %23 = dma.hbm_to_vmem [thread:$0]  %s0, 1536, %s18, [#allocation4], 384, 384, 24
    $region5: #{tpu_custom_call.1} parent=1 // pred_fallthru
      _
    // Predicated region
    $region6: #{tpu_custom_call.1} parent=1 // pred_check
      _
    $region7: #{tpu_custom_call.1} parent=1 // pred_check_branch
      %25 = sbr.rel (0) target = $region9
    $region8: #{tpu_custom_call.1} parent=1 // pred_region
      _
    $region9: #{tpu_custom_call.1} parent=1 // pred_fallthru
      _
    // Predicated region
    $region10: #{tpu_custom_call.1} parent=1 // pred_check
      _
    $region11: #{tpu_custom_call.1} parent=1 // pred_check_branch
      %27 = sbr.rel (0) target = $region13
    $region12: #{tpu_custom_call.1} parent=1 // pred_region
      %s29 = ssub.s32 3072, 3072
      %30 = vsyncadd [#allocation7], %s29
      %s31 = sshll.u32 [#allocation6], 4
      %s32 = int_to_ptr.vmem [resolvable:$true] %s31
      %37 = dma.hbm_to_vmem [thread:$0]  %s2, 3072, %s32, [#allocation7], 192, 192, 12
    $region13: #{tpu_custom_call.1} parent=1 // pred_fallthru
      _
    // Predicated region
    $region14: #{tpu_custom_call.1} parent=1 // pred_check
      _
    $region15: #{tpu_custom_call.1} parent=1 // pred_check_branch
      %39 = sbr.rel (0) target = $region17
    $region16: #{tpu_custom_call.1} parent=1 // pred_region
      _
    $region17: #{tpu_custom_call.1} parent=1 // pred_fallthru
      _
    // Predicated region
    $region18: #{tpu_custom_call.1} parent=1 // pred_check
      _
    $region19: #{tpu_custom_call.1} parent=1 // pred_check_branch
      %41 = sbr.rel (0) target = $region21
    $region20: #{tpu_custom_call.1} parent=1 // pred_region
      %42 = dma.done [#allocation4], 1536
    $region21: #{tpu_custom_call.1} parent=1 // pred_fallthru
      _
    // Predicated region
    $region22: #{tpu_custom_call.1} parent=1 // pred_check
      _
    $region23: #{tpu_custom_call.1} parent=1 // pred_check_branch
      %44 = sbr.rel (0) target = $region25
    $region24: #{tpu_custom_call.1} parent=1 // pred_region
      %45 = dma.done [#allocation7], 3072
    $region25: #{tpu_custom_call.1} parent=1 // pred_fallthru
      _
    %p47 = scmp.eq.s32.totalorder 0, 0
    // Predicated region
    $region26: #{tpu_custom_call.1} parent=1 // pred_check
      %p48 = pneg %p47
    $region27: #{tpu_custom_call.1} parent=1 // pred_check_branch
      %50 = sbr.rel (%p48) target = $region29
    $region28: #{tpu_custom_call.1} parent=1 // pred_region
      %v51 = vld [vmem:[%s1] sm:$0x1]
      %52 = vst [vmem:[#allocation2] sm:$0x1] %v51
    $region29: #{tpu_custom_call.1} parent=1 // pred_fallthru
      _
    %v53 = vld [vmem:[#allocation6] sm:$0xff]
    %v54 = vld [vmem:[#allocation6 + $0x8] sm:$0xf]
    %v55 = vld [vmem:[#allocation6 + $0xc] sm:$0xff]
    %v56 = vld [vmem:[#allocation6 + $0x14] sm:$0xf]
    %v57 = vld [vmem:[#allocation6 + $0x18] sm:$0xff]
    %v58 = vld [vmem:[#allocation6 + $0x20] sm:$0xf]
    %v59 = vld [vmem:[#allocation6 + $0x24] sm:$0xff]
    %v60 = vld [vmem:[#allocation6 + $0x2c] sm:$0xf]
    %v61 = vld [vmem:[#allocation6 + $0x30] sm:$0xff]
    %v62 = vld [vmem:[#allocation6 + $0x38] sm:$0xf]
    %v63 = vld [vmem:[#allocation6 + $0x3c] sm:$0xff]
    %v64 = vld [vmem:[#allocation6 + $0x44] sm:$0xf]
    %v65 = vld [vmem:[#allocation6 + $0x48] sm:$0xff]
    %v66 = vld [vmem:[#allocation6 + $0x50] sm:$0xf]
    %v67 = vld [vmem:[#allocation6 + $0x54] sm:$0xff]
    %v68 = vld [vmem:[#allocation6 + $0x5c] sm:$0xf]
    %v69 = vld [vmem:[#allocation6 + $0x60] sm:$0xff]
    %v70 = vld [vmem:[#allocation6 + $0x68] sm:$0xf]
    %v71 = vld [vmem:[#allocation6 + $0x6c] sm:$0xff]
    %v72 = vld [vmem:[#allocation6 + $0x74] sm:$0xf]
    %v73 = vld [vmem:[#allocation6 + $0x78] sm:$0xff]
    %v74 = vld [vmem:[#allocation6 + $0x80] sm:$0xf]
    %v75 = vld [vmem:[#allocation6 + $0x84] sm:$0xff]
    %v76 = vld [vmem:[#allocation6 + $0x8c] sm:$0xf]
    %v77 = vld [vmem:[#allocation6 + $0x90] sm:$0xff]
    %v78 = vld [vmem:[#allocation6 + $0x98] sm:$0xf]
    %v79 = vld [vmem:[#allocation6 + $0x9c] sm:$0xff]
    %v80 = vld [vmem:[#allocation6 + $0xa4] sm:$0xf]
    %v81 = vld [vmem:[#allocation6 + $0xa8] sm:$0xff]
    %v82 = vld [vmem:[#allocation6 + $0xb0] sm:$0xf]
    %v83 = vld [vmem:[#allocation6 + $0xb4] sm:$0xff]
    %v84 = vld [vmem:[#allocation6 + $0xbc] sm:$0xf]
    %v85 = vld [vmem:[%s3] sm:$0x1]
    %v86 = vld [vmem:[#allocation2] sm:$0x1]
    %s87 = smul.u32 0, 32
    %v88 = vpack.c.bf16 %v86, %v86
    %v121 = vunpack.c.l.b16 %v53
    %v122 = vunpack.c.h.b16 %v53
    %v123 = vunpack.c.l.b16 %v54
    %v124 = vunpack.c.l.b16 %v55
    %v125 = vunpack.c.h.b16 %v55
    %v126 = vunpack.c.l.b16 %v56
    %v127 = vunpack.c.l.b16 %v57
    %v128 = vunpack.c.h.b16 %v57
    %v129 = vunpack.c.l.b16 %v58
    %v130 = vunpack.c.l.b16 %v59
    %v131 = vunpack.c.h.b16 %v59
    %v132 = vunpack.c.l.b16 %v60
    %v133 = vunpack.c.l.b16 %v61
    %v134 = vunpack.c.h.b16 %v61
    %v135 = vunpack.c.l.b16 %v62
    %v136 = vunpack.c.l.b16 %v63
    %v137 = vunpack.c.h.b16 %v63
    %v138 = vunpack.c.l.b16 %v64
    %v139 = vunpack.c.l.b16 %v65
    %v140 = vunpack.c.h.b16 %v65
    %v141 = vunpack.c.l.b16 %v66
    %v142 = vunpack.c.l.b16 %v67
    %v143 = vunpack.c.h.b16 %v67
    %v144 = vunpack.c.l.b16 %v68
    %v145 = vunpack.c.l.b16 %v69
    %v146 = vunpack.c.h.b16 %v69
    %v147 = vunpack.c.l.b16 %v70
    %v148 = vunpack.c.l.b16 %v71
    %v149 = vunpack.c.h.b16 %v71
    %v150 = vunpack.c.l.b16 %v72
    %v151 = vunpack.c.l.b16 %v73
    %v152 = vunpack.c.h.b16 %v73
    %v153 = vunpack.c.l.b16 %v74
    %v154 = vunpack.c.l.b16 %v75
    %v155 = vunpack.c.h.b16 %v75
    %v156 = vunpack.c.l.b16 %v76
    %v157 = vunpack.c.l.b16 %v77
    %v158 = vunpack.c.h.b16 %v77
    %v159 = vunpack.c.l.b16 %v78
    %v160 = vunpack.c.l.b16 %v79
    %v161 = vunpack.c.h.b16 %v79
    %v162 = vunpack.c.l.b16 %v80
    %v163 = vunpack.c.l.b16 %v81
    %v164 = vunpack.c.h.b16 %v81
    %v165 = vunpack.c.l.b16 %v82
    %v166 = vunpack.c.l.b16 %v83
    %v167 = vunpack.c.h.b16 %v83
    %v168 = vunpack.c.l.b16 %v84
    %v169 = vpack.c.b16 %v124, %v121
    %v170 = vpack.c.b16 %v125, %v122
    %v171 = vpack.c.b16 %v126, %v123
    %v172 = vpack.c.b16 %v130, %v127
    %v173 = vpack.c.b16 %v131, %v128
    %v174 = vpack.c.b16 %v132, %v129
    %v175 = vpack.c.b16 %v136, %v133
    %v176 = vpack.c.b16 %v137, %v134
    %v177 = vpack.c.b16 %v138, %v135
    %v178 = vpack.c.b16 %v142, %v139
    %v179 = vpack.c.b16 %v143, %v140
    %v180 = vpack.c.b16 %v144, %v141
    %v181 = vpack.c.b16 %v148, %v145
    %v182 = vpack.c.b16 %v149, %v146
    %v183 = vpack.c.b16 %v150, %v147
    %v184 = vpack.c.b16 %v154, %v151
    %v185 = vpack.c.b16 %v155, %v152
    %v186 = vpack.c.b16 %v156, %v153
    %v187 = vpack.c.b16 %v160, %v157
    %v188 = vpack.c.b16 %v161, %v158
    %v189 = vpack.c.b16 %v162, %v159
    %v190 = vpack.c.b16 %v166, %v163
    %v191 = vpack.c.b16 %v167, %v164
    %v192 = vpack.c.b16 %v168, %v165
    %217 = vmatprep.subr.bf16.mxu0 %v170
    %218 = vmatpush1.bf16.msra.mxu0 %v169
    %219 = vmatprep.subr.bf16.mxu0 %v173
    %220 = vmatpush1.bf16.msra.mxu0 %v172
    %221 = vmatprep.subr.bf16.mxu0 %v176
    %222 = vmatpush1.bf16.msra.mxu0 %v175
    %223 = vmatprep.subr.bf16.mxu0 %v179
    %224 = vmatpush1.bf16.msra.mxu0 %v178
    %225 = vmatprep.subr.bf16.mxu0 %v182
    %226 = vmatpush1.bf16.msra.mxu0 %v181
    %227 = vmatprep.subr.bf16.mxu0 %v185
    %228 = vmatpush1.bf16.msra.mxu0 %v184
    %229 = vmatprep.subr.bf16.mxu0 %v188
    %230 = vmatpush1.bf16.msra.mxu0 %v187
    %231 = vmatprep.subr.bf16.mxu0 %v191
    %232 = vmatpush1.bf16.msra.mxu0 %v190
    %233 = vmatprep.subr.bf16.mxu0 0
    %234 = vmatpush1.bf16.msra.mxu0 0
    %235 = vmatprep.subr.bf16.mxu0 0
    %236 = vmatpush1.bf16.msra.mxu0 0
    %237 = vmatprep.subr.bf16.mxu0 0
    %238 = vmatpush1.bf16.msra.mxu0 0
    %239 = vmatprep.subr.bf16.mxu0 0
    %240 = vmatpush1.bf16.msra.mxu0 0
    %241 = vmatprep.subr.bf16.mxu0 0
    %242 = vmatpush1.bf16.msra.mxu0 0
    %243 = vmatprep.subr.bf16.mxu0 0
    %244 = vmatpush1.bf16.msra.mxu0 0
    %245 = vmatprep.subr.bf16.mxu0 0
    %246 = vmatpush1.bf16.msra.mxu0 0
    %247 = vmatprep.subr.bf16.mxu0 0
    %248 = vmatpush1.bf16.msra.mxu0 0
    %249 = vmatprep.mubr.bf16.mxu0 0
    %250 = vmatmul.mubr.bf16.gmra.mrb[0].mxu0 %v88
    %v251 = vpop.f32.mrb[0].mxu0
    %v252 = vadd.f32 0.0, %v251
    %v253 = vpop.f32.mrb[0].mxu0
    %v254 = vadd.f32 0.0, %v253
    %v255 = vpop.f32.mrb[0].mxu0
    %v256 = vpop.f32.mrb[0].mxu0
    %257 = vdwg.mxu0
    %258 = vmatprep.subr.bf16.mxu0 0
    %259 = vmatpush1.bf16.msra.mxu0 %v171
    %260 = vmatprep.subr.bf16.mxu0 0
    %261 = vmatpush1.bf16.msra.mxu0 %v174
    %262 = vmatprep.subr.bf16.mxu0 0
    %263 = vmatpush1.bf16.msra.mxu0 %v177
    %264 = vmatprep.subr.bf16.mxu0 0
    %265 = vmatpush1.bf16.msra.mxu0 %v180
    %266 = vmatprep.subr.bf16.mxu0 0
    %267 = vmatpush1.bf16.msra.mxu0 %v183
    %268 = vmatprep.subr.bf16.mxu0 0
    %269 = vmatpush1.bf16.msra.mxu0 %v186
    %270 = vmatprep.subr.bf16.mxu0 0
    %271 = vmatpush1.bf16.msra.mxu0 %v189
    %272 = vmatprep.subr.bf16.mxu0 0
    %273 = vmatpush1.bf16.msra.mxu0 %v192
    %274 = vmatprep.subr.bf16.mxu0 0
    %275 = vmatpush1.bf16.msra.mxu0 0
    %276 = vmatprep.subr.bf16.mxu0 0
    %277 = vmatpush1.bf16.msra.mxu0 0
    %278 = vmatprep.subr.bf16.mxu0 0
    %279 = vmatpush1.bf16.msra.mxu0 0
    %280 = vmatprep.subr.bf16.mxu0 0
    %281 = vmatpush1.bf16.msra.mxu0 0
    %282 = vmatprep.subr.bf16.mxu0 0
    %283 = vmatpush1.bf16.msra.mxu0 0
    %284 = vmatprep.subr.bf16.mxu0 0
    %285 = vmatpush1.bf16.msra.mxu0 0
    %286 = vmatprep.subr.bf16.mxu0 0
    %287 = vmatpush1.bf16.msra.mxu0 0
    %288 = vmatprep.subr.bf16.mxu0 0
    %289 = vmatpush1.bf16.msra.mxu0 0
    %290 = vmatprep.mubr.bf16.mxu0 0
    %291 = vmatmul.mubr.bf16.gmra.mrb[0].mxu0 %v88
    %v292 = vpop.f32.mrb[0].mxu0
    %v293 = vadd.f32 0.0, %v292
    %v294 = vpop.f32.mrb[0].mxu0
    %v295 = vpop.f32.mrb[0].mxu0
    %v296 = vpop.f32.mrb[0].mxu0
    %297 = vdwg.mxu0
    %v298 = vld [vmem:[#allocation3] ss:$8 sm:$0x7]
    %v301 = vcombine.low %v252, %v254
    %v303 = vunpack.c.l.s4 1966171168
    %v304 = vunpack.c.0.s8 %v303
    %v305 = vlaneseq
    %v306 = vshrl.u32 %v305, 7
    %v307 = vsub.s32 %v304, %v306
    %v308 = vrot.slane %v301, %v307
    %v310 = vunpack.c.l.s4 1966171168
    %v311 = vunpack.c.0.s8 %v310
    %v312 = vlaneseq
    %v313 = vshrl.u32 %v312, 7
    %v314 = vsub.s32 %v311, %v313
    %v315 = vrot.slane %v308, %v314
    %v317 = vadd.f32 %v298, %v315
    %v318 = vxor.u32 %v317, 2147483648
    %v319 = vmul.f32 %v318, 1.442695
    %v320 = vpow.pop %v319
    %v321 = vadd.f32 %v320, 1.0
    %v322 = vrcp.pop %v321
    %v323 = vmul.f32 1.0, %v322
    %v324 = vadd.f32 %v293, %v85
    %v325 = vmul.f32 %v323, %v324
    %v327 = vrot.slane %v298, 2
    %v329 = vadd.f32 %v327, %v325
    %v330 = vtanh.pop %v329
    %v331 = vsub.f32 %v86, %v330
    %v333 = vrot.slane %v323, 1
    %v335 = vmul.f32 %v333, %v331
    %v336 = vadd.f32 %v330, %v335
    %p337 = scmp.lt.s32.totalorder %s87, 8
    %s338 = scalar_select %p337, 1, 0
    %v339 = vstv %s338
    %vm340 = vcmp.eq.s32.totalorder %v339, 1
    %v341 = vsel %vm340, %v336, %v86
    %v342 = vpack.c.bf16 %v341, %v341
    %343 = vmatprep.subr.bf16.mxu0 %v170
    %344 = vmatpush1.bf16.msra.mxu0 %v169
    %345 = vmatprep.subr.bf16.mxu0 %v173
    %346 = vmatpush1.bf16.msra.mxu0 %v172
    %347 = vmatprep.subr.bf16.mxu0 %v176
    %348 = vmatpush1.bf16.msra.mxu0 %v175
    %349 = vmatprep.subr.bf16.mxu0 %v179
    %350 = vmatpush1.bf16.msra.mxu0 %v178
    %351 = vmatprep.subr.bf16.mxu0 %v182
    %352 = vmatpush1.bf16.msra.mxu0 %v181
    %353 = vmatprep.subr.bf16.mxu0 %v185
    %354 = vmatpush1.bf16.msra.mxu0 %v184
    %355 = vmatprep.subr.bf16.mxu0 %v188
    %356 = vmatpush1.bf16.msra.mxu0 %v187
    %357 = vmatprep.subr.bf16.mxu0 %v191
    %358 = vmatpush1.bf16.msra.mxu0 %v190
    %359 = vmatprep.subr.bf16.mxu0 0
    %360 = vmatpush1.bf16.msra.mxu0 0
    %361 = vmatprep.subr.bf16.mxu0 0
    %362 = vmatpush1.bf16.msra.mxu0 0
    %363 = vmatprep.subr.bf16.mxu0 0
    %364 = vmatpush1.bf16.msra.mxu0 0
    %365 = vmatprep.subr.bf16.mxu0 0
    %366 = vmatpush1.bf16.msra.mxu0 0
    %367 = vmatprep.subr.bf16.mxu0 0
    %368 = vmatpush1.bf16.msra.mxu0 0
    %369 = vmatprep.subr.bf16.mxu0 0
    %370 = vmatpush1.bf16.msra.mxu0 0
    %371 = vmatprep.subr.bf16.mxu0 0
    %372 = vmatpush1.bf16.msra.mxu0 0
    %373 = vmatprep.subr.bf16.mxu0 0
    %374 = vmatpush1.bf16.msra.mxu0 0
    %375 = vmatprep.mubr.bf16.mxu0 0
    %376 = vmatmul.mubr.bf16.gmra.mrb[0].mxu0 %v342
    %v377 = vpop.f32.mrb[0].mxu0
    %v378 = vadd.f32 0.0, %v377
    %v379 = vpop.f32.mrb[0].mxu0
    %v380 = vadd.f32 0.0, %v379
    %v381 = vpop.f32.mrb[0].mxu0
    %v382 = vpop.f32.mrb[0].mxu0
    %383 = vdwg.mxu0
    %384 = vmatprep.subr.bf16.mxu0 0
    %385 = vmatpush1.bf16.msra.mxu0 %v171
    %386 = vmatprep.subr.bf16.mxu0 0
    %387 = vmatpush1.bf16.msra.mxu0 %v174
    %388 = vmatprep.subr.bf16.mxu0 0
    %389 = vmatpush1.bf16.msra.mxu0 %v177
    %390 = vmatprep.subr.bf16.mxu0 0
    %391 = vmatpush1.bf16.msra.mxu0 %v180
    %392 = vmatprep.subr.bf16.mxu0 0
    %393 = vmatpush1.bf16.msra.mxu0 %v183
    %394 = vmatprep.subr.bf16.mxu0 0
    %395 = vmatpush1.bf16.msra.mxu0 %v186
    %396 = vmatprep.subr.bf16.mxu0 0
    %397 = vmatpush1.bf16.msra.mxu0 %v189
    %398 = vmatprep.subr.bf16.mxu0 0
    %399 = vmatpush1.bf16.msra.mxu0 %v192
    %400 = vmatprep.subr.bf16.mxu0 0
    %401 = vmatpush1.bf16.msra.mxu0 0
    %402 = vmatprep.subr.bf16.mxu0 0
    %403 = vmatpush1.bf16.msra.mxu0 0
    %404 = vmatprep.subr.bf16.mxu0 0
    %405 = vmatpush1.bf16.msra.mxu0 0
    %406 = vmatprep.subr.bf16.mxu0 0
    %407 = vmatpush1.bf16.msra.mxu0 0
    %408 = vmatprep.subr.bf16.mxu0 0
    %409 = vmatpush1.bf16.msra.mxu0 0
    %410 = vmatprep.subr.bf16.mxu0 0
    %411 = vmatpush1.bf16.msra.mxu0 0
    %412 = vmatprep.subr.bf16.mxu0 0
    %413 = vmatpush1.bf16.msra.mxu0 0
    %414 = vmatprep.subr.bf16.mxu0 0
    %415 = vmatpush1.bf16.msra.mxu0 0
    %416 = vmatprep.mubr.bf16.mxu0 0
    %417 = vmatmul.mubr.bf16.gmra.mrb[0].mxu0 %v342
    %v418 = vpop.f32.mrb[0].mxu0
    %v419 = vadd.f32 0.0, %v418
    %v420 = vpop.f32.mrb[0].mxu0
    %v421 = vpop.f32.mrb[0].mxu0
    %v422 = vpop.f32.mrb[0].mxu0
    %423 = vdwg.mxu0
    %s424 = scalar_lea.vmem [#allocation3], 1
    %v425 = vld [vmem:[%s424] ss:$8 sm:$0x7]
    %v428 = vcombine.low %v378, %v380
    %v430 = vunpack.c.l.s4 1966171168
    %v431 = vunpack.c.0.s8 %v430
    %v432 = vlaneseq
    %v433 = vshrl.u32 %v432, 7
    %v434 = vsub.s32 %v431, %v433
    %v435 = vrot.slane %v428, %v434
    %v437 = vunpack.c.l.s4 1966171168
    %v438 = vunpack.c.0.s8 %v437
    %v439 = vlaneseq
    %v440 = vshrl.u32 %v439, 7
    %v441 = vsub.s32 %v438, %v440
    %v442 = vrot.slane %v435, %v441
    %v444 = vadd.f32 %v425, %v442
    %v445 = vxor.u32 %v444, 2147483648
    %v446 = vmul.f32 %v445, 1.442695
    %v447 = vpow.pop %v446
    %v448 = vadd.f32 %v447, 1.0
    %v449 = vrcp.pop %v448
    %v450 = vmul.f32 1.0, %v449
    %v451 = vadd.f32 %v419, %v85
    %v452 = vmul.f32 %v450, %v451
    %v454 = vrot.slane %v425, 2
    %v456 = vadd.f32 %v454, %v452
    %v457 = vtanh.pop %v456
    %v458 = vsub.f32 %v341, %v457
    %v460 = vrot.slane %v450, 1
    %v462 = vmul.f32 %v460, %v458
    %v463 = vadd.f32 %v457, %v462
    %s464 = sadd.s32 %s87, 1
    %p465 = scmp.lt.s32.totalorder %s464, 8
    %s466 = scalar_select %p465, 1, 0
    %v467 = vstv %s466
    %vm468 = vcmp.eq.s32.totalorder %v467, 1
    %v469 = vsel %vm468, %v463, %v341
    %v470 = vpack.c.bf16 %v469, %v469
    %471 = vmatprep.subr.bf16.mxu0 %v170
    %472 = vmatpush1.bf16.msra.mxu0 %v169
    %473 = vmatprep.subr.bf16.mxu0 %v173
    %474 = vmatpush1.bf16.msra.mxu0 %v172
    %475 = vmatprep.subr.bf16.mxu0 %v176
    %476 = vmatpush1.bf16.msra.mxu0 %v175
    %477 = vmatprep.subr.bf16.mxu0 %v179
    %478 = vmatpush1.bf16.msra.mxu0 %v178
    %479 = vmatprep.subr.bf16.mxu0 %v182
    %480 = vmatpush1.bf16.msra.mxu0 %v181
    %481 = vmatprep.subr.bf16.mxu0 %v185
    %482 = vmatpush1.bf16.msra.mxu0 %v184
    %483 = vmatprep.subr.bf16.mxu0 %v188
    %484 = vmatpush1.bf16.msra.mxu0 %v187
    %485 = vmatprep.subr.bf16.mxu0 %v191
    %486 = vmatpush1.bf16.msra.mxu0 %v190
    %487 = vmatprep.subr.bf16.mxu0 0
    %488 = vmatpush1.bf16.msra.mxu0 0
    %489 = vmatprep.subr.bf16.mxu0 0
    %490 = vmatpush1.bf16.msra.mxu0 0
    %491 = vmatprep.subr.bf16.mxu0 0
    %492 = vmatpush1.bf16.msra.mxu0 0
    %493 = vmatprep.subr.bf16.mxu0 0
    %494 = vmatpush1.bf16.msra.mxu0 0
    %495 = vmatprep.subr.bf16.mxu0 0
    %496 = vmatpush1.bf16.msra.mxu0 0
    %497 = vmatprep.subr.bf16.mxu0 0
    %498 = vmatpush1.bf16.msra.mxu0 0
    %499 = vmatprep.subr.bf16.mxu0 0
    %500 = vmatpush1.bf16.msra.mxu0 0
    %501 = vmatprep.subr.bf16.mxu0 0
    %502 = vmatpush1.bf16.msra.mxu0 0
    %503 = vmatprep.mubr.bf16.mxu0 0
    %504 = vmatmul.mubr.bf16.gmra.mrb[0].mxu0 %v470
    %v505 = vpop.f32.mrb[0].mxu0
    %v506 = vadd.f32 0.0, %v505
    %v507 = vpop.f32.mrb[0].mxu0
    %v508 = vadd.f32 0.0, %v507
    %v509 = vpop.f32.mrb[0].mxu0
    %v510 = vpop.f32.mrb[0].mxu0
    %511 = vdwg.mxu0
    %512 = vmatprep.subr.bf16.mxu0 0
    %513 = vmatpush1.bf16.msra.mxu0 %v171
    %514 = vmatprep.subr.bf16.mxu0 0
    %515 = vmatpush1.bf16.msra.mxu0 %v174
    %516 = vmatprep.subr.bf16.mxu0 0
    %517 = vmatpush1.bf16.msra.mxu0 %v177
    %518 = vmatprep.subr.bf16.mxu0 0
    %519 = vmatpush1.bf16.msra.mxu0 %v180
    %520 = vmatprep.subr.bf16.mxu0 0
    %521 = vmatpush1.bf16.msra.mxu0 %v183
    %522 = vmatprep.subr.bf16.mxu0 0
    %523 = vmatpush1.bf16.msra.mxu0 %v186
    %524 = vmatprep.subr.bf16.mxu0 0
    %525 = vmatpush1.bf16.msra.mxu0 %v189
    %526 = vmatprep.subr.bf16.mxu0 0
    %527 = vmatpush1.bf16.msra.mxu0 %v192
    %528 = vmatprep.subr.bf16.mxu0 0
    %529 = vmatpush1.bf16.msra.mxu0 0
    %530 = vmatprep.subr.bf16.mxu0 0
    %531 = vmatpush1.bf16.msra.mxu0 0
    %532 = vmatprep.subr.bf16.mxu0 0
    %533 = vmatpush1.bf16.msra.mxu0 0
    %534 = vmatprep.subr.bf16.mxu0 0
    %535 = vmatpush1.bf16.msra.mxu0 0
    %536 = vmatprep.subr.bf16.mxu0 0
    %537 = vmatpush1.bf16.msra.mxu0 0
    %538 = vmatprep.subr.bf16.mxu0 0
    %539 = vmatpush1.bf16.msra.mxu0 0
    %540 = vmatprep.subr.bf16.mxu0 0
    %541 = vmatpush1.bf16.msra.mxu0 0
    %542 = vmatprep.subr.bf16.mxu0 0
    %543 = vmatpush1.bf16.msra.mxu0 0
    %544 = vmatprep.mubr.bf16.mxu0 0
    %545 = vmatmul.mubr.bf16.gmra.mrb[0].mxu0 %v470
    %v546 = vpop.f32.mrb[0].mxu0
    %v547 = vadd.f32 0.0, %v546
    %v548 = vpop.f32.mrb[0].mxu0
    %v549 = vpop.f32.mrb[0].mxu0
    %v550 = vpop.f32.mrb[0].mxu0
    %551 = vdwg.mxu0
    %s552 = scalar_lea.vmem [#allocation3], 2
    %v553 = vld [vmem:[%s552] ss:$8 sm:$0x7]
    %v556 = vcombine.low %v506, %v508
    %v558 = vunpack.c.l.s4 1966171168
    %v559 = vunpack.c.0.s8 %v558
    %v560 = vlaneseq
    %v561 = vshrl.u32 %v560, 7
    %v562 = vsub.s32 %v559, %v561
    %v563 = vrot.slane %v556, %v562
    %v565 = vunpack.c.l.s4 1966171168
    %v566 = vunpack.c.0.s8 %v565
    %v567 = vlaneseq
    %v568 = vshrl.u32 %v567, 7
    %v569 = vsub.s32 %v566, %v568
    %v570 = vrot.slane %v563, %v569
    %v572 = vadd.f32 %v553, %v570
    %v573 = vxor.u32 %v572, 2147483648
    %v574 = vmul.f32 %v573, 1.442695
    %v575 = vpow.pop %v574
    %v576 = vadd.f32 %v575, 1.0
    %v577 = vrcp.pop %v576
    %v578 = vmul.f32 1.0, %v577
    %v579 = vadd.f32 %v547, %v85
    %v580 = vmul.f32 %v578, %v579
    %v582 = vrot.slane %v553, 2
    %v584 = vadd.f32 %v582, %v580
    %v585 = vtanh.pop %v584
    %v586 = vsub.f32 %v469, %v585
    %v588 = vrot.slane %v578, 1
    %v590 = vmul.f32 %v588, %v586
    %v591 = vadd.f32 %v585, %v590
    %s592 = sadd.s32 %s87, 2
    %p593 = scmp.lt.s32.totalorder %s592, 8
    %s594 = scalar_select %p593, 1, 0
    %v595 = vstv %s594
    %vm596 = vcmp.eq.s32.totalorder %v595, 1
    %v597 = vsel %vm596, %v591, %v469
    %v598 = vpack.c.bf16 %v597, %v597
    %599 = vmatprep.subr.bf16.mxu0 %v170
    %600 = vmatpush1.bf16.msra.mxu0 %v169
    %601 = vmatprep.subr.bf16.mxu0 %v173
    %602 = vmatpush1.bf16.msra.mxu0 %v172
    %603 = vmatprep.subr.bf16.mxu0 %v176
    %604 = vmatpush1.bf16.msra.mxu0 %v175
    %605 = vmatprep.subr.bf16.mxu0 %v179
    %606 = vmatpush1.bf16.msra.mxu0 %v178
    %607 = vmatprep.subr.bf16.mxu0 %v182
    %608 = vmatpush1.bf16.msra.mxu0 %v181
    %609 = vmatprep.subr.bf16.mxu0 %v185
    %610 = vmatpush1.bf16.msra.mxu0 %v184
    %611 = vmatprep.subr.bf16.mxu0 %v188
    %612 = vmatpush1.bf16.msra.mxu0 %v187
    %613 = vmatprep.subr.bf16.mxu0 %v191
    %614 = vmatpush1.bf16.msra.mxu0 %v190
    %615 = vmatprep.subr.bf16.mxu0 0
    %616 = vmatpush1.bf16.msra.mxu0 0
    %617 = vmatprep.subr.bf16.mxu0 0
    %618 = vmatpush1.bf16.msra.mxu0 0
    %619 = vmatprep.subr.bf16.mxu0 0
    %620 = vmatpush1.bf16.msra.mxu0 0
    %621 = vmatprep.subr.bf16.mxu0 0
    %622 = vmatpush1.bf16.msra.mxu0 0
    %623 = vmatprep.subr.bf16.mxu0 0
    %624 = vmatpush1.bf16.msra.mxu0 0
    %625 = vmatprep.subr.bf16.mxu0 0
    %626 = vmatpush1.bf16.msra.mxu0 0
    %627 = vmatprep.subr.bf16.mxu0 0
    %628 = vmatpush1.bf16.msra.mxu0 0
    %629 = vmatprep.subr.bf16.mxu0 0
    %630 = vmatpush1.bf16.msra.mxu0 0
    %631 = vmatprep.mubr.bf16.mxu0 0
    %632 = vmatmul.mubr.bf16.gmra.mrb[0].mxu0 %v598
    %v633 = vpop.f32.mrb[0].mxu0
    %v634 = vadd.f32 0.0, %v633
    %v635 = vpop.f32.mrb[0].mxu0
    %v636 = vadd.f32 0.0, %v635
    %v637 = vpop.f32.mrb[0].mxu0
    %v638 = vpop.f32.mrb[0].mxu0
    %639 = vdwg.mxu0
    %640 = vmatprep.subr.bf16.mxu0 0
    %641 = vmatpush1.bf16.msra.mxu0 %v171
    %642 = vmatprep.subr.bf16.mxu0 0
    %643 = vmatpush1.bf16.msra.mxu0 %v174
    %644 = vmatprep.subr.bf16.mxu0 0
    %645 = vmatpush1.bf16.msra.mxu0 %v177
    %646 = vmatprep.subr.bf16.mxu0 0
    %647 = vmatpush1.bf16.msra.mxu0 %v180
    %648 = vmatprep.subr.bf16.mxu0 0
    %649 = vmatpush1.bf16.msra.mxu0 %v183
    %650 = vmatprep.subr.bf16.mxu0 0
    %651 = vmatpush1.bf16.msra.mxu0 %v186
    %652 = vmatprep.subr.bf16.mxu0 0
    %653 = vmatpush1.bf16.msra.mxu0 %v189
    %654 = vmatprep.subr.bf16.mxu0 0
    %655 = vmatpush1.bf16.msra.mxu0 %v192
    %656 = vmatprep.subr.bf16.mxu0 0
    %657 = vmatpush1.bf16.msra.mxu0 0
    %658 = vmatprep.subr.bf16.mxu0 0
    %659 = vmatpush1.bf16.msra.mxu0 0
    %660 = vmatprep.subr.bf16.mxu0 0
    %661 = vmatpush1.bf16.msra.mxu0 0
    %662 = vmatprep.subr.bf16.mxu0 0
    %663 = vmatpush1.bf16.msra.mxu0 0
    %664 = vmatprep.subr.bf16.mxu0 0
    %665 = vmatpush1.bf16.msra.mxu0 0
    %666 = vmatprep.subr.bf16.mxu0 0
    %667 = vmatpush1.bf16.msra.mxu0 0
    %668 = vmatprep.subr.bf16.mxu0 0
    %669 = vmatpush1.bf16.msra.mxu0 0
    %670 = vmatprep.subr.bf16.mxu0 0
    %671 = vmatpush1.bf16.msra.mxu0 0
    %672 = vmatprep.mubr.bf16.mxu0 0
    %673 = vmatmul.mubr.bf16.gmra.mrb[0].mxu0 %v598
    %v674 = vpop.f32.mrb[0].mxu0
    %v675 = vadd.f32 0.0, %v674
    %v676 = vpop.f32.mrb[0].mxu0
    %v677 = vpop.f32.mrb[0].mxu0
    %v678 = vpop.f32.mrb[0].mxu0
    %679 = vdwg.mxu0
    %s680 = scalar_lea.vmem [#allocation3], 3
    %v681 = vld [vmem:[%s680] ss:$8 sm:$0x7]
    %v684 = vcombine.low %v634, %v636
    %v686 = vunpack.c.l.s4 1966171168
    %v687 = vunpack.c.0.s8 %v686
    %v688 = vlaneseq
    %v689 = vshrl.u32 %v688, 7
    %v690 = vsub.s32 %v687, %v689
    %v691 = vrot.slane %v684, %v690
    %v693 = vunpack.c.l.s4 1966171168
    %v694 = vunpack.c.0.s8 %v693
    %v695 = vlaneseq
    %v696 = vshrl.u32 %v695, 7
    %v697 = vsub.s32 %v694, %v696
    %v698 = vrot.slane %v691, %v697
    %v700 = vadd.f32 %v681, %v698
    %v701 = vxor.u32 %v700, 2147483648
    %v702 = vmul.f32 %v701, 1.442695
    %v703 = vpow.pop %v702
    %v704 = vadd.f32 %v703, 1.0
    %v705 = vrcp.pop %v704
    %v706 = vmul.f32 1.0, %v705
    %v707 = vadd.f32 %v675, %v85
    %v708 = vmul.f32 %v706, %v707
    %v710 = vrot.slane %v681, 2
    %v712 = vadd.f32 %v710, %v708
    %v713 = vtanh.pop %v712
    %v714 = vsub.f32 %v597, %v713
    %v716 = vrot.slane %v706, 1
    %v718 = vmul.f32 %v716, %v714
    %v719 = vadd.f32 %v713, %v718
    %s720 = sadd.s32 %s87, 3
    %p721 = scmp.lt.s32.totalorder %s720, 8
    %s722 = scalar_select %p721, 1, 0
    %v723 = vstv %s722
    %vm724 = vcmp.eq.s32.totalorder %v723, 1
    %v725 = vsel %vm724, %v719, %v597
    %v726 = vpack.c.bf16 %v725, %v725
    %727 = vmatprep.subr.bf16.mxu0 %v170
    %728 = vmatpush1.bf16.msra.mxu0 %v169
    %729 = vmatprep.subr.bf16.mxu0 %v173
    %730 = vmatpush1.bf16.msra.mxu0 %v172
    %731 = vmatprep.subr.bf16.mxu0 %v176
    %732 = vmatpush1.bf16.msra.mxu0 %v175
    %733 = vmatprep.subr.bf16.mxu0 %v179
    %734 = vmatpush1.bf16.msra.mxu0 %v178
    %735 = vmatprep.subr.bf16.mxu0 %v182
    %736 = vmatpush1.bf16.msra.mxu0 %v181
    %737 = vmatprep.subr.bf16.mxu0 %v185
    %738 = vmatpush1.bf16.msra.mxu0 %v184
    %739 = vmatprep.subr.bf16.mxu0 %v188
    %740 = vmatpush1.bf16.msra.mxu0 %v187
    %741 = vmatprep.subr.bf16.mxu0 %v191
    %742 = vmatpush1.bf16.msra.mxu0 %v190
    %743 = vmatprep.subr.bf16.mxu0 0
    %744 = vmatpush1.bf16.msra.mxu0 0
    %745 = vmatprep.subr.bf16.mxu0 0
    %746 = vmatpush1.bf16.msra.mxu0 0
    %747 = vmatprep.subr.bf16.mxu0 0
    %748 = vmatpush1.bf16.msra.mxu0 0
    %749 = vmatprep.subr.bf16.mxu0 0
    %750 = vmatpush1.bf16.msra.mxu0 0
    %751 = vmatprep.subr.bf16.mxu0 0
    %752 = vmatpush1.bf16.msra.mxu0 0
    %753 = vmatprep.subr.bf16.mxu0 0
    %754 = vmatpush1.bf16.msra.mxu0 0
    %755 = vmatprep.subr.bf16.mxu0 0
    %756 = vmatpush1.bf16.msra.mxu0 0
    %757 = vmatprep.subr.bf16.mxu0 0
    %758 = vmatpush1.bf16.msra.mxu0 0
    %759 = vmatprep.mubr.bf16.mxu0 0
    %760 = vmatmul.mubr.bf16.gmra.mrb[0].mxu0 %v726
    %v761 = vpop.f32.mrb[0].mxu0
    %v762 = vadd.f32 0.0, %v761
    %v763 = vpop.f32.mrb[0].mxu0
    %v764 = vadd.f32 0.0, %v763
    %v765 = vpop.f32.mrb[0].mxu0
    %v766 = vpop.f32.mrb[0].mxu0
    %767 = vdwg.mxu0
    %768 = vmatprep.subr.bf16.mxu0 0
    %769 = vmatpush1.bf16.msra.mxu0 %v171
    %770 = vmatprep.subr.bf16.mxu0 0
    %771 = vmatpush1.bf16.msra.mxu0 %v174
    %772 = vmatprep.subr.bf16.mxu0 0
    %773 = vmatpush1.bf16.msra.mxu0 %v177
    %774 = vmatprep.subr.bf16.mxu0 0
    %775 = vmatpush1.bf16.msra.mxu0 %v180
    %776 = vmatprep.subr.bf16.mxu0 0
    %777 = vmatpush1.bf16.msra.mxu0 %v183
    %778 = vmatprep.subr.bf16.mxu0 0
    %779 = vmatpush1.bf16.msra.mxu0 %v186
    %780 = vmatprep.subr.bf16.mxu0 0
    %781 = vmatpush1.bf16.msra.mxu0 %v189
    %782 = vmatprep.subr.bf16.mxu0 0
    %783 = vmatpush1.bf16.msra.mxu0 %v192
    %784 = vmatprep.subr.bf16.mxu0 0
    %785 = vmatpush1.bf16.msra.mxu0 0
    %786 = vmatprep.subr.bf16.mxu0 0
    %787 = vmatpush1.bf16.msra.mxu0 0
    %788 = vmatprep.subr.bf16.mxu0 0
    %789 = vmatpush1.bf16.msra.mxu0 0
    %790 = vmatprep.subr.bf16.mxu0 0
    %791 = vmatpush1.bf16.msra.mxu0 0
    %792 = vmatprep.subr.bf16.mxu0 0
    %793 = vmatpush1.bf16.msra.mxu0 0
    %794 = vmatprep.subr.bf16.mxu0 0
    %795 = vmatpush1.bf16.msra.mxu0 0
    %796 = vmatprep.subr.bf16.mxu0 0
    %797 = vmatpush1.bf16.msra.mxu0 0
    %798 = vmatprep.subr.bf16.mxu0 0
    %799 = vmatpush1.bf16.msra.mxu0 0
    %800 = vmatprep.mubr.bf16.mxu0 0
    %801 = vmatmul.mubr.bf16.gmra.mrb[0].mxu0 %v726
    %v802 = vpop.f32.mrb[0].mxu0
    %v803 = vadd.f32 0.0, %v802
    %v804 = vpop.f32.mrb[0].mxu0
    %v805 = vpop.f32.mrb[0].mxu0
    %v806 = vpop.f32.mrb[0].mxu0
    %807 = vdwg.mxu0
    %s808 = scalar_lea.vmem [#allocation3], 4
    %v809 = vld [vmem:[%s808] ss:$8 sm:$0x7]
    %v812 = vcombine.low %v762, %v764
    %v814 = vunpack.c.l.s4 1966171168
    %v815 = vunpack.c.0.s8 %v814
    %v816 = vlaneseq
    %v817 = vshrl.u32 %v816, 7
    %v818 = vsub.s32 %v815, %v817
    %v819 = vrot.slane %v812, %v818
    %v821 = vunpack.c.l.s4 1966171168
    %v822 = vunpack.c.0.s8 %v821
    %v823 = vlaneseq
    %v824 = vshrl.u32 %v823, 7
    %v825 = vsub.s32 %v822, %v824
    %v826 = vrot.slane %v819, %v825
    %v828 = vadd.f32 %v809, %v826
    %v829 = vxor.u32 %v828, 2147483648
    %v830 = vmul.f32 %v829, 1.442695
    %v831 = vpow.pop %v830
    %v832 = vadd.f32 %v831, 1.0
    %v833 = vrcp.pop %v832
    %v834 = vmul.f32 1.0, %v833
    %v835 = vadd.f32 %v803, %v85
    %v836 = vmul.f32 %v834, %v835
    %v838 = vrot.slane %v809, 2
    %v840 = vadd.f32 %v838, %v836
    %v841 = vtanh.pop %v840
    %v842 = vsub.f32 %v725, %v841
    %v844 = vrot.slane %v834, 1
    %v846 = vmul.f32 %v844, %v842
    %v847 = vadd.f32 %v841, %v846
    %s848 = sadd.s32 %s87, 4
    %p849 = scmp.lt.s32.totalorder %s848, 8
    %s850 = scalar_select %p849, 1, 0
    %v851 = vstv %s850
    %vm852 = vcmp.eq.s32.totalorder %v851, 1
    %v853 = vsel %vm852, %v847, %v725
    %v854 = vpack.c.bf16 %v853, %v853
    %855 = vmatprep.subr.bf16.mxu0 %v170
    %856 = vmatpush1.bf16.msra.mxu0 %v169
    %857 = vmatprep.subr.bf16.mxu0 %v173
    %858 = vmatpush1.bf16.msra.mxu0 %v172
    %859 = vmatprep.subr.bf16.mxu0 %v176
    %860 = vmatpush1.bf16.msra.mxu0 %v175
    %861 = vmatprep.subr.bf16.mxu0 %v179
    %862 = vmatpush1.bf16.msra.mxu0 %v178
    %863 = vmatprep.subr.bf16.mxu0 %v182
    %864 = vmatpush1.bf16.msra.mxu0 %v181
    %865 = vmatprep.subr.bf16.mxu0 %v185
    %866 = vmatpush1.bf16.msra.mxu0 %v184
    %867 = vmatprep.subr.bf16.mxu0 %v188
    %868 = vmatpush1.bf16.msra.mxu0 %v187
    %869 = vmatprep.subr.bf16.mxu0 %v191
    %870 = vmatpush1.bf16.msra.mxu0 %v190
    %871 = vmatprep.subr.bf16.mxu0 0
    %872 = vmatpush1.bf16.msra.mxu0 0
    %873 = vmatprep.subr.bf16.mxu0 0
    %874 = vmatpush1.bf16.msra.mxu0 0
    %875 = vmatprep.subr.bf16.mxu0 0
    %876 = vmatpush1.bf16.msra.mxu0 0
    %877 = vmatprep.subr.bf16.mxu0 0
    %878 = vmatpush1.bf16.msra.mxu0 0
    %879 = vmatprep.subr.bf16.mxu0 0
    %880 = vmatpush1.bf16.msra.mxu0 0
    %881 = vmatprep.subr.bf16.mxu0 0
    %882 = vmatpush1.bf16.msra.mxu0 0
    %883 = vmatprep.subr.bf16.mxu0 0
    %884 = vmatpush1.bf16.msra.mxu0 0
    %885 = vmatprep.subr.bf16.mxu0 0
    %886 = vmatpush1.bf16.msra.mxu0 0
    %887 = vmatprep.mubr.bf16.mxu0 0
    %888 = vmatmul.mubr.bf16.gmra.mrb[0].mxu0 %v854
    %v889 = vpop.f32.mrb[0].mxu0
    %v890 = vadd.f32 0.0, %v889
    %v891 = vpop.f32.mrb[0].mxu0
    %v892 = vadd.f32 0.0, %v891
    %v893 = vpop.f32.mrb[0].mxu0
    %v894 = vpop.f32.mrb[0].mxu0
    %895 = vdwg.mxu0
    %896 = vmatprep.subr.bf16.mxu0 0
    %897 = vmatpush1.bf16.msra.mxu0 %v171
    %898 = vmatprep.subr.bf16.mxu0 0
    %899 = vmatpush1.bf16.msra.mxu0 %v174
    %900 = vmatprep.subr.bf16.mxu0 0
    %901 = vmatpush1.bf16.msra.mxu0 %v177
    %902 = vmatprep.subr.bf16.mxu0 0
    %903 = vmatpush1.bf16.msra.mxu0 %v180
    %904 = vmatprep.subr.bf16.mxu0 0
    %905 = vmatpush1.bf16.msra.mxu0 %v183
    %906 = vmatprep.subr.bf16.mxu0 0
    %907 = vmatpush1.bf16.msra.mxu0 %v186
    %908 = vmatprep.subr.bf16.mxu0 0
    %909 = vmatpush1.bf16.msra.mxu0 %v189
    %910 = vmatprep.subr.bf16.mxu0 0
    %911 = vmatpush1.bf16.msra.mxu0 %v192
    %912 = vmatprep.subr.bf16.mxu0 0
    %913 = vmatpush1.bf16.msra.mxu0 0
    %914 = vmatprep.subr.bf16.mxu0 0
    %915 = vmatpush1.bf16.msra.mxu0 0
    %916 = vmatprep.subr.bf16.mxu0 0
    %917 = vmatpush1.bf16.msra.mxu0 0
    %918 = vmatprep.subr.bf16.mxu0 0
    %919 = vmatpush1.bf16.msra.mxu0 0
    %920 = vmatprep.subr.bf16.mxu0 0
    %921 = vmatpush1.bf16.msra.mxu0 0
    %922 = vmatprep.subr.bf16.mxu0 0
    %923 = vmatpush1.bf16.msra.mxu0 0
    %924 = vmatprep.subr.bf16.mxu0 0
    %925 = vmatpush1.bf16.msra.mxu0 0
    %926 = vmatprep.subr.bf16.mxu0 0
    %927 = vmatpush1.bf16.msra.mxu0 0
    %928 = vmatprep.mubr.bf16.mxu0 0
    %929 = vmatmul.mubr.bf16.gmra.mrb[0].mxu0 %v854
    %v930 = vpop.f32.mrb[0].mxu0
    %v931 = vadd.f32 0.0, %v930
    %v932 = vpop.f32.mrb[0].mxu0
    %v933 = vpop.f32.mrb[0].mxu0
    %v934 = vpop.f32.mrb[0].mxu0
    %935 = vdwg.mxu0
    %s936 = scalar_lea.vmem [#allocation3], 5
    %v937 = vld [vmem:[%s936] ss:$8 sm:$0x7]
    %v940 = vcombine.low %v890, %v892
    %v942 = vunpack.c.l.s4 1966171168
    %v943 = vunpack.c.0.s8 %v942
    %v944 = vlaneseq
    %v945 = vshrl.u32 %v944, 7
    %v946 = vsub.s32 %v943, %v945
    %v947 = vrot.slane %v940, %v946
    %v949 = vunpack.c.l.s4 1966171168
    %v950 = vunpack.c.0.s8 %v949
    %v951 = vlaneseq
    %v952 = vshrl.u32 %v951, 7
    %v953 = vsub.s32 %v950, %v952
    %v954 = vrot.slane %v947, %v953
    %v956 = vadd.f32 %v937, %v954
    %v957 = vxor.u32 %v956, 2147483648
    %v958 = vmul.f32 %v957, 1.442695
    %v959 = vpow.pop %v958
    %v960 = vadd.f32 %v959, 1.0
    %v961 = vrcp.pop %v960
    %v962 = vmul.f32 1.0, %v961
    %v963 = vadd.f32 %v931, %v85
    %v964 = vmul.f32 %v962, %v963
    %v966 = vrot.slane %v937, 2
    %v968 = vadd.f32 %v966, %v964
    %v969 = vtanh.pop %v968
    %v970 = vsub.f32 %v853, %v969
    %v972 = vrot.slane %v962, 1
    %v974 = vmul.f32 %v972, %v970
    %v975 = vadd.f32 %v969, %v974
    %s976 = sadd.s32 %s87, 5
    %p977 = scmp.lt.s32.totalorder %s976, 8
    %s978 = scalar_select %p977, 1, 0
    %v979 = vstv %s978
    %vm980 = vcmp.eq.s32.totalorder %v979, 1
    %v981 = vsel %vm980, %v975, %v853
    %v982 = vpack.c.bf16 %v981, %v981
    %983 = vmatprep.subr.bf16.mxu0 %v170
    %984 = vmatpush1.bf16.msra.mxu0 %v169
    %985 = vmatprep.subr.bf16.mxu0 %v173
    %986 = vmatpush1.bf16.msra.mxu0 %v172
    %987 = vmatprep.subr.bf16.mxu0 %v176
    %988 = vmatpush1.bf16.msra.mxu0 %v175
    %989 = vmatprep.subr.bf16.mxu0 %v179
    %990 = vmatpush1.bf16.msra.mxu0 %v178
    %991 = vmatprep.subr.bf16.mxu0 %v182
    %992 = vmatpush1.bf16.msra.mxu0 %v181
    %993 = vmatprep.subr.bf16.mxu0 %v185
    %994 = vmatpush1.bf16.msra.mxu0 %v184
    %995 = vmatprep.subr.bf16.mxu0 %v188
    %996 = vmatpush1.bf16.msra.mxu0 %v187
    %997 = vmatprep.subr.bf16.mxu0 %v191
    %998 = vmatpush1.bf16.msra.mxu0 %v190
    %999 = vmatprep.subr.bf16.mxu0 0
    %1000 = vmatpush1.bf16.msra.mxu0 0
    %1001 = vmatprep.subr.bf16.mxu0 0
    %1002 = vmatpush1.bf16.msra.mxu0 0
    %1003 = vmatprep.subr.bf16.mxu0 0
    %1004 = vmatpush1.bf16.msra.mxu0 0
    %1005 = vmatprep.subr.bf16.mxu0 0
    %1006 = vmatpush1.bf16.msra.mxu0 0
    %1007 = vmatprep.subr.bf16.mxu0 0
    %1008 = vmatpush1.bf16.msra.mxu0 0
    %1009 = vmatprep.subr.bf16.mxu0 0
    %1010 = vmatpush1.bf16.msra.mxu0 0
    %1011 = vmatprep.subr.bf16.mxu0 0
    %1012 = vmatpush1.bf16.msra.mxu0 0
    %1013 = vmatprep.subr.bf16.mxu0 0
    %1014 = vmatpush1.bf16.msra.mxu0 0
    %1015 = vmatprep.mubr.bf16.mxu0 0
    %1016 = vmatmul.mubr.bf16.gmra.mrb[0].mxu0 %v982
    %v1017 = vpop.f32.mrb[0].mxu0
    %v1018 = vadd.f32 0.0, %v1017
    %v1019 = vpop.f32.mrb[0].mxu0
    %v1020 = vadd.f32 0.0, %v1019
    %v1021 = vpop.f32.mrb[0].mxu0
    %v1022 = vpop.f32.mrb[0].mxu0
    %1023 = vdwg.mxu0
    %1024 = vmatprep.subr.bf16.mxu0 0
    %1025 = vmatpush1.bf16.msra.mxu0 %v171
    %1026 = vmatprep.subr.bf16.mxu0 0
    %1027 = vmatpush1.bf16.msra.mxu0 %v174
    %1028 = vmatprep.subr.bf16.mxu0 0
    %1029 = vmatpush1.bf16.msra.mxu0 %v177
    %1030 = vmatprep.subr.bf16.mxu0 0
    %1031 = vmatpush1.bf16.msra.mxu0 %v180
    %1032 = vmatprep.subr.bf16.mxu0 0
    %1033 = vmatpush1.bf16.msra.mxu0 %v183
    %1034 = vmatprep.subr.bf16.mxu0 0
    %1035 = vmatpush1.bf16.msra.mxu0 %v186
    %1036 = vmatprep.subr.bf16.mxu0 0
    %1037 = vmatpush1.bf16.msra.mxu0 %v189
    %1038 = vmatprep.subr.bf16.mxu0 0
    %1039 = vmatpush1.bf16.msra.mxu0 %v192
    %1040 = vmatprep.subr.bf16.mxu0 0
    %1041 = vmatpush1.bf16.msra.mxu0 0
    %1042 = vmatprep.subr.bf16.mxu0 0
    %1043 = vmatpush1.bf16.msra.mxu0 0
    %1044 = vmatprep.subr.bf16.mxu0 0
    %1045 = vmatpush1.bf16.msra.mxu0 0
    %1046 = vmatprep.subr.bf16.mxu0 0
    %1047 = vmatpush1.bf16.msra.mxu0 0
    %1048 = vmatprep.subr.bf16.mxu0 0
    %1049 = vmatpush1.bf16.msra.mxu0 0
    %1050 = vmatprep.subr.bf16.mxu0 0
    %1051 = vmatpush1.bf16.msra.mxu0 0
    %1052 = vmatprep.subr.bf16.mxu0 0
    %1053 = vmatpush1.bf16.msra.mxu0 0
    %1054 = vmatprep.subr.bf16.mxu0 0
    %1055 = vmatpush1.bf16.msra.mxu0 0
    %1056 = vmatprep.mubr.bf16.mxu0 0
    %1057 = vmatmul.mubr.bf16.gmra.mrb[0].mxu0 %v982
    %v1058 = vpop.f32.mrb[0].mxu0
    %v1059 = vadd.f32 0.0, %v1058
    %v1060 = vpop.f32.mrb[0].mxu0
    %v1061 = vpop.f32.mrb[0].mxu0
    %v1062 = vpop.f32.mrb[0].mxu0
    %1063 = vdwg.mxu0
    %s1064 = scalar_lea.vmem [#allocation3], 6
    %v1065 = vld [vmem:[%s1064] ss:$8 sm:$0x7]
    %v1068 = vcombine.low %v1018, %v1020
    %v1070 = vunpack.c.l.s4 1966171168
    %v1071 = vunpack.c.0.s8 %v1070
    %v1072 = vlaneseq
    %v1073 = vshrl.u32 %v1072, 7
    %v1074 = vsub.s32 %v1071, %v1073
    %v1075 = vrot.slane %v1068, %v1074
    %v1077 = vunpack.c.l.s4 1966171168
    %v1078 = vunpack.c.0.s8 %v1077
    %v1079 = vlaneseq
    %v1080 = vshrl.u32 %v1079, 7
    %v1081 = vsub.s32 %v1078, %v1080
    %v1082 = vrot.slane %v1075, %v1081
    %v1084 = vadd.f32 %v1065, %v1082
    %v1085 = vxor.u32 %v1084, 2147483648
    %v1086 = vmul.f32 %v1085, 1.442695
    %v1087 = vpow.pop %v1086
    %v1088 = vadd.f32 %v1087, 1.0
    %v1089 = vrcp.pop %v1088
    %v1090 = vmul.f32 1.0, %v1089
    %v1091 = vadd.f32 %v1059, %v85
    %v1092 = vmul.f32 %v1090, %v1091
    %v1094 = vrot.slane %v1065, 2
    %v1096 = vadd.f32 %v1094, %v1092
    %v1097 = vtanh.pop %v1096
    %v1098 = vsub.f32 %v981, %v1097
    %v1100 = vrot.slane %v1090, 1
    %v1102 = vmul.f32 %v1100, %v1098
    %v1103 = vadd.f32 %v1097, %v1102
    %s1104 = sadd.s32 %s87, 6
    %p1105 = scmp.lt.s32.totalorder %s1104, 8
    %s1106 = scalar_select %p1105, 1, 0
    %v1107 = vstv %s1106
    %vm1108 = vcmp.eq.s32.totalorder %v1107, 1
    %v1109 = vsel %vm1108, %v1103, %v981
    %v1110 = vpack.c.bf16 %v1109, %v1109
    %1111 = vmatprep.subr.bf16.mxu0 %v170
    %1112 = vmatpush1.bf16.msra.mxu0 %v169
    %1113 = vmatprep.subr.bf16.mxu0 %v173
    %1114 = vmatpush1.bf16.msra.mxu0 %v172
    %1115 = vmatprep.subr.bf16.mxu0 %v176
    %1116 = vmatpush1.bf16.msra.mxu0 %v175
    %1117 = vmatprep.subr.bf16.mxu0 %v179
    %1118 = vmatpush1.bf16.msra.mxu0 %v178
    %1119 = vmatprep.subr.bf16.mxu0 %v182
    %1120 = vmatpush1.bf16.msra.mxu0 %v181
    %1121 = vmatprep.subr.bf16.mxu0 %v185
    %1122 = vmatpush1.bf16.msra.mxu0 %v184
    %1123 = vmatprep.subr.bf16.mxu0 %v188
    %1124 = vmatpush1.bf16.msra.mxu0 %v187
    %1125 = vmatprep.subr.bf16.mxu0 %v191
    %1126 = vmatpush1.bf16.msra.mxu0 %v190
    %1127 = vmatprep.subr.bf16.mxu0 0
    %1128 = vmatpush1.bf16.msra.mxu0 0
    %1129 = vmatprep.subr.bf16.mxu0 0
    %1130 = vmatpush1.bf16.msra.mxu0 0
    %1131 = vmatprep.subr.bf16.mxu0 0
    %1132 = vmatpush1.bf16.msra.mxu0 0
    %1133 = vmatprep.subr.bf16.mxu0 0
    %1134 = vmatpush1.bf16.msra.mxu0 0
    %1135 = vmatprep.subr.bf16.mxu0 0
    %1136 = vmatpush1.bf16.msra.mxu0 0
    %1137 = vmatprep.subr.bf16.mxu0 0
    %1138 = vmatpush1.bf16.msra.mxu0 0
    %1139 = vmatprep.subr.bf16.mxu0 0
    %1140 = vmatpush1.bf16.msra.mxu0 0
    %1141 = vmatprep.subr.bf16.mxu0 0
    %1142 = vmatpush1.bf16.msra.mxu0 0
    %1143 = vmatprep.mubr.bf16.mxu0 0
    %1144 = vmatmul.mubr.bf16.gmra.mrb[0].mxu0 %v1110
    %v1145 = vpop.f32.mrb[0].mxu0
    %v1146 = vadd.f32 0.0, %v1145
    %v1147 = vpop.f32.mrb[0].mxu0
    %v1148 = vadd.f32 0.0, %v1147
    %v1149 = vpop.f32.mrb[0].mxu0
    %v1150 = vpop.f32.mrb[0].mxu0
    %1151 = vdwg.mxu0
    %1152 = vmatprep.subr.bf16.mxu0 0
    %1153 = vmatpush1.bf16.msra.mxu0 %v171
    %1154 = vmatprep.subr.bf16.mxu0 0
    %1155 = vmatpush1.bf16.msra.mxu0 %v174
    %1156 = vmatprep.subr.bf16.mxu0 0
    %1157 = vmatpush1.bf16.msra.mxu0 %v177
    %1158 = vmatprep.subr.bf16.mxu0 0
    %1159 = vmatpush1.bf16.msra.mxu0 %v180
    %1160 = vmatprep.subr.bf16.mxu0 0
    %1161 = vmatpush1.bf16.msra.mxu0 %v183
    %1162 = vmatprep.subr.bf16.mxu0 0
    %1163 = vmatpush1.bf16.msra.mxu0 %v186
    %1164 = vmatprep.subr.bf16.mxu0 0
    %1165 = vmatpush1.bf16.msra.mxu0 %v189
    %1166 = vmatprep.subr.bf16.mxu0 0
    %1167 = vmatpush1.bf16.msra.mxu0 %v192
    %1168 = vmatprep.subr.bf16.mxu0 0
    %1169 = vmatpush1.bf16.msra.mxu0 0
    %1170 = vmatprep.subr.bf16.mxu0 0
    %1171 = vmatpush1.bf16.msra.mxu0 0
    %1172 = vmatprep.subr.bf16.mxu0 0
    %1173 = vmatpush1.bf16.msra.mxu0 0
    %1174 = vmatprep.subr.bf16.mxu0 0
    %1175 = vmatpush1.bf16.msra.mxu0 0
    %1176 = vmatprep.subr.bf16.mxu0 0
    %1177 = vmatpush1.bf16.msra.mxu0 0
    %1178 = vmatprep.subr.bf16.mxu0 0
    %1179 = vmatpush1.bf16.msra.mxu0 0
    %1180 = vmatprep.subr.bf16.mxu0 0
    %1181 = vmatpush1.bf16.msra.mxu0 0
    %1182 = vmatprep.subr.bf16.mxu0 0
    %1183 = vmatpush1.bf16.msra.mxu0 0
    %1184 = vmatprep.mubr.bf16.mxu0 0
    %1185 = vmatmul.mubr.bf16.gmra.mrb[0].mxu0 %v1110
    %v1186 = vpop.f32.mrb[0].mxu0
    %v1187 = vadd.f32 0.0, %v1186
    %v1188 = vpop.f32.mrb[0].mxu0
    %v1189 = vpop.f32.mrb[0].mxu0
    %v1190 = vpop.f32.mrb[0].mxu0
    %1191 = vdwg.mxu0
    %s1192 = scalar_lea.vmem [#allocation3], 7
    %v1193 = vld [vmem:[%s1192] ss:$8 sm:$0x7]
    %v1196 = vcombine.low %v1146, %v1148
    %v1198 = vunpack.c.l.s4 1966171168
    %v1199 = vunpack.c.0.s8 %v1198
    %v1200 = vlaneseq
    %v1201 = vshrl.u32 %v1200, 7
    %v1202 = vsub.s32 %v1199, %v1201
    %v1203 = vrot.slane %v1196, %v1202
    %v1205 = vunpack.c.l.s4 1966171168
    %v1206 = vunpack.c.0.s8 %v1205
    %v1207 = vlaneseq
    %v1208 = vshrl.u32 %v1207, 7
    %v1209 = vsub.s32 %v1206, %v1208
    %v1210 = vrot.slane %v1203, %v1209
    %v1212 = vadd.f32 %v1193, %v1210
    %v1213 = vxor.u32 %v1212, 2147483648
    %v1214 = vmul.f32 %v1213, 1.442695
    %v1215 = vpow.pop %v1214
    %v1216 = vadd.f32 %v1215, 1.0
    %v1217 = vrcp.pop %v1216
    %v1218 = vmul.f32 1.0, %v1217
    %v1219 = vadd.f32 %v1187, %v85
    %v1220 = vmul.f32 %v1218, %v1219
    %v1222 = vrot.slane %v1193, 2
    %v1224 = vadd.f32 %v1222, %v1220
    %v1225 = vtanh.pop %v1224
    %v1226 = vsub.f32 %v1109, %v1225
    %v1228 = vrot.slane %v1218, 1
    %v1230 = vmul.f32 %v1228, %v1226
    %v1231 = vadd.f32 %v1225, %v1230
    %s1232 = sadd.s32 %s87, 7
    %p1233 = scmp.lt.s32.totalorder %s1232, 8
    %s1234 = scalar_select %p1233, 1, 0
    %v1235 = vstv %s1234
    %vm1236 = vcmp.eq.s32.totalorder %v1235, 1
    %v1237 = vsel %vm1236, %v1231, %v1109
    %v1238 = vpack.c.bf16 %v1237, %v1237
    %1239 = vmatprep.subr.bf16.mxu0 %v170
    %1240 = vmatpush1.bf16.msra.mxu0 %v169
    %1241 = vmatprep.subr.bf16.mxu0 %v173
    %1242 = vmatpush1.bf16.msra.mxu0 %v172
    %1243 = vmatprep.subr.bf16.mxu0 %v176
    %1244 = vmatpush1.bf16.msra.mxu0 %v175
    %1245 = vmatprep.subr.bf16.mxu0 %v179
    %1246 = vmatpush1.bf16.msra.mxu0 %v178
    %1247 = vmatprep.subr.bf16.mxu0 %v182
    %1248 = vmatpush1.bf16.msra.mxu0 %v181
    %1249 = vmatprep.subr.bf16.mxu0 %v185
    %1250 = vmatpush1.bf16.msra.mxu0 %v184
    %1251 = vmatprep.subr.bf16.mxu0 %v188
    %1252 = vmatpush1.bf16.msra.mxu0 %v187
    %1253 = vmatprep.subr.bf16.mxu0 %v191
    %1254 = vmatpush1.bf16.msra.mxu0 %v190
    %1255 = vmatprep.subr.bf16.mxu0 0
    %1256 = vmatpush1.bf16.msra.mxu0 0
    %1257 = vmatprep.subr.bf16.mxu0 0
    %1258 = vmatpush1.bf16.msra.mxu0 0
    %1259 = vmatprep.subr.bf16.mxu0 0
    %1260 = vmatpush1.bf16.msra.mxu0 0
    %1261 = vmatprep.subr.bf16.mxu0 0
    %1262 = vmatpush1.bf16.msra.mxu0 0
    %1263 = vmatprep.subr.bf16.mxu0 0
    %1264 = vmatpush1.bf16.msra.mxu0 0
    %1265 = vmatprep.subr.bf16.mxu0 0
    %1266 = vmatpush1.bf16.msra.mxu0 0
    %1267 = vmatprep.subr.bf16.mxu0 0
    %1268 = vmatpush1.bf16.msra.mxu0 0
    %1269 = vmatprep.subr.bf16.mxu0 0
    %1270 = vmatpush1.bf16.msra.mxu0 0
    %1271 = vmatprep.mubr.bf16.mxu0 0
    %1272 = vmatmul.mubr.bf16.gmra.mrb[0].mxu0 %v1238
    %v1273 = vpop.f32.mrb[0].mxu0
    %v1274 = vadd.f32 0.0, %v1273
    %v1275 = vpop.f32.mrb[0].mxu0
    %v1276 = vadd.f32 0.0, %v1275
    %v1277 = vpop.f32.mrb[0].mxu0
    %v1278 = vpop.f32.mrb[0].mxu0
    %1279 = vdwg.mxu0
    %1280 = vmatprep.subr.bf16.mxu0 0
    %1281 = vmatpush1.bf16.msra.mxu0 %v171
    %1282 = vmatprep.subr.bf16.mxu0 0
    %1283 = vmatpush1.bf16.msra.mxu0 %v174
    %1284 = vmatprep.subr.bf16.mxu0 0
    %1285 = vmatpush1.bf16.msra.mxu0 %v177
    %1286 = vmatprep.subr.bf16.mxu0 0
    %1287 = vmatpush1.bf16.msra.mxu0 %v180
    %1288 = vmatprep.subr.bf16.mxu0 0
    %1289 = vmatpush1.bf16.msra.mxu0 %v183
    %1290 = vmatprep.subr.bf16.mxu0 0
    %1291 = vmatpush1.bf16.msra.mxu0 %v186
    %1292 = vmatprep.subr.bf16.mxu0 0
    %1293 = vmatpush1.bf16.msra.mxu0 %v189
    %1294 = vmatprep.subr.bf16.mxu0 0
    %1295 = vmatpush1.bf16.msra.mxu0 %v192
    %1296 = vmatprep.subr.bf16.mxu0 0
    %1297 = vmatpush1.bf16.msra.mxu0 0
    %1298 = vmatprep.subr.bf16.mxu0 0
    %1299 = vmatpush1.bf16.msra.mxu0 0
    %1300 = vmatprep.subr.bf16.mxu0 0
    %1301 = vmatpush1.bf16.msra.mxu0 0
    %1302 = vmatprep.subr.bf16.mxu0 0
    %1303 = vmatpush1.bf16.msra.mxu0 0
    %1304 = vmatprep.subr.bf16.mxu0 0
    %1305 = vmatpush1.bf16.msra.mxu0 0
    %1306 = vmatprep.subr.bf16.mxu0 0
    %1307 = vmatpush1.bf16.msra.mxu0 0
    %1308 = vmatprep.subr.bf16.mxu0 0
    %1309 = vmatpush1.bf16.msra.mxu0 0
    %1310 = vmatprep.subr.bf16.mxu0 0
    %1311 = vmatpush1.bf16.msra.mxu0 0
    %1312 = vmatprep.mubr.bf16.mxu0 0
    %1313 = vmatmul.mubr.bf16.gmra.mrb[0].mxu0 %v1238
    %v1314 = vpop.f32.mrb[0].mxu0
    %v1315 = vadd.f32 0.0, %v1314
    %v1316 = vpop.f32.mrb[0].mxu0
    %v1317 = vpop.f32.mrb[0].mxu0
    %v1318 = vpop.f32.mrb[0].mxu0
    %1319 = vdwg.mxu0
    %s1320 = scalar_lea.vmem [#allocation3], 24
    %v1321 = vld [vmem:[%s1320] ss:$8 sm:$0x7]
    %v1324 = vcombine.low %v1274, %v1276
    %v1326 = vunpack.c.l.s4 1966171168
    %v1327 = vunpack.c.0.s8 %v1326
    %v1328 = vlaneseq
    %v1329 = vshrl.u32 %v1328, 7
    %v1330 = vsub.s32 %v1327, %v1329
    %v1331 = vrot.slane %v1324, %v1330
    %v1333 = vunpack.c.l.s4 1966171168
    %v1334 = vunpack.c.0.s8 %v1333
    %v1335 = vlaneseq
    %v1336 = vshrl.u32 %v1335, 7
    %v1337 = vsub.s32 %v1334, %v1336
    %v1338 = vrot.slane %v1331, %v1337
    %v1340 = vadd.f32 %v1321, %v1338
    %v1341 = vxor.u32 %v1340, 2147483648
    %v1342 = vmul.f32 %v1341, 1.442695
    %v1343 = vpow.pop %v1342
    %v1344 = vadd.f32 %v1343, 1.0
    %v1345 = vrcp.pop %v1344
    %v1346 = vmul.f32 1.0, %v1345
    %v1347 = vadd.f32 %v1315, %v85
    %v1348 = vmul.f32 %v1346, %v1347
    %v1350 = vrot.slane %v1321, 2
    %v1352 = vadd.f32 %v1350, %v1348
    %v1353 = vtanh.pop %v1352
    %v1354 = vsub.f32 %v1237, %v1353
    %v1356 = vrot.slane %v1346, 1
    %v1358 = vmul.f32 %v1356, %v1354
    %v1359 = vadd.f32 %v1353, %v1358
    %s1360 = sadd.s32 %s87, 8
    %p1361 = scmp.lt.s32.totalorder %s1360, 8
    %s1362 = scalar_select %p1361, 1, 0
    %v1363 = vstv %s1362
    %vm1364 = vcmp.eq.s32.totalorder %v1363, 1
    %v1365 = vsel %vm1364, %v1359, %v1237
    %v1366 = vpack.c.bf16 %v1365, %v1365
    %1367 = vmatprep.subr.bf16.mxu0 %v170
    %1368 = vmatpush1.bf16.msra.mxu0 %v169
    %1369 = vmatprep.subr.bf16.mxu0 %v173
    %1370 = vmatpush1.bf16.msra.mxu0 %v172
    %1371 = vmatprep.subr.bf16.mxu0 %v176
    %1372 = vmatpush1.bf16.msra.mxu0 %v175
    %1373 = vmatprep.subr.bf16.mxu0 %v179
    %1374 = vmatpush1.bf16.msra.mxu0 %v178
    %1375 = vmatprep.subr.bf16.mxu0 %v182
    %1376 = vmatpush1.bf16.msra.mxu0 %v181
    %1377 = vmatprep.subr.bf16.mxu0 %v185
    %1378 = vmatpush1.bf16.msra.mxu0 %v184
    %1379 = vmatprep.subr.bf16.mxu0 %v188
    %1380 = vmatpush1.bf16.msra.mxu0 %v187
    %1381 = vmatprep.subr.bf16.mxu0 %v191
    %1382 = vmatpush1.bf16.msra.mxu0 %v190
    %1383 = vmatprep.subr.bf16.mxu0 0
    %1384 = vmatpush1.bf16.msra.mxu0 0
    %1385 = vmatprep.subr.bf16.mxu0 0
    %1386 = vmatpush1.bf16.msra.mxu0 0
    %1387 = vmatprep.subr.bf16.mxu0 0
    %1388 = vmatpush1.bf16.msra.mxu0 0
    %1389 = vmatprep.subr.bf16.mxu0 0
    %1390 = vmatpush1.bf16.msra.mxu0 0
    %1391 = vmatprep.subr.bf16.mxu0 0
    %1392 = vmatpush1.bf16.msra.mxu0 0
    %1393 = vmatprep.subr.bf16.mxu0 0
    %1394 = vmatpush1.bf16.msra.mxu0 0
    %1395 = vmatprep.subr.bf16.mxu0 0
    %1396 = vmatpush1.bf16.msra.mxu0 0
    %1397 = vmatprep.subr.bf16.mxu0 0
    %1398 = vmatpush1.bf16.msra.mxu0 0
    %1399 = vmatprep.mubr.bf16.mxu0 0
    %1400 = vmatmul.mubr.bf16.gmra.mrb[0].mxu0 %v1366
    %v1401 = vpop.f32.mrb[0].mxu0
    %v1402 = vadd.f32 0.0, %v1401
    %v1403 = vpop.f32.mrb[0].mxu0
    %v1404 = vadd.f32 0.0, %v1403
    %v1405 = vpop.f32.mrb[0].mxu0
    %v1406 = vpop.f32.mrb[0].mxu0
    %1407 = vdwg.mxu0
    %1408 = vmatprep.subr.bf16.mxu0 0
    %1409 = vmatpush1.bf16.msra.mxu0 %v171
    %1410 = vmatprep.subr.bf16.mxu0 0
    %1411 = vmatpush1.bf16.msra.mxu0 %v174
    %1412 = vmatprep.subr.bf16.mxu0 0
    %1413 = vmatpush1.bf16.msra.mxu0 %v177
    %1414 = vmatprep.subr.bf16.mxu0 0
    %1415 = vmatpush1.bf16.msra.mxu0 %v180
    %1416 = vmatprep.subr.bf16.mxu0 0
    %1417 = vmatpush1.bf16.msra.mxu0 %v183
    %1418 = vmatprep.subr.bf16.mxu0 0
    %1419 = vmatpush1.bf16.msra.mxu0 %v186
    %1420 = vmatprep.subr.bf16.mxu0 0
    %1421 = vmatpush1.bf16.msra.mxu0 %v189
    %1422 = vmatprep.subr.bf16.mxu0 0
    %1423 = vmatpush1.bf16.msra.mxu0 %v192
    %1424 = vmatprep.subr.bf16.mxu0 0
    %1425 = vmatpush1.bf16.msra.mxu0 0
    %1426 = vmatprep.subr.bf16.mxu0 0
    %1427 = vmatpush1.bf16.msra.mxu0 0
    %1428 = vmatprep.subr.bf16.mxu0 0
    %1429 = vmatpush1.bf16.msra.mxu0 0
    %1430 = vmatprep.subr.bf16.mxu0 0
    %1431 = vmatpush1.bf16.msra.mxu0 0
    %1432 = vmatprep.subr.bf16.mxu0 0
    %1433 = vmatpush1.bf16.msra.mxu0 0
    %1434 = vmatprep.subr.bf16.mxu0 0
    %1435 = vmatpush1.bf16.msra.mxu0 0
    %1436 = vmatprep.subr.bf16.mxu0 0
    %1437 = vmatpush1.bf16.msra.mxu0 0
    %1438 = vmatprep.subr.bf16.mxu0 0
    %1439 = vmatpush1.bf16.msra.mxu0 0
    %1440 = vmatprep.mubr.bf16.mxu0 0
    %1441 = vmatmul.mubr.bf16.gmra.mrb[0].mxu0 %v1366
    %v1442 = vpop.f32.mrb[0].mxu0
    %v1443 = vadd.f32 0.0, %v1442
    %v1444 = vpop.f32.mrb[0].mxu0
    %v1445 = vpop.f32.mrb[0].mxu0
    %v1446 = vpop.f32.mrb[0].mxu0
    %1447 = vdwg.mxu0
    %s1448 = scalar_lea.vmem [#allocation3], 25
    %v1449 = vld [vmem:[%s1448] ss:$8 sm:$0x7]
    %v1452 = vcombine.low %v1402, %v1404
    %v1454 = vunpack.c.l.s4 1966171168
    %v1455 = vunpack.c.0.s8 %v1454
    %v1456 = vlaneseq
    %v1457 = vshrl.u32 %v1456, 7
    %v1458 = vsub.s32 %v1455, %v1457
    %v1459 = vrot.slane %v1452, %v1458
    %v1461 = vunpack.c.l.s4 1966171168
    %v1462 = vunpack.c.0.s8 %v1461
    %v1463 = vlaneseq
    %v1464 = vshrl.u32 %v1463, 7
    %v1465 = vsub.s32 %v1462, %v1464
    %v1466 = vrot.slane %v1459, %v1465
    %v1468 = vadd.f32 %v1449, %v1466
    %v1469 = vxor.u32 %v1468, 2147483648
    %v1470 = vmul.f32 %v1469, 1.442695
    %v1471 = vpow.pop %v1470
    %v1472 = vadd.f32 %v1471, 1.0
    %v1473 = vrcp.pop %v1472
    %v1474 = vmul.f32 1.0, %v1473
    %v1475 = vadd.f32 %v1443, %v85
    %v1476 = vmul.f32 %v1474, %v1475
    %v1478 = vrot.slane %v1449, 2
    %v1480 = vadd.f32 %v1478, %v1476
    %v1481 = vtanh.pop %v1480
    %v1482 = vsub.f32 %v1365, %v1481
    %v1484 = vrot.slane %v1474, 1
    %v1486 = vmul.f32 %v1484, %v1482
    %v1487 = vadd.f32 %v1481, %v1486
    %s1488 = sadd.s32 %s87, 9
    %p1489 = scmp.lt.s32.totalorder %s1488, 8
    %s1490 = scalar_select %p1489, 1, 0
    %v1491 = vstv %s1490
    %vm1492 = vcmp.eq.s32.totalorder %v1491, 1
    %v1493 = vsel %vm1492, %v1487, %v1365
    %v1494 = vpack.c.bf16 %v1493, %v1493
    %1495 = vmatprep.subr.bf16.mxu0 %v170
    %1496 = vmatpush1.bf16.msra.mxu0 %v169
    %1497 = vmatprep.subr.bf16.mxu0 %v173
    %1498 = vmatpush1.bf16.msra.mxu0 %v172
    %1499 = vmatprep.subr.bf16.mxu0 %v176
    %1500 = vmatpush1.bf16.msra.mxu0 %v175
    %1501 = vmatprep.subr.bf16.mxu0 %v179
    %1502 = vmatpush1.bf16.msra.mxu0 %v178
    %1503 = vmatprep.subr.bf16.mxu0 %v182
    %1504 = vmatpush1.bf16.msra.mxu0 %v181
    %1505 = vmatprep.subr.bf16.mxu0 %v185
    %1506 = vmatpush1.bf16.msra.mxu0 %v184
    %1507 = vmatprep.subr.bf16.mxu0 %v188
    %1508 = vmatpush1.bf16.msra.mxu0 %v187
    %1509 = vmatprep.subr.bf16.mxu0 %v191
    %1510 = vmatpush1.bf16.msra.mxu0 %v190
    %1511 = vmatprep.subr.bf16.mxu0 0
    %1512 = vmatpush1.bf16.msra.mxu0 0
    %1513 = vmatprep.subr.bf16.mxu0 0
    %1514 = vmatpush1.bf16.msra.mxu0 0
    %1515 = vmatprep.subr.bf16.mxu0 0
    %1516 = vmatpush1.bf16.msra.mxu0 0
    %1517 = vmatprep.subr.bf16.mxu0 0
    %1518 = vmatpush1.bf16.msra.mxu0 0
    %1519 = vmatprep.subr.bf16.mxu0 0
    %1520 = vmatpush1.bf16.msra.mxu0 0
    %1521 = vmatprep.subr.bf16.mxu0 0
    %1522 = vmatpush1.bf16.msra.mxu0 0
    %1523 = vmatprep.subr.bf16.mxu0 0
    %1524 = vmatpush1.bf16.msra.mxu0 0
    %1525 = vmatprep.subr.bf16.mxu0 0
    %1526 = vmatpush1.bf16.msra.mxu0 0
    %1527 = vmatprep.mubr.bf16.mxu0 0
    %1528 = vmatmul.mubr.bf16.gmra.mrb[0].mxu0 %v1494
    %v1529 = vpop.f32.mrb[0].mxu0
    %v1530 = vadd.f32 0.0, %v1529
    %v1531 = vpop.f32.mrb[0].mxu0
    %v1532 = vadd.f32 0.0, %v1531
    %v1533 = vpop.f32.mrb[0].mxu0
    %v1534 = vpop.f32.mrb[0].mxu0
    %1535 = vdwg.mxu0
    %1536 = vmatprep.subr.bf16.mxu0 0
    %1537 = vmatpush1.bf16.msra.mxu0 %v171
    %1538 = vmatprep.subr.bf16.mxu0 0
    %1539 = vmatpush1.bf16.msra.mxu0 %v174
    %1540 = vmatprep.subr.bf16.mxu0 0
    %1541 = vmatpush1.bf16.msra.mxu0 %v177
    %1542 = vmatprep.subr.bf16.mxu0 0
    %1543 = vmatpush1.bf16.msra.mxu0 %v180
    %1544 = vmatprep.subr.bf16.mxu0 0
    %1545 = vmatpush1.bf16.msra.mxu0 %v183
    %1546 = vmatprep.subr.bf16.mxu0 0
    %1547 = vmatpush1.bf16.msra.mxu0 %v186
    %1548 = vmatprep.subr.bf16.mxu0 0
    %1549 = vmatpush1.bf16.msra.mxu0 %v189
    %1550 = vmatprep.subr.bf16.mxu0 0
    %1551 = vmatpush1.bf16.msra.mxu0 %v192
    %1552 = vmatprep.subr.bf16.mxu0 0
    %1553 = vmatpush1.bf16.msra.mxu0 0
    %1554 = vmatprep.subr.bf16.mxu0 0
    %1555 = vmatpush1.bf16.msra.mxu0 0
    %1556 = vmatprep.subr.bf16.mxu0 0
    %1557 = vmatpush1.bf16.msra.mxu0 0
    %1558 = vmatprep.subr.bf16.mxu0 0
    %1559 = vmatpush1.bf16.msra.mxu0 0
    %1560 = vmatprep.subr.bf16.mxu0 0
    %1561 = vmatpush1.bf16.msra.mxu0 0
    %1562 = vmatprep.subr.bf16.mxu0 0
    %1563 = vmatpush1.bf16.msra.mxu0 0
    %1564 = vmatprep.subr.bf16.mxu0 0
    %1565 = vmatpush1.bf16.msra.mxu0 0
    %1566 = vmatprep.subr.bf16.mxu0 0
    %1567 = vmatpush1.bf16.msra.mxu0 0
    %1568 = vmatprep.mubr.bf16.mxu0 0
    %1569 = vmatmul.mubr.bf16.gmra.mrb[0].mxu0 %v1494
    %v1570 = vpop.f32.mrb[0].mxu0
    %v1571 = vadd.f32 0.0, %v1570
    %v1572 = vpop.f32.mrb[0].mxu0
    %v1573 = vpop.f32.mrb[0].mxu0
    %v1574 = vpop.f32.mrb[0].mxu0
    %1575 = vdwg.mxu0
    %s1576 = scalar_lea.vmem [#allocation3], 26
    %v1577 = vld [vmem:[%s1576] ss:$8 sm:$0x7]
    %v1580 = vcombine.low %v1530, %v1532
    %v1582 = vunpack.c.l.s4 1966171168
    %v1583 = vunpack.c.0.s8 %v1582
    %v1584 = vlaneseq
    %v1585 = vshrl.u32 %v1584, 7
    %v1586 = vsub.s32 %v1583, %v1585
    %v1587 = vrot.slane %v1580, %v1586
    %v1589 = vunpack.c.l.s4 1966171168
    %v1590 = vunpack.c.0.s8 %v1589
    %v1591 = vlaneseq
    %v1592 = vshrl.u32 %v1591, 7
    %v1593 = vsub.s32 %v1590, %v1592
    %v1594 = vrot.slane %v1587, %v1593
    %v1596 = vadd.f32 %v1577, %v1594
    %v1597 = vxor.u32 %v1596, 2147483648
    %v1598 = vmul.f32 %v1597, 1.442695
    %v1599 = vpow.pop %v1598
    %v1600 = vadd.f32 %v1599, 1.0
    %v1601 = vrcp.pop %v1600
    %v1602 = vmul.f32 1.0, %v1601
    %v1603 = vadd.f32 %v1571, %v85
    %v1604 = vmul.f32 %v1602, %v1603
    %v1606 = vrot.slane %v1577, 2
    %v1608 = vadd.f32 %v1606, %v1604
    %v1609 = vtanh.pop %v1608
    %v1610 = vsub.f32 %v1493, %v1609
    %v1612 = vrot.slane %v1602, 1
    %v1614 = vmul.f32 %v1612, %v1610
    %v1615 = vadd.f32 %v1609, %v1614
    %s1616 = sadd.s32 %s87, 10
    %p1617 = scmp.lt.s32.totalorder %s1616, 8
    %s1618 = scalar_select %p1617, 1, 0
    %v1619 = vstv %s1618
    %vm1620 = vcmp.eq.s32.totalorder %v1619, 1
    %v1621 = vsel %vm1620, %v1615, %v1493
    %v1622 = vpack.c.bf16 %v1621, %v1621
    %1623 = vmatprep.subr.bf16.mxu0 %v170
    %1624 = vmatpush1.bf16.msra.mxu0 %v169
    %1625 = vmatprep.subr.bf16.mxu0 %v173
    %1626 = vmatpush1.bf16.msra.mxu0 %v172
    %1627 = vmatprep.subr.bf16.mxu0 %v176
    %1628 = vmatpush1.bf16.msra.mxu0 %v175
    %1629 = vmatprep.subr.bf16.mxu0 %v179
    %1630 = vmatpush1.bf16.msra.mxu0 %v178
    %1631 = vmatprep.subr.bf16.mxu0 %v182
    %1632 = vmatpush1.bf16.msra.mxu0 %v181
    %1633 = vmatprep.subr.bf16.mxu0 %v185
    %1634 = vmatpush1.bf16.msra.mxu0 %v184
    %1635 = vmatprep.subr.bf16.mxu0 %v188
    %1636 = vmatpush1.bf16.msra.mxu0 %v187
    %1637 = vmatprep.subr.bf16.mxu0 %v191
    %1638 = vmatpush1.bf16.msra.mxu0 %v190
    %1639 = vmatprep.subr.bf16.mxu0 0
    %1640 = vmatpush1.bf16.msra.mxu0 0
    %1641 = vmatprep.subr.bf16.mxu0 0
    %1642 = vmatpush1.bf16.msra.mxu0 0
    %1643 = vmatprep.subr.bf16.mxu0 0
    %1644 = vmatpush1.bf16.msra.mxu0 0
    %1645 = vmatprep.subr.bf16.mxu0 0
    %1646 = vmatpush1.bf16.msra.mxu0 0
    %1647 = vmatprep.subr.bf16.mxu0 0
    %1648 = vmatpush1.bf16.msra.mxu0 0
    %1649 = vmatprep.subr.bf16.mxu0 0
    %1650 = vmatpush1.bf16.msra.mxu0 0
    %1651 = vmatprep.subr.bf16.mxu0 0
    %1652 = vmatpush1.bf16.msra.mxu0 0
    %1653 = vmatprep.subr.bf16.mxu0 0
    %1654 = vmatpush1.bf16.msra.mxu0 0
    %1655 = vmatprep.mubr.bf16.mxu0 0
    %1656 = vmatmul.mubr.bf16.gmra.mrb[0].mxu0 %v1622
    %v1657 = vpop.f32.mrb[0].mxu0
    %v1658 = vadd.f32 0.0, %v1657
    %v1659 = vpop.f32.mrb[0].mxu0
    %v1660 = vadd.f32 0.0, %v1659
    %v1661 = vpop.f32.mrb[0].mxu0
    %v1662 = vpop.f32.mrb[0].mxu0
    %1663 = vdwg.mxu0
    %1664 = vmatprep.subr.bf16.mxu0 0
    %1665 = vmatpush1.bf16.msra.mxu0 %v171
    %1666 = vmatprep.subr.bf16.mxu0 0
    %1667 = vmatpush1.bf16.msra.mxu0 %v174
    %1668 = vmatprep.subr.bf16.mxu0 0
    %1669 = vmatpush1.bf16.msra.mxu0 %v177
    %1670 = vmatprep.subr.bf16.mxu0 0
    %1671 = vmatpush1.bf16.msra.mxu0 %v180
    %1672 = vmatprep.subr.bf16.mxu0 0
    %1673 = vmatpush1.bf16.msra.mxu0 %v183
    %1674 = vmatprep.subr.bf16.mxu0 0
    %1675 = vmatpush1.bf16.msra.mxu0 %v186
    %1676 = vmatprep.subr.bf16.mxu0 0
    %1677 = vmatpush1.bf16.msra.mxu0 %v189
    %1678 = vmatprep.subr.bf16.mxu0 0
    %1679 = vmatpush1.bf16.msra.mxu0 %v192
    %1680 = vmatprep.subr.bf16.mxu0 0
    %1681 = vmatpush1.bf16.msra.mxu0 0
    %1682 = vmatprep.subr.bf16.mxu0 0
    %1683 = vmatpush1.bf16.msra.mxu0 0
    %1684 = vmatprep.subr.bf16.mxu0 0
    %1685 = vmatpush1.bf16.msra.mxu0 0
    %1686 = vmatprep.subr.bf16.mxu0 0
    %1687 = vmatpush1.bf16.msra.mxu0 0
    %1688 = vmatprep.subr.bf16.mxu0 0
    %1689 = vmatpush1.bf16.msra.mxu0 0
    %1690 = vmatprep.subr.bf16.mxu0 0
    %1691 = vmatpush1.bf16.msra.mxu0 0
    %1692 = vmatprep.subr.bf16.mxu0 0
    %1693 = vmatpush1.bf16.msra.mxu0 0
    %1694 = vmatprep.subr.bf16.mxu0 0
    %1695 = vmatpush1.bf16.msra.mxu0 0
    %1696 = vmatprep.mubr.bf16.mxu0 0
    %1697 = vmatmul.mubr.bf16.gmra.mrb[0].mxu0 %v1622
    %v1698 = vpop.f32.mrb[0].mxu0
    %v1699 = vadd.f32 0.0, %v1698
    %v1700 = vpop.f32.mrb[0].mxu0
    %v1701 = vpop.f32.mrb[0].mxu0
    %v1702 = vpop.f32.mrb[0].mxu0
    %1703 = vdwg.mxu0
    %s1704 = scalar_lea.vmem [#allocation3], 27
    %v1705 = vld [vmem:[%s1704] ss:$8 sm:$0x7]
    %v1708 = vcombine.low %v1658, %v1660
    %v1710 = vunpack.c.l.s4 1966171168
    %v1711 = vunpack.c.0.s8 %v1710
    %v1712 = vlaneseq
    %v1713 = vshrl.u32 %v1712, 7
    %v1714 = vsub.s32 %v1711, %v1713
    %v1715 = vrot.slane %v1708, %v1714
    %v1717 = vunpack.c.l.s4 1966171168
    %v1718 = vunpack.c.0.s8 %v1717
    %v1719 = vlaneseq
    %v1720 = vshrl.u32 %v1719, 7
    %v1721 = vsub.s32 %v1718, %v1720
    %v1722 = vrot.slane %v1715, %v1721
    %v1724 = vadd.f32 %v1705, %v1722
    %v1725 = vxor.u32 %v1724, 2147483648
    %v1726 = vmul.f32 %v1725, 1.442695
    %v1727 = vpow.pop %v1726
    %v1728 = vadd.f32 %v1727, 1.0
    %v1729 = vrcp.pop %v1728
    %v1730 = vmul.f32 1.0, %v1729
    %v1731 = vadd.f32 %v1699, %v85
    %v1732 = vmul.f32 %v1730, %v1731
    %v1734 = vrot.slane %v1705, 2
    %v1736 = vadd.f32 %v1734, %v1732
    %v1737 = vtanh.pop %v1736
    %v1738 = vsub.f32 %v1621, %v1737
    %v1740 = vrot.slane %v1730, 1
    %v1742 = vmul.f32 %v1740, %v1738
    %v1743 = vadd.f32 %v1737, %v1742
    %s1744 = sadd.s32 %s87, 11
    %p1745 = scmp.lt.s32.totalorder %s1744, 8
    %s1746 = scalar_select %p1745, 1, 0
    %v1747 = vstv %s1746
    %vm1748 = vcmp.eq.s32.totalorder %v1747, 1
    %v1749 = vsel %vm1748, %v1743, %v1621
    %v1750 = vpack.c.bf16 %v1749, %v1749
    %1751 = vmatprep.subr.bf16.mxu0 %v170
    %1752 = vmatpush1.bf16.msra.mxu0 %v169
    %1753 = vmatprep.subr.bf16.mxu0 %v173
    %1754 = vmatpush1.bf16.msra.mxu0 %v172
    %1755 = vmatprep.subr.bf16.mxu0 %v176
    %1756 = vmatpush1.bf16.msra.mxu0 %v175
    %1757 = vmatprep.subr.bf16.mxu0 %v179
    %1758 = vmatpush1.bf16.msra.mxu0 %v178
    %1759 = vmatprep.subr.bf16.mxu0 %v182
    %1760 = vmatpush1.bf16.msra.mxu0 %v181
    %1761 = vmatprep.subr.bf16.mxu0 %v185
    %1762 = vmatpush1.bf16.msra.mxu0 %v184
    %1763 = vmatprep.subr.bf16.mxu0 %v188
    %1764 = vmatpush1.bf16.msra.mxu0 %v187
    %1765 = vmatprep.subr.bf16.mxu0 %v191
    %1766 = vmatpush1.bf16.msra.mxu0 %v190
    %1767 = vmatprep.subr.bf16.mxu0 0
    %1768 = vmatpush1.bf16.msra.mxu0 0
    %1769 = vmatprep.subr.bf16.mxu0 0
    %1770 = vmatpush1.bf16.msra.mxu0 0
    %1771 = vmatprep.subr.bf16.mxu0 0
    %1772 = vmatpush1.bf16.msra.mxu0 0
    %1773 = vmatprep.subr.bf16.mxu0 0
    %1774 = vmatpush1.bf16.msra.mxu0 0
    %1775 = vmatprep.subr.bf16.mxu0 0
    %1776 = vmatpush1.bf16.msra.mxu0 0
    %1777 = vmatprep.subr.bf16.mxu0 0
    %1778 = vmatpush1.bf16.msra.mxu0 0
    %1779 = vmatprep.subr.bf16.mxu0 0
    %1780 = vmatpush1.bf16.msra.mxu0 0
    %1781 = vmatprep.subr.bf16.mxu0 0
    %1782 = vmatpush1.bf16.msra.mxu0 0
    %1783 = vmatprep.mubr.bf16.mxu0 0
    %1784 = vmatmul.mubr.bf16.gmra.mrb[0].mxu0 %v1750
    %v1785 = vpop.f32.mrb[0].mxu0
    %v1786 = vadd.f32 0.0, %v1785
    %v1787 = vpop.f32.mrb[0].mxu0
    %v1788 = vadd.f32 0.0, %v1787
    %v1789 = vpop.f32.mrb[0].mxu0
    %v1790 = vpop.f32.mrb[0].mxu0
    %1791 = vdwg.mxu0
    %1792 = vmatprep.subr.bf16.mxu0 0
    %1793 = vmatpush1.bf16.msra.mxu0 %v171
    %1794 = vmatprep.subr.bf16.mxu0 0
    %1795 = vmatpush1.bf16.msra.mxu0 %v174
    %1796 = vmatprep.subr.bf16.mxu0 0
    %1797 = vmatpush1.bf16.msra.mxu0 %v177
    %1798 = vmatprep.subr.bf16.mxu0 0
    %1799 = vmatpush1.bf16.msra.mxu0 %v180
    %1800 = vmatprep.subr.bf16.mxu0 0
    %1801 = vmatpush1.bf16.msra.mxu0 %v183
    %1802 = vmatprep.subr.bf16.mxu0 0
    %1803 = vmatpush1.bf16.msra.mxu0 %v186
    %1804 = vmatprep.subr.bf16.mxu0 0
    %1805 = vmatpush1.bf16.msra.mxu0 %v189
    %1806 = vmatprep.subr.bf16.mxu0 0
    %1807 = vmatpush1.bf16.msra.mxu0 %v192
    %1808 = vmatprep.subr.bf16.mxu0 0
    %1809 = vmatpush1.bf16.msra.mxu0 0
    %1810 = vmatprep.subr.bf16.mxu0 0
    %1811 = vmatpush1.bf16.msra.mxu0 0
    %1812 = vmatprep.subr.bf16.mxu0 0
    %1813 = vmatpush1.bf16.msra.mxu0 0
    %1814 = vmatprep.subr.bf16.mxu0 0
    %1815 = vmatpush1.bf16.msra.mxu0 0
    %1816 = vmatprep.subr.bf16.mxu0 0
    %1817 = vmatpush1.bf16.msra.mxu0 0
    %1818 = vmatprep.subr.bf16.mxu0 0
    %1819 = vmatpush1.bf16.msra.mxu0 0
    %1820 = vmatprep.subr.bf16.mxu0 0
    %1821 = vmatpush1.bf16.msra.mxu0 0
    %1822 = vmatprep.subr.bf16.mxu0 0
    %1823 = vmatpush1.bf16.msra.mxu0 0
    %1824 = vmatprep.mubr.bf16.mxu0 0
    %1825 = vmatmul.mubr.bf16.gmra.mrb[0].mxu0 %v1750
    %v1826 = vpop.f32.mrb[0].mxu0
    %v1827 = vadd.f32 0.0, %v1826
    %v1828 = vpop.f32.mrb[0].mxu0
    %v1829 = vpop.f32.mrb[0].mxu0
    %v1830 = vpop.f32.mrb[0].mxu0
    %1831 = vdwg.mxu0
    %s1832 = scalar_lea.vmem [#allocation3], 28
    %v1833 = vld [vmem:[%s1832] ss:$8 sm:$0x7]
    %v1836 = vcombine.low %v1786, %v1788
    %v1838 = vunpack.c.l.s4 1966171168
    %v1839 = vunpack.c.0.s8 %v1838
    %v1840 = vlaneseq
    %v1841 = vshrl.u32 %v1840, 7
    %v1842 = vsub.s32 %v1839, %v1841
    %v1843 = vrot.slane %v1836, %v1842
    %v1845 = vunpack.c.l.s4 1966171168
    %v1846 = vunpack.c.0.s8 %v1845
    %v1847 = vlaneseq
    %v1848 = vshrl.u32 %v1847, 7
    %v1849 = vsub.s32 %v1846, %v1848
    %v1850 = vrot.slane %v1843, %v1849
    %v1852 = vadd.f32 %v1833, %v1850
    %v1853 = vxor.u32 %v1852, 2147483648
    %v1854 = vmul.f32 %v1853, 1.442695
    %v1855 = vpow.pop %v1854
    %v1856 = vadd.f32 %v1855, 1.0
    %v1857 = vrcp.pop %v1856
    %v1858 = vmul.f32 1.0, %v1857
    %v1859 = vadd.f32 %v1827, %v85
    %v1860 = vmul.f32 %v1858, %v1859
    %v1862 = vrot.slane %v1833, 2
    %v1864 = vadd.f32 %v1862, %v1860
    %v1865 = vtanh.pop %v1864
    %v1866 = vsub.f32 %v1749, %v1865
    %v1868 = vrot.slane %v1858, 1
    %v1870 = vmul.f32 %v1868, %v1866
    %v1871 = vadd.f32 %v1865, %v1870
    %s1872 = sadd.s32 %s87, 12
    %p1873 = scmp.lt.s32.totalorder %s1872, 8
    %s1874 = scalar_select %p1873, 1, 0
    %v1875 = vstv %s1874
    %vm1876 = vcmp.eq.s32.totalorder %v1875, 1
    %v1877 = vsel %vm1876, %v1871, %v1749
    %v1878 = vpack.c.bf16 %v1877, %v1877
    %1879 = vmatprep.subr.bf16.mxu0 %v170
    %1880 = vmatpush1.bf16.msra.mxu0 %v169
    %1881 = vmatprep.subr.bf16.mxu0 %v173
    %1882 = vmatpush1.bf16.msra.mxu0 %v172
    %1883 = vmatprep.subr.bf16.mxu0 %v176
    %1884 = vmatpush1.bf16.msra.mxu0 %v175
    %1885 = vmatprep.subr.bf16.mxu0 %v179
    %1886 = vmatpush1.bf16.msra.mxu0 %v178
    %1887 = vmatprep.subr.bf16.mxu0 %v182
    %1888 = vmatpush1.bf16.msra.mxu0 %v181
    %1889 = vmatprep.subr.bf16.mxu0 %v185
    %1890 = vmatpush1.bf16.msra.mxu0 %v184
    %1891 = vmatprep.subr.bf16.mxu0 %v188
    %1892 = vmatpush1.bf16.msra.mxu0 %v187
    %1893 = vmatprep.subr.bf16.mxu0 %v191
    %1894 = vmatpush1.bf16.msra.mxu0 %v190
    %1895 = vmatprep.subr.bf16.mxu0 0
    %1896 = vmatpush1.bf16.msra.mxu0 0
    %1897 = vmatprep.subr.bf16.mxu0 0
    %1898 = vmatpush1.bf16.msra.mxu0 0
    %1899 = vmatprep.subr.bf16.mxu0 0
    %1900 = vmatpush1.bf16.msra.mxu0 0
    %1901 = vmatprep.subr.bf16.mxu0 0
    %1902 = vmatpush1.bf16.msra.mxu0 0
    %1903 = vmatprep.subr.bf16.mxu0 0
    %1904 = vmatpush1.bf16.msra.mxu0 0
    %1905 = vmatprep.subr.bf16.mxu0 0
    %1906 = vmatpush1.bf16.msra.mxu0 0
    %1907 = vmatprep.subr.bf16.mxu0 0
    %1908 = vmatpush1.bf16.msra.mxu0 0
    %1909 = vmatprep.subr.bf16.mxu0 0
    %1910 = vmatpush1.bf16.msra.mxu0 0
    %1911 = vmatprep.mubr.bf16.mxu0 0
    %1912 = vmatmul.mubr.bf16.gmra.mrb[0].mxu0 %v1878
    %v1913 = vpop.f32.mrb[0].mxu0
    %v1914 = vadd.f32 0.0, %v1913
    %v1915 = vpop.f32.mrb[0].mxu0
    %v1916 = vadd.f32 0.0, %v1915
    %v1917 = vpop.f32.mrb[0].mxu0
    %v1918 = vpop.f32.mrb[0].mxu0
    %1919 = vdwg.mxu0
    %1920 = vmatprep.subr.bf16.mxu0 0
    %1921 = vmatpush1.bf16.msra.mxu0 %v171
    %1922 = vmatprep.subr.bf16.mxu0 0
    %1923 = vmatpush1.bf16.msra.mxu0 %v174
    %1924 = vmatprep.subr.bf16.mxu0 0
    %1925 = vmatpush1.bf16.msra.mxu0 %v177
    %1926 = vmatprep.subr.bf16.mxu0 0
    %1927 = vmatpush1.bf16.msra.mxu0 %v180
    %1928 = vmatprep.subr.bf16.mxu0 0
    %1929 = vmatpush1.bf16.msra.mxu0 %v183
    %1930 = vmatprep.subr.bf16.mxu0 0
    %1931 = vmatpush1.bf16.msra.mxu0 %v186
    %1932 = vmatprep.subr.bf16.mxu0 0
    %1933 = vmatpush1.bf16.msra.mxu0 %v189
    %1934 = vmatprep.subr.bf16.mxu0 0
    %1935 = vmatpush1.bf16.msra.mxu0 %v192
    %1936 = vmatprep.subr.bf16.mxu0 0
    %1937 = vmatpush1.bf16.msra.mxu0 0
    %1938 = vmatprep.subr.bf16.mxu0 0
    %1939 = vmatpush1.bf16.msra.mxu0 0
    %1940 = vmatprep.subr.bf16.mxu0 0
    %1941 = vmatpush1.bf16.msra.mxu0 0
    %1942 = vmatprep.subr.bf16.mxu0 0
    %1943 = vmatpush1.bf16.msra.mxu0 0
    %1944 = vmatprep.subr.bf16.mxu0 0
    %1945 = vmatpush1.bf16.msra.mxu0 0
    %1946 = vmatprep.subr.bf16.mxu0 0
    %1947 = vmatpush1.bf16.msra.mxu0 0
    %1948 = vmatprep.subr.bf16.mxu0 0
    %1949 = vmatpush1.bf16.msra.mxu0 0
    %1950 = vmatprep.subr.bf16.mxu0 0
    %1951 = vmatpush1.bf16.msra.mxu0 0
    %1952 = vmatprep.mubr.bf16.mxu0 0
    %1953 = vmatmul.mubr.bf16.gmra.mrb[0].mxu0 %v1878
    %v1954 = vpop.f32.mrb[0].mxu0
    %v1955 = vadd.f32 0.0, %v1954
    %v1956 = vpop.f32.mrb[0].mxu0
    %v1957 = vpop.f32.mrb[0].mxu0
    %v1958 = vpop.f32.mrb[0].mxu0
    %1959 = vdwg.mxu0
    %s1960 = scalar_lea.vmem [#allocation3], 29
    %v1961 = vld [vmem:[%s1960] ss:$8 sm:$0x7]
    %v1964 = vcombine.low %v1914, %v1916
    %v1966 = vunpack.c.l.s4 1966171168
    %v1967 = vunpack.c.0.s8 %v1966
    %v1968 = vlaneseq
    %v1969 = vshrl.u32 %v1968, 7
    %v1970 = vsub.s32 %v1967, %v1969
    %v1971 = vrot.slane %v1964, %v1970
    %v1973 = vunpack.c.l.s4 1966171168
    %v1974 = vunpack.c.0.s8 %v1973
    %v1975 = vlaneseq
    %v1976 = vshrl.u32 %v1975, 7
    %v1977 = vsub.s32 %v1974, %v1976
    %v1978 = vrot.slane %v1971, %v1977
    %v1980 = vadd.f32 %v1961, %v1978
    %v1981 = vxor.u32 %v1980, 2147483648
    %v1982 = vmul.f32 %v1981, 1.442695
    %v1983 = vpow.pop %v1982
    %v1984 = vadd.f32 %v1983, 1.0
    %v1985 = vrcp.pop %v1984
    %v1986 = vmul.f32 1.0, %v1985
    %v1987 = vadd.f32 %v1955, %v85
    %v1988 = vmul.f32 %v1986, %v1987
    %v1990 = vrot.slane %v1961, 2
    %v1992 = vadd.f32 %v1990, %v1988
    %v1993 = vtanh.pop %v1992
    %v1994 = vsub.f32 %v1877, %v1993
    %v1996 = vrot.slane %v1986, 1
    %v1998 = vmul.f32 %v1996, %v1994
    %v1999 = vadd.f32 %v1993, %v1998
    %s2000 = sadd.s32 %s87, 13
    %p2001 = scmp.lt.s32.totalorder %s2000, 8
    %s2002 = scalar_select %p2001, 1, 0
    %v2003 = vstv %s2002
    %vm2004 = vcmp.eq.s32.totalorder %v2003, 1
    %v2005 = vsel %vm2004, %v1999, %v1877
    %v2006 = vpack.c.bf16 %v2005, %v2005
    %2007 = vmatprep.subr.bf16.mxu0 %v170
    %2008 = vmatpush1.bf16.msra.mxu0 %v169
    %2009 = vmatprep.subr.bf16.mxu0 %v173
    %2010 = vmatpush1.bf16.msra.mxu0 %v172
    %2011 = vmatprep.subr.bf16.mxu0 %v176
    %2012 = vmatpush1.bf16.msra.mxu0 %v175
    %2013 = vmatprep.subr.bf16.mxu0 %v179
    %2014 = vmatpush1.bf16.msra.mxu0 %v178
    %2015 = vmatprep.subr.bf16.mxu0 %v182
    %2016 = vmatpush1.bf16.msra.mxu0 %v181
    %2017 = vmatprep.subr.bf16.mxu0 %v185
    %2018 = vmatpush1.bf16.msra.mxu0 %v184
    %2019 = vmatprep.subr.bf16.mxu0 %v188
    %2020 = vmatpush1.bf16.msra.mxu0 %v187
    %2021 = vmatprep.subr.bf16.mxu0 %v191
    %2022 = vmatpush1.bf16.msra.mxu0 %v190
    %2023 = vmatprep.subr.bf16.mxu0 0
    %2024 = vmatpush1.bf16.msra.mxu0 0
    %2025 = vmatprep.subr.bf16.mxu0 0
    %2026 = vmatpush1.bf16.msra.mxu0 0
    %2027 = vmatprep.subr.bf16.mxu0 0
    %2028 = vmatpush1.bf16.msra.mxu0 0
    %2029 = vmatprep.subr.bf16.mxu0 0
    %2030 = vmatpush1.bf16.msra.mxu0 0
    %2031 = vmatprep.subr.bf16.mxu0 0
    %2032 = vmatpush1.bf16.msra.mxu0 0
    %2033 = vmatprep.subr.bf16.mxu0 0
    %2034 = vmatpush1.bf16.msra.mxu0 0
    %2035 = vmatprep.subr.bf16.mxu0 0
    %2036 = vmatpush1.bf16.msra.mxu0 0
    %2037 = vmatprep.subr.bf16.mxu0 0
    %2038 = vmatpush1.bf16.msra.mxu0 0
    %2039 = vmatprep.mubr.bf16.mxu0 0
    %2040 = vmatmul.mubr.bf16.gmra.mrb[0].mxu0 %v2006
    %v2041 = vpop.f32.mrb[0].mxu0
    %v2042 = vadd.f32 0.0, %v2041
    %v2043 = vpop.f32.mrb[0].mxu0
    %v2044 = vadd.f32 0.0, %v2043
    %v2045 = vpop.f32.mrb[0].mxu0
    %v2046 = vpop.f32.mrb[0].mxu0
    %2047 = vdwg.mxu0
    %2048 = vmatprep.subr.bf16.mxu0 0
    %2049 = vmatpush1.bf16.msra.mxu0 %v171
    %2050 = vmatprep.subr.bf16.mxu0 0
    %2051 = vmatpush1.bf16.msra.mxu0 %v174
    %2052 = vmatprep.subr.bf16.mxu0 0
    %2053 = vmatpush1.bf16.msra.mxu0 %v177
    %2054 = vmatprep.subr.bf16.mxu0 0
    %2055 = vmatpush1.bf16.msra.mxu0 %v180
    %2056 = vmatprep.subr.bf16.mxu0 0
    %2057 = vmatpush1.bf16.msra.mxu0 %v183
    %2058 = vmatprep.subr.bf16.mxu0 0
    %2059 = vmatpush1.bf16.msra.mxu0 %v186
    %2060 = vmatprep.subr.bf16.mxu0 0
    %2061 = vmatpush1.bf16.msra.mxu0 %v189
    %2062 = vmatprep.subr.bf16.mxu0 0
    %2063 = vmatpush1.bf16.msra.mxu0 %v192
    %2064 = vmatprep.subr.bf16.mxu0 0
    %2065 = vmatpush1.bf16.msra.mxu0 0
    %2066 = vmatprep.subr.bf16.mxu0 0
    %2067 = vmatpush1.bf16.msra.mxu0 0
    %2068 = vmatprep.subr.bf16.mxu0 0
    %2069 = vmatpush1.bf16.msra.mxu0 0
    %2070 = vmatprep.subr.bf16.mxu0 0
    %2071 = vmatpush1.bf16.msra.mxu0 0
    %2072 = vmatprep.subr.bf16.mxu0 0
    %2073 = vmatpush1.bf16.msra.mxu0 0
    %2074 = vmatprep.subr.bf16.mxu0 0
    %2075 = vmatpush1.bf16.msra.mxu0 0
    %2076 = vmatprep.subr.bf16.mxu0 0
    %2077 = vmatpush1.bf16.msra.mxu0 0
    %2078 = vmatprep.subr.bf16.mxu0 0
    %2079 = vmatpush1.bf16.msra.mxu0 0
    %2080 = vmatprep.mubr.bf16.mxu0 0
    %2081 = vmatmul.mubr.bf16.gmra.mrb[0].mxu0 %v2006
    %v2082 = vpop.f32.mrb[0].mxu0
    %v2083 = vadd.f32 0.0, %v2082
    %v2084 = vpop.f32.mrb[0].mxu0
    %v2085 = vpop.f32.mrb[0].mxu0
    %v2086 = vpop.f32.mrb[0].mxu0
    %2087 = vdwg.mxu0
    %s2088 = scalar_lea.vmem [#allocation3], 30
    %v2089 = vld [vmem:[%s2088] ss:$8 sm:$0x7]
    %v2092 = vcombine.low %v2042, %v2044
    %v2094 = vunpack.c.l.s4 1966171168
    %v2095 = vunpack.c.0.s8 %v2094
    %v2096 = vlaneseq
    %v2097 = vshrl.u32 %v2096, 7
    %v2098 = vsub.s32 %v2095, %v2097
    %v2099 = vrot.slane %v2092, %v2098
    %v2101 = vunpack.c.l.s4 1966171168
    %v2102 = vunpack.c.0.s8 %v2101
    %v2103 = vlaneseq
    %v2104 = vshrl.u32 %v2103, 7
    %v2105 = vsub.s32 %v2102, %v2104
    %v2106 = vrot.slane %v2099, %v2105
    %v2108 = vadd.f32 %v2089, %v2106
    %v2109 = vxor.u32 %v2108, 2147483648
    %v2110 = vmul.f32 %v2109, 1.442695
    %v2111 = vpow.pop %v2110
    %v2112 = vadd.f32 %v2111, 1.0
    %v2113 = vrcp.pop %v2112
    %v2114 = vmul.f32 1.0, %v2113
    %v2115 = vadd.f32 %v2083, %v85
    %v2116 = vmul.f32 %v2114, %v2115
    %v2118 = vrot.slane %v2089, 2
    %v2120 = vadd.f32 %v2118, %v2116
    %v2121 = vtanh.pop %v2120
    %v2122 = vsub.f32 %v2005, %v2121
    %v2124 = vrot.slane %v2114, 1
    %v2126 = vmul.f32 %v2124, %v2122
    %v2127 = vadd.f32 %v2121, %v2126
    %s2128 = sadd.s32 %s87, 14
    %p2129 = scmp.lt.s32.totalorder %s2128, 8
    %s2130 = scalar_select %p2129, 1, 0
    %v2131 = vstv %s2130
    %vm2132 = vcmp.eq.s32.totalorder %v2131, 1
    %v2133 = vsel %vm2132, %v2127, %v2005
    %v2134 = vpack.c.bf16 %v2133, %v2133
    %2135 = vmatprep.subr.bf16.mxu0 %v170
    %2136 = vmatpush1.bf16.msra.mxu0 %v169
    %2137 = vmatprep.subr.bf16.mxu0 %v173
    %2138 = vmatpush1.bf16.msra.mxu0 %v172
    %2139 = vmatprep.subr.bf16.mxu0 %v176
    %2140 = vmatpush1.bf16.msra.mxu0 %v175
    %2141 = vmatprep.subr.bf16.mxu0 %v179
    %2142 = vmatpush1.bf16.msra.mxu0 %v178
    %2143 = vmatprep.subr.bf16.mxu0 %v182
    %2144 = vmatpush1.bf16.msra.mxu0 %v181
    %2145 = vmatprep.subr.bf16.mxu0 %v185
    %2146 = vmatpush1.bf16.msra.mxu0 %v184
    %2147 = vmatprep.subr.bf16.mxu0 %v188
    %2148 = vmatpush1.bf16.msra.mxu0 %v187
    %2149 = vmatprep.subr.bf16.mxu0 %v191
    %2150 = vmatpush1.bf16.msra.mxu0 %v190
    %2151 = vmatprep.subr.bf16.mxu0 0
    %2152 = vmatpush1.bf16.msra.mxu0 0
    %2153 = vmatprep.subr.bf16.mxu0 0
    %2154 = vmatpush1.bf16.msra.mxu0 0
    %2155 = vmatprep.subr.bf16.mxu0 0
    %2156 = vmatpush1.bf16.msra.mxu0 0
    %2157 = vmatprep.subr.bf16.mxu0 0
    %2158 = vmatpush1.bf16.msra.mxu0 0
    %2159 = vmatprep.subr.bf16.mxu0 0
    %2160 = vmatpush1.bf16.msra.mxu0 0
    %2161 = vmatprep.subr.bf16.mxu0 0
    %2162 = vmatpush1.bf16.msra.mxu0 0
    %2163 = vmatprep.subr.bf16.mxu0 0
    %2164 = vmatpush1.bf16.msra.mxu0 0
    %2165 = vmatprep.subr.bf16.mxu0 0
    %2166 = vmatpush1.bf16.msra.mxu0 0
    %2167 = vmatprep.mubr.bf16.mxu0 0
    %2168 = vmatmul.mubr.bf16.gmra.mrb[0].mxu0 %v2134
    %v2169 = vpop.f32.mrb[0].mxu0
    %v2170 = vadd.f32 0.0, %v2169
    %v2171 = vpop.f32.mrb[0].mxu0
    %v2172 = vadd.f32 0.0, %v2171
    %v2173 = vpop.f32.mrb[0].mxu0
    %v2174 = vpop.f32.mrb[0].mxu0
    %2175 = vdwg.mxu0
    %2176 = vmatprep.subr.bf16.mxu0 0
    %2177 = vmatpush1.bf16.msra.mxu0 %v171
    %2178 = vmatprep.subr.bf16.mxu0 0
    %2179 = vmatpush1.bf16.msra.mxu0 %v174
    %2180 = vmatprep.subr.bf16.mxu0 0
    %2181 = vmatpush1.bf16.msra.mxu0 %v177
    %2182 = vmatprep.subr.bf16.mxu0 0
    %2183 = vmatpush1.bf16.msra.mxu0 %v180
    %2184 = vmatprep.subr.bf16.mxu0 0
    %2185 = vmatpush1.bf16.msra.mxu0 %v183
    %2186 = vmatprep.subr.bf16.mxu0 0
    %2187 = vmatpush1.bf16.msra.mxu0 %v186
    %2188 = vmatprep.subr.bf16.mxu0 0
    %2189 = vmatpush1.bf16.msra.mxu0 %v189
    %2190 = vmatprep.subr.bf16.mxu0 0
    %2191 = vmatpush1.bf16.msra.mxu0 %v192
    %2192 = vmatprep.subr.bf16.mxu0 0
    %2193 = vmatpush1.bf16.msra.mxu0 0
    %2194 = vmatprep.subr.bf16.mxu0 0
    %2195 = vmatpush1.bf16.msra.mxu0 0
    %2196 = vmatprep.subr.bf16.mxu0 0
    %2197 = vmatpush1.bf16.msra.mxu0 0
    %2198 = vmatprep.subr.bf16.mxu0 0
    %2199 = vmatpush1.bf16.msra.mxu0 0
    %2200 = vmatprep.subr.bf16.mxu0 0
    %2201 = vmatpush1.bf16.msra.mxu0 0
    %2202 = vmatprep.subr.bf16.mxu0 0
    %2203 = vmatpush1.bf16.msra.mxu0 0
    %2204 = vmatprep.subr.bf16.mxu0 0
    %2205 = vmatpush1.bf16.msra.mxu0 0
    %2206 = vmatprep.subr.bf16.mxu0 0
    %2207 = vmatpush1.bf16.msra.mxu0 0
    %2208 = vmatprep.mubr.bf16.mxu0 0
    %2209 = vmatmul.mubr.bf16.gmra.mrb[0].mxu0 %v2134
    %v2210 = vpop.f32.mrb[0].mxu0
    %v2211 = vadd.f32 0.0, %v2210
    %v2212 = vpop.f32.mrb[0].mxu0
    %v2213 = vpop.f32.mrb[0].mxu0
    %v2214 = vpop.f32.mrb[0].mxu0
    %2215 = vdwg.mxu0
    %s2216 = scalar_lea.vmem [#allocation3], 31
    %v2217 = vld [vmem:[%s2216] ss:$8 sm:$0x7]
    %v2220 = vcombine.low %v2170, %v2172
    %v2222 = vunpack.c.l.s4 1966171168
    %v2223 = vunpack.c.0.s8 %v2222
    %v2224 = vlaneseq
    %v2225 = vshrl.u32 %v2224, 7
    %v2226 = vsub.s32 %v2223, %v2225
    %v2227 = vrot.slane %v2220, %v2226
    %v2229 = vunpack.c.l.s4 1966171168
    %v2230 = vunpack.c.0.s8 %v2229
    %v2231 = vlaneseq
    %v2232 = vshrl.u32 %v2231, 7
    %v2233 = vsub.s32 %v2230, %v2232
    %v2234 = vrot.slane %v2227, %v2233
    %v2236 = vadd.f32 %v2217, %v2234
    %v2237 = vxor.u32 %v2236, 2147483648
    %v2238 = vmul.f32 %v2237, 1.442695
    %v2239 = vpow.pop %v2238
    %v2240 = vadd.f32 %v2239, 1.0
    %v2241 = vrcp.pop %v2240
    %v2242 = vmul.f32 1.0, %v2241
    %v2243 = vadd.f32 %v2211, %v85
    %v2244 = vmul.f32 %v2242, %v2243
    %v2246 = vrot.slane %v2217, 2
    %v2248 = vadd.f32 %v2246, %v2244
    %v2249 = vtanh.pop %v2248
    %v2250 = vsub.f32 %v2133, %v2249
    %v2252 = vrot.slane %v2242, 1
    %v2254 = vmul.f32 %v2252, %v2250
    %v2255 = vadd.f32 %v2249, %v2254
    %s2256 = sadd.s32 %s87, 15
    %p2257 = scmp.lt.s32.totalorder %s2256, 8
    %s2258 = scalar_select %p2257, 1, 0
    %v2259 = vstv %s2258
    %vm2260 = vcmp.eq.s32.totalorder %v2259, 1
    %v2261 = vsel %vm2260, %v2255, %v2133
    %v2262 = vpack.c.bf16 %v2261, %v2261
    %2263 = vmatprep.subr.bf16.mxu0 %v170
    %2264 = vmatpush1.bf16.msra.mxu0 %v169
    %2265 = vmatprep.subr.bf16.mxu0 %v173
    %2266 = vmatpush1.bf16.msra.mxu0 %v172
    %2267 = vmatprep.subr.bf16.mxu0 %v176
    %2268 = vmatpush1.bf16.msra.mxu0 %v175
    %2269 = vmatprep.subr.bf16.mxu0 %v179
    %2270 = vmatpush1.bf16.msra.mxu0 %v178
    %2271 = vmatprep.subr.bf16.mxu0 %v182
    %2272 = vmatpush1.bf16.msra.mxu0 %v181
    %2273 = vmatprep.subr.bf16.mxu0 %v185
    %2274 = vmatpush1.bf16.msra.mxu0 %v184
    %2275 = vmatprep.subr.bf16.mxu0 %v188
    %2276 = vmatpush1.bf16.msra.mxu0 %v187
    %2277 = vmatprep.subr.bf16.mxu0 %v191
    %2278 = vmatpush1.bf16.msra.mxu0 %v190
    %2279 = vmatprep.subr.bf16.mxu0 0
    %2280 = vmatpush1.bf16.msra.mxu0 0
    %2281 = vmatprep.subr.bf16.mxu0 0
    %2282 = vmatpush1.bf16.msra.mxu0 0
    %2283 = vmatprep.subr.bf16.mxu0 0
    %2284 = vmatpush1.bf16.msra.mxu0 0
    %2285 = vmatprep.subr.bf16.mxu0 0
    %2286 = vmatpush1.bf16.msra.mxu0 0
    %2287 = vmatprep.subr.bf16.mxu0 0
    %2288 = vmatpush1.bf16.msra.mxu0 0
    %2289 = vmatprep.subr.bf16.mxu0 0
    %2290 = vmatpush1.bf16.msra.mxu0 0
    %2291 = vmatprep.subr.bf16.mxu0 0
    %2292 = vmatpush1.bf16.msra.mxu0 0
    %2293 = vmatprep.subr.bf16.mxu0 0
    %2294 = vmatpush1.bf16.msra.mxu0 0
    %2295 = vmatprep.mubr.bf16.mxu0 0
    %2296 = vmatmul.mubr.bf16.gmra.mrb[0].mxu0 %v2262
    %v2297 = vpop.f32.mrb[0].mxu0
    %v2298 = vadd.f32 0.0, %v2297
    %v2299 = vpop.f32.mrb[0].mxu0
    %v2300 = vadd.f32 0.0, %v2299
    %v2301 = vpop.f32.mrb[0].mxu0
    %v2302 = vpop.f32.mrb[0].mxu0
    %2303 = vdwg.mxu0
    %2304 = vmatprep.subr.bf16.mxu0 0
    %2305 = vmatpush1.bf16.msra.mxu0 %v171
    %2306 = vmatprep.subr.bf16.mxu0 0
    %2307 = vmatpush1.bf16.msra.mxu0 %v174
    %2308 = vmatprep.subr.bf16.mxu0 0
    %2309 = vmatpush1.bf16.msra.mxu0 %v177
    %2310 = vmatprep.subr.bf16.mxu0 0
    %2311 = vmatpush1.bf16.msra.mxu0 %v180
    %2312 = vmatprep.subr.bf16.mxu0 0
    %2313 = vmatpush1.bf16.msra.mxu0 %v183
    %2314 = vmatprep.subr.bf16.mxu0 0
    %2315 = vmatpush1.bf16.msra.mxu0 %v186
    %2316 = vmatprep.subr.bf16.mxu0 0
    %2317 = vmatpush1.bf16.msra.mxu0 %v189
    %2318 = vmatprep.subr.bf16.mxu0 0
    %2319 = vmatpush1.bf16.msra.mxu0 %v192
    %2320 = vmatprep.subr.bf16.mxu0 0
    %2321 = vmatpush1.bf16.msra.mxu0 0
    %2322 = vmatprep.subr.bf16.mxu0 0
    %2323 = vmatpush1.bf16.msra.mxu0 0
    %2324 = vmatprep.subr.bf16.mxu0 0
    %2325 = vmatpush1.bf16.msra.mxu0 0
    %2326 = vmatprep.subr.bf16.mxu0 0
    %2327 = vmatpush1.bf16.msra.mxu0 0
    %2328 = vmatprep.subr.bf16.mxu0 0
    %2329 = vmatpush1.bf16.msra.mxu0 0
    %2330 = vmatprep.subr.bf16.mxu0 0
    %2331 = vmatpush1.bf16.msra.mxu0 0
    %2332 = vmatprep.subr.bf16.mxu0 0
    %2333 = vmatpush1.bf16.msra.mxu0 0
    %2334 = vmatprep.subr.bf16.mxu0 0
    %2335 = vmatpush1.bf16.msra.mxu0 0
    %2336 = vmatprep.mubr.bf16.mxu0 0
    %2337 = vmatmul.mubr.bf16.gmra.mrb[0].mxu0 %v2262
    %v2338 = vpop.f32.mrb[0].mxu0
    %v2339 = vadd.f32 0.0, %v2338
    %v2340 = vpop.f32.mrb[0].mxu0
    %v2341 = vpop.f32.mrb[0].mxu0
    %v2342 = vpop.f32.mrb[0].mxu0
    %2343 = vdwg.mxu0
    %s2344 = scalar_lea.vmem [#allocation3], 48
    %v2345 = vld [vmem:[%s2344] ss:$8 sm:$0x7]
    %v2348 = vcombine.low %v2298, %v2300
    %v2350 = vunpack.c.l.s4 1966171168
    %v2351 = vunpack.c.0.s8 %v2350
    %v2352 = vlaneseq
    %v2353 = vshrl.u32 %v2352, 7
    %v2354 = vsub.s32 %v2351, %v2353
    %v2355 = vrot.slane %v2348, %v2354
    %v2357 = vunpack.c.l.s4 1966171168
    %v2358 = vunpack.c.0.s8 %v2357
    %v2359 = vlaneseq
    %v2360 = vshrl.u32 %v2359, 7
    %v2361 = vsub.s32 %v2358, %v2360
    %v2362 = vrot.slane %v2355, %v2361
    %v2364 = vadd.f32 %v2345, %v2362
    %v2365 = vxor.u32 %v2364, 2147483648
    %v2366 = vmul.f32 %v2365, 1.442695
    %v2367 = vpow.pop %v2366
    %v2368 = vadd.f32 %v2367, 1.0
    %v2369 = vrcp.pop %v2368
    %v2370 = vmul.f32 1.0, %v2369
    %v2371 = vadd.f32 %v2339, %v85
    %v2372 = vmul.f32 %v2370, %v2371
    %v2374 = vrot.slane %v2345, 2
    %v2376 = vadd.f32 %v2374, %v2372
    %v2377 = vtanh.pop %v2376
    %v2378 = vsub.f32 %v2261, %v2377
    %v2380 = vrot.slane %v2370, 1
    %v2382 = vmul.f32 %v2380, %v2378
    %v2383 = vadd.f32 %v2377, %v2382
    %s2384 = sadd.s32 %s87, 16
    %p2385 = scmp.lt.s32.totalorder %s2384, 8
    %s2386 = scalar_select %p2385, 1, 0
    %v2387 = vstv %s2386
    %vm2388 = vcmp.eq.s32.totalorder %v2387, 1
    %v2389 = vsel %vm2388, %v2383, %v2261
    %v2390 = vpack.c.bf16 %v2389, %v2389
    %2391 = vmatprep.subr.bf16.mxu0 %v170
    %2392 = vmatpush1.bf16.msra.mxu0 %v169
    %2393 = vmatprep.subr.bf16.mxu0 %v173
    %2394 = vmatpush1.bf16.msra.mxu0 %v172
    %2395 = vmatprep.subr.bf16.mxu0 %v176
    %2396 = vmatpush1.bf16.msra.mxu0 %v175
    %2397 = vmatprep.subr.bf16.mxu0 %v179
    %2398 = vmatpush1.bf16.msra.mxu0 %v178
    %2399 = vmatprep.subr.bf16.mxu0 %v182
    %2400 = vmatpush1.bf16.msra.mxu0 %v181
    %2401 = vmatprep.subr.bf16.mxu0 %v185
    %2402 = vmatpush1.bf16.msra.mxu0 %v184
    %2403 = vmatprep.subr.bf16.mxu0 %v188
    %2404 = vmatpush1.bf16.msra.mxu0 %v187
    %2405 = vmatprep.subr.bf16.mxu0 %v191
    %2406 = vmatpush1.bf16.msra.mxu0 %v190
    %2407 = vmatprep.subr.bf16.mxu0 0
    %2408 = vmatpush1.bf16.msra.mxu0 0
    %2409 = vmatprep.subr.bf16.mxu0 0
    %2410 = vmatpush1.bf16.msra.mxu0 0
    %2411 = vmatprep.subr.bf16.mxu0 0
    %2412 = vmatpush1.bf16.msra.mxu0 0
    %2413 = vmatprep.subr.bf16.mxu0 0
    %2414 = vmatpush1.bf16.msra.mxu0 0
    %2415 = vmatprep.subr.bf16.mxu0 0
    %2416 = vmatpush1.bf16.msra.mxu0 0
    %2417 = vmatprep.subr.bf16.mxu0 0
    %2418 = vmatpush1.bf16.msra.mxu0 0
    %2419 = vmatprep.subr.bf16.mxu0 0
    %2420 = vmatpush1.bf16.msra.mxu0 0
    %2421 = vmatprep.subr.bf16.mxu0 0
    %2422 = vmatpush1.bf16.msra.mxu0 0
    %2423 = vmatprep.mubr.bf16.mxu0 0
    %2424 = vmatmul.mubr.bf16.gmra.mrb[0].mxu0 %v2390
    %v2425 = vpop.f32.mrb[0].mxu0
    %v2426 = vadd.f32 0.0, %v2425
    %v2427 = vpop.f32.mrb[0].mxu0
    %v2428 = vadd.f32 0.0, %v2427
    %v2429 = vpop.f32.mrb[0].mxu0
    %v2430 = vpop.f32.mrb[0].mxu0
    %2431 = vdwg.mxu0
    %2432 = vmatprep.subr.bf16.mxu0 0
    %2433 = vmatpush1.bf16.msra.mxu0 %v171
    %2434 = vmatprep.subr.bf16.mxu0 0
    %2435 = vmatpush1.bf16.msra.mxu0 %v174
    %2436 = vmatprep.subr.bf16.mxu0 0
    %2437 = vmatpush1.bf16.msra.mxu0 %v177
    %2438 = vmatprep.subr.bf16.mxu0 0
    %2439 = vmatpush1.bf16.msra.mxu0 %v180
    %2440 = vmatprep.subr.bf16.mxu0 0
    %2441 = vmatpush1.bf16.msra.mxu0 %v183
    %2442 = vmatprep.subr.bf16.mxu0 0
    %2443 = vmatpush1.bf16.msra.mxu0 %v186
    %2444 = vmatprep.subr.bf16.mxu0 0
    %2445 = vmatpush1.bf16.msra.mxu0 %v189
    %2446 = vmatprep.subr.bf16.mxu0 0
    %2447 = vmatpush1.bf16.msra.mxu0 %v192
    %2448 = vmatprep.subr.bf16.mxu0 0
    %2449 = vmatpush1.bf16.msra.mxu0 0
    %2450 = vmatprep.subr.bf16.mxu0 0
    %2451 = vmatpush1.bf16.msra.mxu0 0
    %2452 = vmatprep.subr.bf16.mxu0 0
    %2453 = vmatpush1.bf16.msra.mxu0 0
    %2454 = vmatprep.subr.bf16.mxu0 0
    %2455 = vmatpush1.bf16.msra.mxu0 0
    %2456 = vmatprep.subr.bf16.mxu0 0
    %2457 = vmatpush1.bf16.msra.mxu0 0
    %2458 = vmatprep.subr.bf16.mxu0 0
    %2459 = vmatpush1.bf16.msra.mxu0 0
    %2460 = vmatprep.subr.bf16.mxu0 0
    %2461 = vmatpush1.bf16.msra.mxu0 0
    %2462 = vmatprep.subr.bf16.mxu0 0
    %2463 = vmatpush1.bf16.msra.mxu0 0
    %2464 = vmatprep.mubr.bf16.mxu0 0
    %2465 = vmatmul.mubr.bf16.gmra.mrb[0].mxu0 %v2390
    %v2466 = vpop.f32.mrb[0].mxu0
    %v2467 = vadd.f32 0.0, %v2466
    %v2468 = vpop.f32.mrb[0].mxu0
    %v2469 = vpop.f32.mrb[0].mxu0
    %v2470 = vpop.f32.mrb[0].mxu0
    %2471 = vdwg.mxu0
    %s2472 = scalar_lea.vmem [#allocation3], 49
    %v2473 = vld [vmem:[%s2472] ss:$8 sm:$0x7]
    %v2476 = vcombine.low %v2426, %v2428
    %v2478 = vunpack.c.l.s4 1966171168
    %v2479 = vunpack.c.0.s8 %v2478
    %v2480 = vlaneseq
    %v2481 = vshrl.u32 %v2480, 7
    %v2482 = vsub.s32 %v2479, %v2481
    %v2483 = vrot.slane %v2476, %v2482
    %v2485 = vunpack.c.l.s4 1966171168
    %v2486 = vunpack.c.0.s8 %v2485
    %v2487 = vlaneseq
    %v2488 = vshrl.u32 %v2487, 7
    %v2489 = vsub.s32 %v2486, %v2488
    %v2490 = vrot.slane %v2483, %v2489
    %v2492 = vadd.f32 %v2473, %v2490
    %v2493 = vxor.u32 %v2492, 2147483648
    %v2494 = vmul.f32 %v2493, 1.442695
    %v2495 = vpow.pop %v2494
    %v2496 = vadd.f32 %v2495, 1.0
    %v2497 = vrcp.pop %v2496
    %v2498 = vmul.f32 1.0, %v2497
    %v2499 = vadd.f32 %v2467, %v85
    %v2500 = vmul.f32 %v2498, %v2499
    %v2502 = vrot.slane %v2473, 2
    %v2504 = vadd.f32 %v2502, %v2500
    %v2505 = vtanh.pop %v2504
    %v2506 = vsub.f32 %v2389, %v2505
    %v2508 = vrot.slane %v2498, 1
    %v2510 = vmul.f32 %v2508, %v2506
    %v2511 = vadd.f32 %v2505, %v2510
    %s2512 = sadd.s32 %s87, 17
    %p2513 = scmp.lt.s32.totalorder %s2512, 8
    %s2514 = scalar_select %p2513, 1, 0
    %v2515 = vstv %s2514
    %vm2516 = vcmp.eq.s32.totalorder %v2515, 1
    %v2517 = vsel %vm2516, %v2511, %v2389
    %v2518 = vpack.c.bf16 %v2517, %v2517
    %2519 = vmatprep.subr.bf16.mxu0 %v170
    %2520 = vmatpush1.bf16.msra.mxu0 %v169
    %2521 = vmatprep.subr.bf16.mxu0 %v173
    %2522 = vmatpush1.bf16.msra.mxu0 %v172
    %2523 = vmatprep.subr.bf16.mxu0 %v176
    %2524 = vmatpush1.bf16.msra.mxu0 %v175
    %2525 = vmatprep.subr.bf16.mxu0 %v179
    %2526 = vmatpush1.bf16.msra.mxu0 %v178
    %2527 = vmatprep.subr.bf16.mxu0 %v182
    %2528 = vmatpush1.bf16.msra.mxu0 %v181
    %2529 = vmatprep.subr.bf16.mxu0 %v185
    %2530 = vmatpush1.bf16.msra.mxu0 %v184
    %2531 = vmatprep.subr.bf16.mxu0 %v188
    %2532 = vmatpush1.bf16.msra.mxu0 %v187
    %2533 = vmatprep.subr.bf16.mxu0 %v191
    %2534 = vmatpush1.bf16.msra.mxu0 %v190
    %2535 = vmatprep.subr.bf16.mxu0 0
    %2536 = vmatpush1.bf16.msra.mxu0 0
    %2537 = vmatprep.subr.bf16.mxu0 0
    %2538 = vmatpush1.bf16.msra.mxu0 0
    %2539 = vmatprep.subr.bf16.mxu0 0
    %2540 = vmatpush1.bf16.msra.mxu0 0
    %2541 = vmatprep.subr.bf16.mxu0 0
    %2542 = vmatpush1.bf16.msra.mxu0 0
    %2543 = vmatprep.subr.bf16.mxu0 0
    %2544 = vmatpush1.bf16.msra.mxu0 0
    %2545 = vmatprep.subr.bf16.mxu0 0
    %2546 = vmatpush1.bf16.msra.mxu0 0
    %2547 = vmatprep.subr.bf16.mxu0 0
    %2548 = vmatpush1.bf16.msra.mxu0 0
    %2549 = vmatprep.subr.bf16.mxu0 0
    %2550 = vmatpush1.bf16.msra.mxu0 0
    %2551 = vmatprep.mubr.bf16.mxu0 0
    %2552 = vmatmul.mubr.bf16.gmra.mrb[0].mxu0 %v2518
    %v2553 = vpop.f32.mrb[0].mxu0
    %v2554 = vadd.f32 0.0, %v2553
    %v2555 = vpop.f32.mrb[0].mxu0
    %v2556 = vadd.f32 0.0, %v2555
    %v2557 = vpop.f32.mrb[0].mxu0
    %v2558 = vpop.f32.mrb[0].mxu0
    %2559 = vdwg.mxu0
    %2560 = vmatprep.subr.bf16.mxu0 0
    %2561 = vmatpush1.bf16.msra.mxu0 %v171
    %2562 = vmatprep.subr.bf16.mxu0 0
    %2563 = vmatpush1.bf16.msra.mxu0 %v174
    %2564 = vmatprep.subr.bf16.mxu0 0
    %2565 = vmatpush1.bf16.msra.mxu0 %v177
    %2566 = vmatprep.subr.bf16.mxu0 0
    %2567 = vmatpush1.bf16.msra.mxu0 %v180
    %2568 = vmatprep.subr.bf16.mxu0 0
    %2569 = vmatpush1.bf16.msra.mxu0 %v183
    %2570 = vmatprep.subr.bf16.mxu0 0
    %2571 = vmatpush1.bf16.msra.mxu0 %v186
    %2572 = vmatprep.subr.bf16.mxu0 0
    %2573 = vmatpush1.bf16.msra.mxu0 %v189
    %2574 = vmatprep.subr.bf16.mxu0 0
    %2575 = vmatpush1.bf16.msra.mxu0 %v192
    %2576 = vmatprep.subr.bf16.mxu0 0
    %2577 = vmatpush1.bf16.msra.mxu0 0
    %2578 = vmatprep.subr.bf16.mxu0 0
    %2579 = vmatpush1.bf16.msra.mxu0 0
    %2580 = vmatprep.subr.bf16.mxu0 0
    %2581 = vmatpush1.bf16.msra.mxu0 0
    %2582 = vmatprep.subr.bf16.mxu0 0
    %2583 = vmatpush1.bf16.msra.mxu0 0
    %2584 = vmatprep.subr.bf16.mxu0 0
    %2585 = vmatpush1.bf16.msra.mxu0 0
    %2586 = vmatprep.subr.bf16.mxu0 0
    %2587 = vmatpush1.bf16.msra.mxu0 0
    %2588 = vmatprep.subr.bf16.mxu0 0
    %2589 = vmatpush1.bf16.msra.mxu0 0
    %2590 = vmatprep.subr.bf16.mxu0 0
    %2591 = vmatpush1.bf16.msra.mxu0 0
    %2592 = vmatprep.mubr.bf16.mxu0 0
    %2593 = vmatmul.mubr.bf16.gmra.mrb[0].mxu0 %v2518
    %v2594 = vpop.f32.mrb[0].mxu0
    %v2595 = vadd.f32 0.0, %v2594
    %v2596 = vpop.f32.mrb[0].mxu0
    %v2597 = vpop.f32.mrb[0].mxu0
    %v2598 = vpop.f32.mrb[0].mxu0
    %2599 = vdwg.mxu0
    %s2600 = scalar_lea.vmem [#allocation3], 50
    %v2601 = vld [vmem:[%s2600] ss:$8 sm:$0x7]
    %v2604 = vcombine.low %v2554, %v2556
    %v2606 = vunpack.c.l.s4 1966171168
    %v2607 = vunpack.c.0.s8 %v2606
    %v2608 = vlaneseq
    %v2609 = vshrl.u32 %v2608, 7
    %v2610 = vsub.s32 %v2607, %v2609
    %v2611 = vrot.slane %v2604, %v2610
    %v2613 = vunpack.c.l.s4 1966171168
    %v2614 = vunpack.c.0.s8 %v2613
    %v2615 = vlaneseq
    %v2616 = vshrl.u32 %v2615, 7
    %v2617 = vsub.s32 %v2614, %v2616
    %v2618 = vrot.slane %v2611, %v2617
    %v2620 = vadd.f32 %v2601, %v2618
    %v2621 = vxor.u32 %v2620, 2147483648
    %v2622 = vmul.f32 %v2621, 1.442695
    %v2623 = vpow.pop %v2622
    %v2624 = vadd.f32 %v2623, 1.0
    %v2625 = vrcp.pop %v2624
    %v2626 = vmul.f32 1.0, %v2625
    %v2627 = vadd.f32 %v2595, %v85
    %v2628 = vmul.f32 %v2626, %v2627
    %v2630 = vrot.slane %v2601, 2
    %v2632 = vadd.f32 %v2630, %v2628
    %v2633 = vtanh.pop %v2632
    %v2634 = vsub.f32 %v2517, %v2633
    %v2636 = vrot.slane %v2626, 1
    %v2638 = vmul.f32 %v2636, %v2634
    %v2639 = vadd.f32 %v2633, %v2638
    %s2640 = sadd.s32 %s87, 18
    %p2641 = scmp.lt.s32.totalorder %s2640, 8
    %s2642 = scalar_select %p2641, 1, 0
    %v2643 = vstv %s2642
    %vm2644 = vcmp.eq.s32.totalorder %v2643, 1
    %v2645 = vsel %vm2644, %v2639, %v2517
    %v2646 = vpack.c.bf16 %v2645, %v2645
    %2647 = vmatprep.subr.bf16.mxu0 %v170
    %2648 = vmatpush1.bf16.msra.mxu0 %v169
    %2649 = vmatprep.subr.bf16.mxu0 %v173
    %2650 = vmatpush1.bf16.msra.mxu0 %v172
    %2651 = vmatprep.subr.bf16.mxu0 %v176
    %2652 = vmatpush1.bf16.msra.mxu0 %v175
    %2653 = vmatprep.subr.bf16.mxu0 %v179
    %2654 = vmatpush1.bf16.msra.mxu0 %v178
    %2655 = vmatprep.subr.bf16.mxu0 %v182
    %2656 = vmatpush1.bf16.msra.mxu0 %v181
    %2657 = vmatprep.subr.bf16.mxu0 %v185
    %2658 = vmatpush1.bf16.msra.mxu0 %v184
    %2659 = vmatprep.subr.bf16.mxu0 %v188
    %2660 = vmatpush1.bf16.msra.mxu0 %v187
    %2661 = vmatprep.subr.bf16.mxu0 %v191
    %2662 = vmatpush1.bf16.msra.mxu0 %v190
    %2663 = vmatprep.subr.bf16.mxu0 0
    %2664 = vmatpush1.bf16.msra.mxu0 0
    %2665 = vmatprep.subr.bf16.mxu0 0
    %2666 = vmatpush1.bf16.msra.mxu0 0
    %2667 = vmatprep.subr.bf16.mxu0 0
    %2668 = vmatpush1.bf16.msra.mxu0 0
    %2669 = vmatprep.subr.bf16.mxu0 0
    %2670 = vmatpush1.bf16.msra.mxu0 0
    %2671 = vmatprep.subr.bf16.mxu0 0
    %2672 = vmatpush1.bf16.msra.mxu0 0
    %2673 = vmatprep.subr.bf16.mxu0 0
    %2674 = vmatpush1.bf16.msra.mxu0 0
    %2675 = vmatprep.subr.bf16.mxu0 0
    %2676 = vmatpush1.bf16.msra.mxu0 0
    %2677 = vmatprep.subr.bf16.mxu0 0
    %2678 = vmatpush1.bf16.msra.mxu0 0
    %2679 = vmatprep.mubr.bf16.mxu0 0
    %2680 = vmatmul.mubr.bf16.gmra.mrb[0].mxu0 %v2646
    %v2681 = vpop.f32.mrb[0].mxu0
    %v2682 = vadd.f32 0.0, %v2681
    %v2683 = vpop.f32.mrb[0].mxu0
    %v2684 = vadd.f32 0.0, %v2683
    %v2685 = vpop.f32.mrb[0].mxu0
    %v2686 = vpop.f32.mrb[0].mxu0
    %2687 = vdwg.mxu0
    %2688 = vmatprep.subr.bf16.mxu0 0
    %2689 = vmatpush1.bf16.msra.mxu0 %v171
    %2690 = vmatprep.subr.bf16.mxu0 0
    %2691 = vmatpush1.bf16.msra.mxu0 %v174
    %2692 = vmatprep.subr.bf16.mxu0 0
    %2693 = vmatpush1.bf16.msra.mxu0 %v177
    %2694 = vmatprep.subr.bf16.mxu0 0
    %2695 = vmatpush1.bf16.msra.mxu0 %v180
    %2696 = vmatprep.subr.bf16.mxu0 0
    %2697 = vmatpush1.bf16.msra.mxu0 %v183
    %2698 = vmatprep.subr.bf16.mxu0 0
    %2699 = vmatpush1.bf16.msra.mxu0 %v186
    %2700 = vmatprep.subr.bf16.mxu0 0
    %2701 = vmatpush1.bf16.msra.mxu0 %v189
    %2702 = vmatprep.subr.bf16.mxu0 0
    %2703 = vmatpush1.bf16.msra.mxu0 %v192
    %2704 = vmatprep.subr.bf16.mxu0 0
    %2705 = vmatpush1.bf16.msra.mxu0 0
    %2706 = vmatprep.subr.bf16.mxu0 0
    %2707 = vmatpush1.bf16.msra.mxu0 0
    %2708 = vmatprep.subr.bf16.mxu0 0
    %2709 = vmatpush1.bf16.msra.mxu0 0
    %2710 = vmatprep.subr.bf16.mxu0 0
    %2711 = vmatpush1.bf16.msra.mxu0 0
    %2712 = vmatprep.subr.bf16.mxu0 0
    %2713 = vmatpush1.bf16.msra.mxu0 0
    %2714 = vmatprep.subr.bf16.mxu0 0
    %2715 = vmatpush1.bf16.msra.mxu0 0
    %2716 = vmatprep.subr.bf16.mxu0 0
    %2717 = vmatpush1.bf16.msra.mxu0 0
    %2718 = vmatprep.subr.bf16.mxu0 0
    %2719 = vmatpush1.bf16.msra.mxu0 0
    %2720 = vmatprep.mubr.bf16.mxu0 0
    %2721 = vmatmul.mubr.bf16.gmra.mrb[0].mxu0 %v2646
    %v2722 = vpop.f32.mrb[0].mxu0
    %v2723 = vadd.f32 0.0, %v2722
    %v2724 = vpop.f32.mrb[0].mxu0
    %v2725 = vpop.f32.mrb[0].mxu0
    %v2726 = vpop.f32.mrb[0].mxu0
    %2727 = vdwg.mxu0
    %s2728 = scalar_lea.vmem [#allocation3], 51
    %v2729 = vld [vmem:[%s2728] ss:$8 sm:$0x7]
    %v2732 = vcombine.low %v2682, %v2684
    %v2734 = vunpack.c.l.s4 1966171168
    %v2735 = vunpack.c.0.s8 %v2734
    %v2736 = vlaneseq
    %v2737 = vshrl.u32 %v2736, 7
    %v2738 = vsub.s32 %v2735, %v2737
    %v2739 = vrot.slane %v2732, %v2738
    %v2741 = vunpack.c.l.s4 1966171168
    %v2742 = vunpack.c.0.s8 %v2741
    %v2743 = vlaneseq
    %v2744 = vshrl.u32 %v2743, 7
    %v2745 = vsub.s32 %v2742, %v2744
    %v2746 = vrot.slane %v2739, %v2745
    %v2748 = vadd.f32 %v2729, %v2746
    %v2749 = vxor.u32 %v2748, 2147483648
    %v2750 = vmul.f32 %v2749, 1.442695
    %v2751 = vpow.pop %v2750
    %v2752 = vadd.f32 %v2751, 1.0
    %v2753 = vrcp.pop %v2752
    %v2754 = vmul.f32 1.0, %v2753
    %v2755 = vadd.f32 %v2723, %v85
    %v2756 = vmul.f32 %v2754, %v2755
    %v2758 = vrot.slane %v2729, 2
    %v2760 = vadd.f32 %v2758, %v2756
    %v2761 = vtanh.pop %v2760
    %v2762 = vsub.f32 %v2645, %v2761
    %v2764 = vrot.slane %v2754, 1
    %v2766 = vmul.f32 %v2764, %v2762
    %v2767 = vadd.f32 %v2761, %v2766
    %s2768 = sadd.s32 %s87, 19
    %p2769 = scmp.lt.s32.totalorder %s2768, 8
    %s2770 = scalar_select %p2769, 1, 0
    %v2771 = vstv %s2770
    %vm2772 = vcmp.eq.s32.totalorder %v2771, 1
    %v2773 = vsel %vm2772, %v2767, %v2645
    %v2774 = vpack.c.bf16 %v2773, %v2773
    %2775 = vmatprep.subr.bf16.mxu0 %v170
    %2776 = vmatpush1.bf16.msra.mxu0 %v169
    %2777 = vmatprep.subr.bf16.mxu0 %v173
    %2778 = vmatpush1.bf16.msra.mxu0 %v172
    %2779 = vmatprep.subr.bf16.mxu0 %v176
    %2780 = vmatpush1.bf16.msra.mxu0 %v175
    %2781 = vmatprep.subr.bf16.mxu0 %v179
    %2782 = vmatpush1.bf16.msra.mxu0 %v178
    %2783 = vmatprep.subr.bf16.mxu0 %v182
    %2784 = vmatpush1.bf16.msra.mxu0 %v181
    %2785 = vmatprep.subr.bf16.mxu0 %v185
    %2786 = vmatpush1.bf16.msra.mxu0 %v184
    %2787 = vmatprep.subr.bf16.mxu0 %v188
    %2788 = vmatpush1.bf16.msra.mxu0 %v187
    %2789 = vmatprep.subr.bf16.mxu0 %v191
    %2790 = vmatpush1.bf16.msra.mxu0 %v190
    %2791 = vmatprep.subr.bf16.mxu0 0
    %2792 = vmatpush1.bf16.msra.mxu0 0
    %2793 = vmatprep.subr.bf16.mxu0 0
    %2794 = vmatpush1.bf16.msra.mxu0 0
    %2795 = vmatprep.subr.bf16.mxu0 0
    %2796 = vmatpush1.bf16.msra.mxu0 0
    %2797 = vmatprep.subr.bf16.mxu0 0
    %2798 = vmatpush1.bf16.msra.mxu0 0
    %2799 = vmatprep.subr.bf16.mxu0 0
    %2800 = vmatpush1.bf16.msra.mxu0 0
    %2801 = vmatprep.subr.bf16.mxu0 0
    %2802 = vmatpush1.bf16.msra.mxu0 0
    %2803 = vmatprep.subr.bf16.mxu0 0
    %2804 = vmatpush1.bf16.msra.mxu0 0
    %2805 = vmatprep.subr.bf16.mxu0 0
    %2806 = vmatpush1.bf16.msra.mxu0 0
    %2807 = vmatprep.mubr.bf16.mxu0 0
    %2808 = vmatmul.mubr.bf16.gmra.mrb[0].mxu0 %v2774
    %v2809 = vpop.f32.mrb[0].mxu0
    %v2810 = vadd.f32 0.0, %v2809
    %v2811 = vpop.f32.mrb[0].mxu0
    %v2812 = vadd.f32 0.0, %v2811
    %v2813 = vpop.f32.mrb[0].mxu0
    %v2814 = vpop.f32.mrb[0].mxu0
    %2815 = vdwg.mxu0
    %2816 = vmatprep.subr.bf16.mxu0 0
    %2817 = vmatpush1.bf16.msra.mxu0 %v171
    %2818 = vmatprep.subr.bf16.mxu0 0
    %2819 = vmatpush1.bf16.msra.mxu0 %v174
    %2820 = vmatprep.subr.bf16.mxu0 0
    %2821 = vmatpush1.bf16.msra.mxu0 %v177
    %2822 = vmatprep.subr.bf16.mxu0 0
    %2823 = vmatpush1.bf16.msra.mxu0 %v180
    %2824 = vmatprep.subr.bf16.mxu0 0
    %2825 = vmatpush1.bf16.msra.mxu0 %v183
    %2826 = vmatprep.subr.bf16.mxu0 0
    %2827 = vmatpush1.bf16.msra.mxu0 %v186
    %2828 = vmatprep.subr.bf16.mxu0 0
    %2829 = vmatpush1.bf16.msra.mxu0 %v189
    %2830 = vmatprep.subr.bf16.mxu0 0
    %2831 = vmatpush1.bf16.msra.mxu0 %v192
    %2832 = vmatprep.subr.bf16.mxu0 0
    %2833 = vmatpush1.bf16.msra.mxu0 0
    %2834 = vmatprep.subr.bf16.mxu0 0
    %2835 = vmatpush1.bf16.msra.mxu0 0
    %2836 = vmatprep.subr.bf16.mxu0 0
    %2837 = vmatpush1.bf16.msra.mxu0 0
    %2838 = vmatprep.subr.bf16.mxu0 0
    %2839 = vmatpush1.bf16.msra.mxu0 0
    %2840 = vmatprep.subr.bf16.mxu0 0
    %2841 = vmatpush1.bf16.msra.mxu0 0
    %2842 = vmatprep.subr.bf16.mxu0 0
    %2843 = vmatpush1.bf16.msra.mxu0 0
    %2844 = vmatprep.subr.bf16.mxu0 0
    %2845 = vmatpush1.bf16.msra.mxu0 0
    %2846 = vmatprep.subr.bf16.mxu0 0
    %2847 = vmatpush1.bf16.msra.mxu0 0
    %2848 = vmatprep.mubr.bf16.mxu0 0
    %2849 = vmatmul.mubr.bf16.gmra.mrb[0].mxu0 %v2774
    %v2850 = vpop.f32.mrb[0].mxu0
    %v2851 = vadd.f32 0.0, %v2850
    %v2852 = vpop.f32.mrb[0].mxu0
    %v2853 = vpop.f32.mrb[0].mxu0
    %v2854 = vpop.f32.mrb[0].mxu0
    %2855 = vdwg.mxu0
    %s2856 = scalar_lea.vmem [#allocation3], 52
    %v2857 = vld [vmem:[%s2856] ss:$8 sm:$0x7]
    %v2860 = vcombine.low %v2810, %v2812
    %v2862 = vunpack.c.l.s4 1966171168
    %v2863 = vunpack.c.0.s8 %v2862
    %v2864 = vlaneseq
    %v2865 = vshrl.u32 %v2864, 7
    %v2866 = vsub.s32 %v2863, %v2865
    %v2867 = vrot.slane %v2860, %v2866
    %v2869 = vunpack.c.l.s4 1966171168
    %v2870 = vunpack.c.0.s8 %v2869
    %v2871 = vlaneseq
    %v2872 = vshrl.u32 %v2871, 7
    %v2873 = vsub.s32 %v2870, %v2872
    %v2874 = vrot.slane %v2867, %v2873
    %v2876 = vadd.f32 %v2857, %v2874
    %v2877 = vxor.u32 %v2876, 2147483648
    %v2878 = vmul.f32 %v2877, 1.442695
    %v2879 = vpow.pop %v2878
    %v2880 = vadd.f32 %v2879, 1.0
    %v2881 = vrcp.pop %v2880
    %v2882 = vmul.f32 1.0, %v2881
    %v2883 = vadd.f32 %v2851, %v85
    %v2884 = vmul.f32 %v2882, %v2883
    %v2886 = vrot.slane %v2857, 2
    %v2888 = vadd.f32 %v2886, %v2884
    %v2889 = vtanh.pop %v2888
    %v2890 = vsub.f32 %v2773, %v2889
    %v2892 = vrot.slane %v2882, 1
    %v2894 = vmul.f32 %v2892, %v2890
    %v2895 = vadd.f32 %v2889, %v2894
    %s2896 = sadd.s32 %s87, 20
    %p2897 = scmp.lt.s32.totalorder %s2896, 8
    %s2898 = scalar_select %p2897, 1, 0
    %v2899 = vstv %s2898
    %vm2900 = vcmp.eq.s32.totalorder %v2899, 1
    %v2901 = vsel %vm2900, %v2895, %v2773
    %v2902 = vpack.c.bf16 %v2901, %v2901
    %2903 = vmatprep.subr.bf16.mxu0 %v170
    %2904 = vmatpush1.bf16.msra.mxu0 %v169
    %2905 = vmatprep.subr.bf16.mxu0 %v173
    %2906 = vmatpush1.bf16.msra.mxu0 %v172
    %2907 = vmatprep.subr.bf16.mxu0 %v176
    %2908 = vmatpush1.bf16.msra.mxu0 %v175
    %2909 = vmatprep.subr.bf16.mxu0 %v179
    %2910 = vmatpush1.bf16.msra.mxu0 %v178
    %2911 = vmatprep.subr.bf16.mxu0 %v182
    %2912 = vmatpush1.bf16.msra.mxu0 %v181
    %2913 = vmatprep.subr.bf16.mxu0 %v185
    %2914 = vmatpush1.bf16.msra.mxu0 %v184
    %2915 = vmatprep.subr.bf16.mxu0 %v188
    %2916 = vmatpush1.bf16.msra.mxu0 %v187
    %2917 = vmatprep.subr.bf16.mxu0 %v191
    %2918 = vmatpush1.bf16.msra.mxu0 %v190
    %2919 = vmatprep.subr.bf16.mxu0 0
    %2920 = vmatpush1.bf16.msra.mxu0 0
    %2921 = vmatprep.subr.bf16.mxu0 0
    %2922 = vmatpush1.bf16.msra.mxu0 0
    %2923 = vmatprep.subr.bf16.mxu0 0
    %2924 = vmatpush1.bf16.msra.mxu0 0
    %2925 = vmatprep.subr.bf16.mxu0 0
    %2926 = vmatpush1.bf16.msra.mxu0 0
    %2927 = vmatprep.subr.bf16.mxu0 0
    %2928 = vmatpush1.bf16.msra.mxu0 0
    %2929 = vmatprep.subr.bf16.mxu0 0
    %2930 = vmatpush1.bf16.msra.mxu0 0
    %2931 = vmatprep.subr.bf16.mxu0 0
    %2932 = vmatpush1.bf16.msra.mxu0 0
    %2933 = vmatprep.subr.bf16.mxu0 0
    %2934 = vmatpush1.bf16.msra.mxu0 0
    %2935 = vmatprep.mubr.bf16.mxu0 0
    %2936 = vmatmul.mubr.bf16.gmra.mrb[0].mxu0 %v2902
    %v2937 = vpop.f32.mrb[0].mxu0
    %v2938 = vadd.f32 0.0, %v2937
    %v2939 = vpop.f32.mrb[0].mxu0
    %v2940 = vadd.f32 0.0, %v2939
    %v2941 = vpop.f32.mrb[0].mxu0
    %v2942 = vpop.f32.mrb[0].mxu0
    %2943 = vdwg.mxu0
    %2944 = vmatprep.subr.bf16.mxu0 0
    %2945 = vmatpush1.bf16.msra.mxu0 %v171
    %2946 = vmatprep.subr.bf16.mxu0 0
    %2947 = vmatpush1.bf16.msra.mxu0 %v174
    %2948 = vmatprep.subr.bf16.mxu0 0
    %2949 = vmatpush1.bf16.msra.mxu0 %v177
    %2950 = vmatprep.subr.bf16.mxu0 0
    %2951 = vmatpush1.bf16.msra.mxu0 %v180
    %2952 = vmatprep.subr.bf16.mxu0 0
    %2953 = vmatpush1.bf16.msra.mxu0 %v183
    %2954 = vmatprep.subr.bf16.mxu0 0
    %2955 = vmatpush1.bf16.msra.mxu0 %v186
    %2956 = vmatprep.subr.bf16.mxu0 0
    %2957 = vmatpush1.bf16.msra.mxu0 %v189
    %2958 = vmatprep.subr.bf16.mxu0 0
    %2959 = vmatpush1.bf16.msra.mxu0 %v192
    %2960 = vmatprep.subr.bf16.mxu0 0
    %2961 = vmatpush1.bf16.msra.mxu0 0
    %2962 = vmatprep.subr.bf16.mxu0 0
    %2963 = vmatpush1.bf16.msra.mxu0 0
    %2964 = vmatprep.subr.bf16.mxu0 0
    %2965 = vmatpush1.bf16.msra.mxu0 0
    %2966 = vmatprep.subr.bf16.mxu0 0
    %2967 = vmatpush1.bf16.msra.mxu0 0
    %2968 = vmatprep.subr.bf16.mxu0 0
    %2969 = vmatpush1.bf16.msra.mxu0 0
    %2970 = vmatprep.subr.bf16.mxu0 0
    %2971 = vmatpush1.bf16.msra.mxu0 0
    %2972 = vmatprep.subr.bf16.mxu0 0
    %2973 = vmatpush1.bf16.msra.mxu0 0
    %2974 = vmatprep.subr.bf16.mxu0 0
    %2975 = vmatpush1.bf16.msra.mxu0 0
    %2976 = vmatprep.mubr.bf16.mxu0 0
    %2977 = vmatmul.mubr.bf16.gmra.mrb[0].mxu0 %v2902
    %v2978 = vpop.f32.mrb[0].mxu0
    %v2979 = vadd.f32 0.0, %v2978
    %v2980 = vpop.f32.mrb[0].mxu0
    %v2981 = vpop.f32.mrb[0].mxu0
    %v2982 = vpop.f32.mrb[0].mxu0
    %2983 = vdwg.mxu0
    %s2984 = scalar_lea.vmem [#allocation3], 53
    %v2985 = vld [vmem:[%s2984] ss:$8 sm:$0x7]
    %v2988 = vcombine.low %v2938, %v2940
    %v2990 = vunpack.c.l.s4 1966171168
    %v2991 = vunpack.c.0.s8 %v2990
    %v2992 = vlaneseq
    %v2993 = vshrl.u32 %v2992, 7
    %v2994 = vsub.s32 %v2991, %v2993
    %v2995 = vrot.slane %v2988, %v2994
    %v2997 = vunpack.c.l.s4 1966171168
    %v2998 = vunpack.c.0.s8 %v2997
    %v2999 = vlaneseq
    %v3000 = vshrl.u32 %v2999, 7
    %v3001 = vsub.s32 %v2998, %v3000
    %v3002 = vrot.slane %v2995, %v3001
    %v3004 = vadd.f32 %v2985, %v3002
    %v3005 = vxor.u32 %v3004, 2147483648
    %v3006 = vmul.f32 %v3005, 1.442695
    %v3007 = vpow.pop %v3006
    %v3008 = vadd.f32 %v3007, 1.0
    %v3009 = vrcp.pop %v3008
    %v3010 = vmul.f32 1.0, %v3009
    %v3011 = vadd.f32 %v2979, %v85
    %v3012 = vmul.f32 %v3010, %v3011
    %v3014 = vrot.slane %v2985, 2
    %v3016 = vadd.f32 %v3014, %v3012
    %v3017 = vtanh.pop %v3016
    %v3018 = vsub.f32 %v2901, %v3017
    %v3020 = vrot.slane %v3010, 1
    %v3022 = vmul.f32 %v3020, %v3018
    %v3023 = vadd.f32 %v3017, %v3022
    %s3024 = sadd.s32 %s87, 21
    %p3025 = scmp.lt.s32.totalorder %s3024, 8
    %s3026 = scalar_select %p3025, 1, 0
    %v3027 = vstv %s3026
    %vm3028 = vcmp.eq.s32.totalorder %v3027, 1
    %v3029 = vsel %vm3028, %v3023, %v2901
    %v3030 = vpack.c.bf16 %v3029, %v3029
    %3031 = vmatprep.subr.bf16.mxu0 %v170
    %3032 = vmatpush1.bf16.msra.mxu0 %v169
    %3033 = vmatprep.subr.bf16.mxu0 %v173
    %3034 = vmatpush1.bf16.msra.mxu0 %v172
    %3035 = vmatprep.subr.bf16.mxu0 %v176
    %3036 = vmatpush1.bf16.msra.mxu0 %v175
    %3037 = vmatprep.subr.bf16.mxu0 %v179
    %3038 = vmatpush1.bf16.msra.mxu0 %v178
    %3039 = vmatprep.subr.bf16.mxu0 %v182
    %3040 = vmatpush1.bf16.msra.mxu0 %v181
    %3041 = vmatprep.subr.bf16.mxu0 %v185
    %3042 = vmatpush1.bf16.msra.mxu0 %v184
    %3043 = vmatprep.subr.bf16.mxu0 %v188
    %3044 = vmatpush1.bf16.msra.mxu0 %v187
    %3045 = vmatprep.subr.bf16.mxu0 %v191
    %3046 = vmatpush1.bf16.msra.mxu0 %v190
    %3047 = vmatprep.subr.bf16.mxu0 0
    %3048 = vmatpush1.bf16.msra.mxu0 0
    %3049 = vmatprep.subr.bf16.mxu0 0
    %3050 = vmatpush1.bf16.msra.mxu0 0
    %3051 = vmatprep.subr.bf16.mxu0 0
    %3052 = vmatpush1.bf16.msra.mxu0 0
    %3053 = vmatprep.subr.bf16.mxu0 0
    %3054 = vmatpush1.bf16.msra.mxu0 0
    %3055 = vmatprep.subr.bf16.mxu0 0
    %3056 = vmatpush1.bf16.msra.mxu0 0
    %3057 = vmatprep.subr.bf16.mxu0 0
    %3058 = vmatpush1.bf16.msra.mxu0 0
    %3059 = vmatprep.subr.bf16.mxu0 0
    %3060 = vmatpush1.bf16.msra.mxu0 0
    %3061 = vmatprep.subr.bf16.mxu0 0
    %3062 = vmatpush1.bf16.msra.mxu0 0
    %3063 = vmatprep.mubr.bf16.mxu0 0
    %3064 = vmatmul.mubr.bf16.gmra.mrb[0].mxu0 %v3030
    %v3065 = vpop.f32.mrb[0].mxu0
    %v3066 = vadd.f32 0.0, %v3065
    %v3067 = vpop.f32.mrb[0].mxu0
    %v3068 = vadd.f32 0.0, %v3067
    %v3069 = vpop.f32.mrb[0].mxu0
    %v3070 = vpop.f32.mrb[0].mxu0
    %3071 = vdwg.mxu0
    %3072 = vmatprep.subr.bf16.mxu0 0
    %3073 = vmatpush1.bf16.msra.mxu0 %v171
    %3074 = vmatprep.subr.bf16.mxu0 0
    %3075 = vmatpush1.bf16.msra.mxu0 %v174
    %3076 = vmatprep.subr.bf16.mxu0 0
    %3077 = vmatpush1.bf16.msra.mxu0 %v177
    %3078 = vmatprep.subr.bf16.mxu0 0
    %3079 = vmatpush1.bf16.msra.mxu0 %v180
    %3080 = vmatprep.subr.bf16.mxu0 0
    %3081 = vmatpush1.bf16.msra.mxu0 %v183
    %3082 = vmatprep.subr.bf16.mxu0 0
    %3083 = vmatpush1.bf16.msra.mxu0 %v186
    %3084 = vmatprep.subr.bf16.mxu0 0
    %3085 = vmatpush1.bf16.msra.mxu0 %v189
    %3086 = vmatprep.subr.bf16.mxu0 0
    %3087 = vmatpush1.bf16.msra.mxu0 %v192
    %3088 = vmatprep.subr.bf16.mxu0 0
    %3089 = vmatpush1.bf16.msra.mxu0 0
    %3090 = vmatprep.subr.bf16.mxu0 0
    %3091 = vmatpush1.bf16.msra.mxu0 0
    %3092 = vmatprep.subr.bf16.mxu0 0
    %3093 = vmatpush1.bf16.msra.mxu0 0
    %3094 = vmatprep.subr.bf16.mxu0 0
    %3095 = vmatpush1.bf16.msra.mxu0 0
    %3096 = vmatprep.subr.bf16.mxu0 0
    %3097 = vmatpush1.bf16.msra.mxu0 0
    %3098 = vmatprep.subr.bf16.mxu0 0
    %3099 = vmatpush1.bf16.msra.mxu0 0
    %3100 = vmatprep.subr.bf16.mxu0 0
    %3101 = vmatpush1.bf16.msra.mxu0 0
    %3102 = vmatprep.subr.bf16.mxu0 0
    %3103 = vmatpush1.bf16.msra.mxu0 0
    %3104 = vmatprep.mubr.bf16.mxu0 0
    %3105 = vmatmul.mubr.bf16.gmra.mrb[0].mxu0 %v3030
    %v3106 = vpop.f32.mrb[0].mxu0
    %v3107 = vadd.f32 0.0, %v3106
    %v3108 = vpop.f32.mrb[0].mxu0
    %v3109 = vpop.f32.mrb[0].mxu0
    %v3110 = vpop.f32.mrb[0].mxu0
    %3111 = vdwg.mxu0
    %s3112 = scalar_lea.vmem [#allocation3], 54
    %v3113 = vld [vmem:[%s3112] ss:$8 sm:$0x7]
    %v3116 = vcombine.low %v3066, %v3068
    %v3118 = vunpack.c.l.s4 1966171168
    %v3119 = vunpack.c.0.s8 %v3118
    %v3120 = vlaneseq
    %v3121 = vshrl.u32 %v3120, 7
    %v3122 = vsub.s32 %v3119, %v3121
    %v3123 = vrot.slane %v3116, %v3122
    %v3125 = vunpack.c.l.s4 1966171168
    %v3126 = vunpack.c.0.s8 %v3125
    %v3127 = vlaneseq
    %v3128 = vshrl.u32 %v3127, 7
    %v3129 = vsub.s32 %v3126, %v3128
    %v3130 = vrot.slane %v3123, %v3129
    %v3132 = vadd.f32 %v3113, %v3130
    %v3133 = vxor.u32 %v3132, 2147483648
    %v3134 = vmul.f32 %v3133, 1.442695
    %v3135 = vpow.pop %v3134
    %v3136 = vadd.f32 %v3135, 1.0
    %v3137 = vrcp.pop %v3136
    %v3138 = vmul.f32 1.0, %v3137
    %v3139 = vadd.f32 %v3107, %v85
    %v3140 = vmul.f32 %v3138, %v3139
    %v3142 = vrot.slane %v3113, 2
    %v3144 = vadd.f32 %v3142, %v3140
    %v3145 = vtanh.pop %v3144
    %v3146 = vsub.f32 %v3029, %v3145
    %v3148 = vrot.slane %v3138, 1
    %v3150 = vmul.f32 %v3148, %v3146
    %v3151 = vadd.f32 %v3145, %v3150
    %s3152 = sadd.s32 %s87, 22
    %p3153 = scmp.lt.s32.totalorder %s3152, 8
    %s3154 = scalar_select %p3153, 1, 0
    %v3155 = vstv %s3154
    %vm3156 = vcmp.eq.s32.totalorder %v3155, 1
    %v3157 = vsel %vm3156, %v3151, %v3029
    %v3158 = vpack.c.bf16 %v3157, %v3157
    %3159 = vmatprep.subr.bf16.mxu0 %v170
    %3160 = vmatpush1.bf16.msra.mxu0 %v169
    %3161 = vmatprep.subr.bf16.mxu0 %v173
    %3162 = vmatpush1.bf16.msra.mxu0 %v172
    %3163 = vmatprep.subr.bf16.mxu0 %v176
    %3164 = vmatpush1.bf16.msra.mxu0 %v175
    %3165 = vmatprep.subr.bf16.mxu0 %v179
    %3166 = vmatpush1.bf16.msra.mxu0 %v178
    %3167 = vmatprep.subr.bf16.mxu0 %v182
    %3168 = vmatpush1.bf16.msra.mxu0 %v181
    %3169 = vmatprep.subr.bf16.mxu0 %v185
    %3170 = vmatpush1.bf16.msra.mxu0 %v184
    %3171 = vmatprep.subr.bf16.mxu0 %v188
    %3172 = vmatpush1.bf16.msra.mxu0 %v187
    %3173 = vmatprep.subr.bf16.mxu0 %v191
    %3174 = vmatpush1.bf16.msra.mxu0 %v190
    %3175 = vmatprep.subr.bf16.mxu0 0
    %3176 = vmatpush1.bf16.msra.mxu0 0
    %3177 = vmatprep.subr.bf16.mxu0 0
    %3178 = vmatpush1.bf16.msra.mxu0 0
    %3179 = vmatprep.subr.bf16.mxu0 0
    %3180 = vmatpush1.bf16.msra.mxu0 0
    %3181 = vmatprep.subr.bf16.mxu0 0
    %3182 = vmatpush1.bf16.msra.mxu0 0
    %3183 = vmatprep.subr.bf16.mxu0 0
    %3184 = vmatpush1.bf16.msra.mxu0 0
    %3185 = vmatprep.subr.bf16.mxu0 0
    %3186 = vmatpush1.bf16.msra.mxu0 0
    %3187 = vmatprep.subr.bf16.mxu0 0
    %3188 = vmatpush1.bf16.msra.mxu0 0
    %3189 = vmatprep.subr.bf16.mxu0 0
    %3190 = vmatpush1.bf16.msra.mxu0 0
    %3191 = vmatprep.mubr.bf16.mxu0 0
    %3192 = vmatmul.mubr.bf16.gmra.mrb[0].mxu0 %v3158
    %v3193 = vpop.f32.mrb[0].mxu0
    %v3194 = vadd.f32 0.0, %v3193
    %v3195 = vpop.f32.mrb[0].mxu0
    %v3196 = vadd.f32 0.0, %v3195
    %v3197 = vpop.f32.mrb[0].mxu0
    %v3198 = vpop.f32.mrb[0].mxu0
    %3199 = vdwg.mxu0
    %3200 = vmatprep.subr.bf16.mxu0 0
    %3201 = vmatpush1.bf16.msra.mxu0 %v171
    %3202 = vmatprep.subr.bf16.mxu0 0
    %3203 = vmatpush1.bf16.msra.mxu0 %v174
    %3204 = vmatprep.subr.bf16.mxu0 0
    %3205 = vmatpush1.bf16.msra.mxu0 %v177
    %3206 = vmatprep.subr.bf16.mxu0 0
    %3207 = vmatpush1.bf16.msra.mxu0 %v180
    %3208 = vmatprep.subr.bf16.mxu0 0
    %3209 = vmatpush1.bf16.msra.mxu0 %v183
    %3210 = vmatprep.subr.bf16.mxu0 0
    %3211 = vmatpush1.bf16.msra.mxu0 %v186
    %3212 = vmatprep.subr.bf16.mxu0 0
    %3213 = vmatpush1.bf16.msra.mxu0 %v189
    %3214 = vmatprep.subr.bf16.mxu0 0
    %3215 = vmatpush1.bf16.msra.mxu0 %v192
    %3216 = vmatprep.subr.bf16.mxu0 0
    %3217 = vmatpush1.bf16.msra.mxu0 0
    %3218 = vmatprep.subr.bf16.mxu0 0
    %3219 = vmatpush1.bf16.msra.mxu0 0
    %3220 = vmatprep.subr.bf16.mxu0 0
    %3221 = vmatpush1.bf16.msra.mxu0 0
    %3222 = vmatprep.subr.bf16.mxu0 0
    %3223 = vmatpush1.bf16.msra.mxu0 0
    %3224 = vmatprep.subr.bf16.mxu0 0
    %3225 = vmatpush1.bf16.msra.mxu0 0
    %3226 = vmatprep.subr.bf16.mxu0 0
    %3227 = vmatpush1.bf16.msra.mxu0 0
    %3228 = vmatprep.subr.bf16.mxu0 0
    %3229 = vmatpush1.bf16.msra.mxu0 0
    %3230 = vmatprep.subr.bf16.mxu0 0
    %3231 = vmatpush1.bf16.msra.mxu0 0
    %3232 = vmatprep.mubr.bf16.mxu0 0
    %3233 = vmatmul.mubr.bf16.gmra.mrb[0].mxu0 %v3158
    %v3234 = vpop.f32.mrb[0].mxu0
    %v3235 = vadd.f32 0.0, %v3234
    %v3236 = vpop.f32.mrb[0].mxu0
    %v3237 = vpop.f32.mrb[0].mxu0
    %v3238 = vpop.f32.mrb[0].mxu0
    %3239 = vdwg.mxu0
    %s3240 = scalar_lea.vmem [#allocation3], 55
    %v3241 = vld [vmem:[%s3240] ss:$8 sm:$0x7]
    %v3244 = vcombine.low %v3194, %v3196
    %v3246 = vunpack.c.l.s4 1966171168
    %v3247 = vunpack.c.0.s8 %v3246
    %v3248 = vlaneseq
    %v3249 = vshrl.u32 %v3248, 7
    %v3250 = vsub.s32 %v3247, %v3249
    %v3251 = vrot.slane %v3244, %v3250
    %v3253 = vunpack.c.l.s4 1966171168
    %v3254 = vunpack.c.0.s8 %v3253
    %v3255 = vlaneseq
    %v3256 = vshrl.u32 %v3255, 7
    %v3257 = vsub.s32 %v3254, %v3256
    %v3258 = vrot.slane %v3251, %v3257
    %v3260 = vadd.f32 %v3241, %v3258
    %v3261 = vxor.u32 %v3260, 2147483648
    %v3262 = vmul.f32 %v3261, 1.442695
    %v3263 = vpow.pop %v3262
    %v3264 = vadd.f32 %v3263, 1.0
    %v3265 = vrcp.pop %v3264
    %v3266 = vmul.f32 1.0, %v3265
    %v3267 = vadd.f32 %v3235, %v85
    %v3268 = vmul.f32 %v3266, %v3267
    %v3270 = vrot.slane %v3241, 2
    %v3272 = vadd.f32 %v3270, %v3268
    %v3273 = vtanh.pop %v3272
    %v3274 = vsub.f32 %v3157, %v3273
    %v3276 = vrot.slane %v3266, 1
    %v3278 = vmul.f32 %v3276, %v3274
    %v3279 = vadd.f32 %v3273, %v3278
    %s3280 = sadd.s32 %s87, 23
    %p3281 = scmp.lt.s32.totalorder %s3280, 8
    %s3282 = scalar_select %p3281, 1, 0
    %v3283 = vstv %s3282
    %vm3284 = vcmp.eq.s32.totalorder %v3283, 1
    %v3285 = vsel %vm3284, %v3279, %v3157
    %v3286 = vpack.c.bf16 %v3285, %v3285
    %3287 = vmatprep.subr.bf16.mxu0 %v170
    %3288 = vmatpush1.bf16.msra.mxu0 %v169
    %3289 = vmatprep.subr.bf16.mxu0 %v173
    %3290 = vmatpush1.bf16.msra.mxu0 %v172
    %3291 = vmatprep.subr.bf16.mxu0 %v176
    %3292 = vmatpush1.bf16.msra.mxu0 %v175
    %3293 = vmatprep.subr.bf16.mxu0 %v179
    %3294 = vmatpush1.bf16.msra.mxu0 %v178
    %3295 = vmatprep.subr.bf16.mxu0 %v182
    %3296 = vmatpush1.bf16.msra.mxu0 %v181
    %3297 = vmatprep.subr.bf16.mxu0 %v185
    %3298 = vmatpush1.bf16.msra.mxu0 %v184
    %3299 = vmatprep.subr.bf16.mxu0 %v188
    %3300 = vmatpush1.bf16.msra.mxu0 %v187
    %3301 = vmatprep.subr.bf16.mxu0 %v191
    %3302 = vmatpush1.bf16.msra.mxu0 %v190
    %3303 = vmatprep.subr.bf16.mxu0 0
    %3304 = vmatpush1.bf16.msra.mxu0 0
    %3305 = vmatprep.subr.bf16.mxu0 0
    %3306 = vmatpush1.bf16.msra.mxu0 0
    %3307 = vmatprep.subr.bf16.mxu0 0
    %3308 = vmatpush1.bf16.msra.mxu0 0
    %3309 = vmatprep.subr.bf16.mxu0 0
    %3310 = vmatpush1.bf16.msra.mxu0 0
    %3311 = vmatprep.subr.bf16.mxu0 0
    %3312 = vmatpush1.bf16.msra.mxu0 0
    %3313 = vmatprep.subr.bf16.mxu0 0
    %3314 = vmatpush1.bf16.msra.mxu0 0
    %3315 = vmatprep.subr.bf16.mxu0 0
    %3316 = vmatpush1.bf16.msra.mxu0 0
    %3317 = vmatprep.subr.bf16.mxu0 0
    %3318 = vmatpush1.bf16.msra.mxu0 0
    %3319 = vmatprep.mubr.bf16.mxu0 0
    %3320 = vmatmul.mubr.bf16.gmra.mrb[0].mxu0 %v3286
    %v3321 = vpop.f32.mrb[0].mxu0
    %v3322 = vadd.f32 0.0, %v3321
    %v3323 = vpop.f32.mrb[0].mxu0
    %v3324 = vadd.f32 0.0, %v3323
    %v3325 = vpop.f32.mrb[0].mxu0
    %v3326 = vpop.f32.mrb[0].mxu0
    %3327 = vdwg.mxu0
    %3328 = vmatprep.subr.bf16.mxu0 0
    %3329 = vmatpush1.bf16.msra.mxu0 %v171
    %3330 = vmatprep.subr.bf16.mxu0 0
    %3331 = vmatpush1.bf16.msra.mxu0 %v174
    %3332 = vmatprep.subr.bf16.mxu0 0
    %3333 = vmatpush1.bf16.msra.mxu0 %v177
    %3334 = vmatprep.subr.bf16.mxu0 0
    %3335 = vmatpush1.bf16.msra.mxu0 %v180
    %3336 = vmatprep.subr.bf16.mxu0 0
    %3337 = vmatpush1.bf16.msra.mxu0 %v183
    %3338 = vmatprep.subr.bf16.mxu0 0
    %3339 = vmatpush1.bf16.msra.mxu0 %v186
    %3340 = vmatprep.subr.bf16.mxu0 0
    %3341 = vmatpush1.bf16.msra.mxu0 %v189
    %3342 = vmatprep.subr.bf16.mxu0 0
    %3343 = vmatpush1.bf16.msra.mxu0 %v192
    %3344 = vmatprep.subr.bf16.mxu0 0
    %3345 = vmatpush1.bf16.msra.mxu0 0
    %3346 = vmatprep.subr.bf16.mxu0 0
    %3347 = vmatpush1.bf16.msra.mxu0 0
    %3348 = vmatprep.subr.bf16.mxu0 0
    %3349 = vmatpush1.bf16.msra.mxu0 0
    %3350 = vmatprep.subr.bf16.mxu0 0
    %3351 = vmatpush1.bf16.msra.mxu0 0
    %3352 = vmatprep.subr.bf16.mxu0 0
    %3353 = vmatpush1.bf16.msra.mxu0 0
    %3354 = vmatprep.subr.bf16.mxu0 0
    %3355 = vmatpush1.bf16.msra.mxu0 0
    %3356 = vmatprep.subr.bf16.mxu0 0
    %3357 = vmatpush1.bf16.msra.mxu0 0
    %3358 = vmatprep.subr.bf16.mxu0 0
    %3359 = vmatpush1.bf16.msra.mxu0 0
    %3360 = vmatprep.mubr.bf16.mxu0 0
    %3361 = vmatmul.mubr.bf16.gmra.mrb[0].mxu0 %v3286
    %v3362 = vpop.f32.mrb[0].mxu0
    %v3363 = vadd.f32 0.0, %v3362
    %v3364 = vpop.f32.mrb[0].mxu0
    %v3365 = vpop.f32.mrb[0].mxu0
    %v3366 = vpop.f32.mrb[0].mxu0
    %3367 = vdwg.mxu0
    %s3368 = scalar_lea.vmem [#allocation3], 72
    %v3369 = vld [vmem:[%s3368] ss:$8 sm:$0x7]
    %v3372 = vcombine.low %v3322, %v3324
    %v3374 = vunpack.c.l.s4 1966171168
    %v3375 = vunpack.c.0.s8 %v3374
    %v3376 = vlaneseq
    %v3377 = vshrl.u32 %v3376, 7
    %v3378 = vsub.s32 %v3375, %v3377
    %v3379 = vrot.slane %v3372, %v3378
    %v3381 = vunpack.c.l.s4 1966171168
    %v3382 = vunpack.c.0.s8 %v3381
    %v3383 = vlaneseq
    %v3384 = vshrl.u32 %v3383, 7
    %v3385 = vsub.s32 %v3382, %v3384
    %v3386 = vrot.slane %v3379, %v3385
    %v3388 = vadd.f32 %v3369, %v3386
    %v3389 = vxor.u32 %v3388, 2147483648
    %v3390 = vmul.f32 %v3389, 1.442695
    %v3391 = vpow.pop %v3390
    %v3392 = vadd.f32 %v3391, 1.0
    %v3393 = vrcp.pop %v3392
    %v3394 = vmul.f32 1.0, %v3393
    %v3395 = vadd.f32 %v3363, %v85
    %v3396 = vmul.f32 %v3394, %v3395
    %v3398 = vrot.slane %v3369, 2
    %v3400 = vadd.f32 %v3398, %v3396
    %v3401 = vtanh.pop %v3400
    %v3402 = vsub.f32 %v3285, %v3401
    %v3404 = vrot.slane %v3394, 1
    %v3406 = vmul.f32 %v3404, %v3402
    %v3407 = vadd.f32 %v3401, %v3406
    %s3408 = sadd.s32 %s87, 24
    %p3409 = scmp.lt.s32.totalorder %s3408, 8
    %s3410 = scalar_select %p3409, 1, 0
    %v3411 = vstv %s3410
    %vm3412 = vcmp.eq.s32.totalorder %v3411, 1
    %v3413 = vsel %vm3412, %v3407, %v3285
    %v3414 = vpack.c.bf16 %v3413, %v3413
    %3415 = vmatprep.subr.bf16.mxu0 %v170
    %3416 = vmatpush1.bf16.msra.mxu0 %v169
    %3417 = vmatprep.subr.bf16.mxu0 %v173
    %3418 = vmatpush1.bf16.msra.mxu0 %v172
    %3419 = vmatprep.subr.bf16.mxu0 %v176
    %3420 = vmatpush1.bf16.msra.mxu0 %v175
    %3421 = vmatprep.subr.bf16.mxu0 %v179
    %3422 = vmatpush1.bf16.msra.mxu0 %v178
    %3423 = vmatprep.subr.bf16.mxu0 %v182
    %3424 = vmatpush1.bf16.msra.mxu0 %v181
    %3425 = vmatprep.subr.bf16.mxu0 %v185
    %3426 = vmatpush1.bf16.msra.mxu0 %v184
    %3427 = vmatprep.subr.bf16.mxu0 %v188
    %3428 = vmatpush1.bf16.msra.mxu0 %v187
    %3429 = vmatprep.subr.bf16.mxu0 %v191
    %3430 = vmatpush1.bf16.msra.mxu0 %v190
    %3431 = vmatprep.subr.bf16.mxu0 0
    %3432 = vmatpush1.bf16.msra.mxu0 0
    %3433 = vmatprep.subr.bf16.mxu0 0
    %3434 = vmatpush1.bf16.msra.mxu0 0
    %3435 = vmatprep.subr.bf16.mxu0 0
    %3436 = vmatpush1.bf16.msra.mxu0 0
    %3437 = vmatprep.subr.bf16.mxu0 0
    %3438 = vmatpush1.bf16.msra.mxu0 0
    %3439 = vmatprep.subr.bf16.mxu0 0
    %3440 = vmatpush1.bf16.msra.mxu0 0
    %3441 = vmatprep.subr.bf16.mxu0 0
    %3442 = vmatpush1.bf16.msra.mxu0 0
    %3443 = vmatprep.subr.bf16.mxu0 0
    %3444 = vmatpush1.bf16.msra.mxu0 0
    %3445 = vmatprep.subr.bf16.mxu0 0
    %3446 = vmatpush1.bf16.msra.mxu0 0
    %3447 = vmatprep.mubr.bf16.mxu0 0
    %3448 = vmatmul.mubr.bf16.gmra.mrb[0].mxu0 %v3414
    %v3449 = vpop.f32.mrb[0].mxu0
    %v3450 = vadd.f32 0.0, %v3449
    %v3451 = vpop.f32.mrb[0].mxu0
    %v3452 = vadd.f32 0.0, %v3451
    %v3453 = vpop.f32.mrb[0].mxu0
    %v3454 = vpop.f32.mrb[0].mxu0
    %3455 = vdwg.mxu0
    %3456 = vmatprep.subr.bf16.mxu0 0
    %3457 = vmatpush1.bf16.msra.mxu0 %v171
    %3458 = vmatprep.subr.bf16.mxu0 0
    %3459 = vmatpush1.bf16.msra.mxu0 %v174
    %3460 = vmatprep.subr.bf16.mxu0 0
    %3461 = vmatpush1.bf16.msra.mxu0 %v177
    %3462 = vmatprep.subr.bf16.mxu0 0
    %3463 = vmatpush1.bf16.msra.mxu0 %v180
    %3464 = vmatprep.subr.bf16.mxu0 0
    %3465 = vmatpush1.bf16.msra.mxu0 %v183
    %3466 = vmatprep.subr.bf16.mxu0 0
    %3467 = vmatpush1.bf16.msra.mxu0 %v186
    %3468 = vmatprep.subr.bf16.mxu0 0
    %3469 = vmatpush1.bf16.msra.mxu0 %v189
    %3470 = vmatprep.subr.bf16.mxu0 0
    %3471 = vmatpush1.bf16.msra.mxu0 %v192
    %3472 = vmatprep.subr.bf16.mxu0 0
    %3473 = vmatpush1.bf16.msra.mxu0 0
    %3474 = vmatprep.subr.bf16.mxu0 0
    %3475 = vmatpush1.bf16.msra.mxu0 0
    %3476 = vmatprep.subr.bf16.mxu0 0
    %3477 = vmatpush1.bf16.msra.mxu0 0
    %3478 = vmatprep.subr.bf16.mxu0 0
    %3479 = vmatpush1.bf16.msra.mxu0 0
    %3480 = vmatprep.subr.bf16.mxu0 0
    %3481 = vmatpush1.bf16.msra.mxu0 0
    %3482 = vmatprep.subr.bf16.mxu0 0
    %3483 = vmatpush1.bf16.msra.mxu0 0
    %3484 = vmatprep.subr.bf16.mxu0 0
    %3485 = vmatpush1.bf16.msra.mxu0 0
    %3486 = vmatprep.subr.bf16.mxu0 0
    %3487 = vmatpush1.bf16.msra.mxu0 0
    %3488 = vmatprep.mubr.bf16.mxu0 0
    %3489 = vmatmul.mubr.bf16.gmra.mrb[0].mxu0 %v3414
    %v3490 = vpop.f32.mrb[0].mxu0
    %v3491 = vadd.f32 0.0, %v3490
    %v3492 = vpop.f32.mrb[0].mxu0
    %v3493 = vpop.f32.mrb[0].mxu0
    %v3494 = vpop.f32.mrb[0].mxu0
    %3495 = vdwg.mxu0
    %s3496 = scalar_lea.vmem [#allocation3], 73
    %v3497 = vld [vmem:[%s3496] ss:$8 sm:$0x7]
    %v3500 = vcombine.low %v3450, %v3452
    %v3502 = vunpack.c.l.s4 1966171168
    %v3503 = vunpack.c.0.s8 %v3502
    %v3504 = vlaneseq
    %v3505 = vshrl.u32 %v3504, 7
    %v3506 = vsub.s32 %v3503, %v3505
    %v3507 = vrot.slane %v3500, %v3506
    %v3509 = vunpack.c.l.s4 1966171168
    %v3510 = vunpack.c.0.s8 %v3509
    %v3511 = vlaneseq
    %v3512 = vshrl.u32 %v3511, 7
    %v3513 = vsub.s32 %v3510, %v3512
    %v3514 = vrot.slane %v3507, %v3513
    %v3516 = vadd.f32 %v3497, %v3514
    %v3517 = vxor.u32 %v3516, 2147483648
    %v3518 = vmul.f32 %v3517, 1.442695
    %v3519 = vpow.pop %v3518
    %v3520 = vadd.f32 %v3519, 1.0
    %v3521 = vrcp.pop %v3520
    %v3522 = vmul.f32 1.0, %v3521
    %v3523 = vadd.f32 %v3491, %v85
    %v3524 = vmul.f32 %v3522, %v3523
    %v3526 = vrot.slane %v3497, 2
    %v3528 = vadd.f32 %v3526, %v3524
    %v3529 = vtanh.pop %v3528
    %v3530 = vsub.f32 %v3413, %v3529
    %v3532 = vrot.slane %v3522, 1
    %v3534 = vmul.f32 %v3532, %v3530
    %v3535 = vadd.f32 %v3529, %v3534
    %s3536 = sadd.s32 %s87, 25
    %p3537 = scmp.lt.s32.totalorder %s3536, 8
    %s3538 = scalar_select %p3537, 1, 0
    %v3539 = vstv %s3538
    %vm3540 = vcmp.eq.s32.totalorder %v3539, 1
    %v3541 = vsel %vm3540, %v3535, %v3413
    %v3542 = vpack.c.bf16 %v3541, %v3541
    %3543 = vmatprep.subr.bf16.mxu0 %v170
    %3544 = vmatpush1.bf16.msra.mxu0 %v169
    %3545 = vmatprep.subr.bf16.mxu0 %v173
    %3546 = vmatpush1.bf16.msra.mxu0 %v172
    %3547 = vmatprep.subr.bf16.mxu0 %v176
    %3548 = vmatpush1.bf16.msra.mxu0 %v175
    %3549 = vmatprep.subr.bf16.mxu0 %v179
    %3550 = vmatpush1.bf16.msra.mxu0 %v178
    %3551 = vmatprep.subr.bf16.mxu0 %v182
    %3552 = vmatpush1.bf16.msra.mxu0 %v181
    %3553 = vmatprep.subr.bf16.mxu0 %v185
    %3554 = vmatpush1.bf16.msra.mxu0 %v184
    %3555 = vmatprep.subr.bf16.mxu0 %v188
    %3556 = vmatpush1.bf16.msra.mxu0 %v187
    %3557 = vmatprep.subr.bf16.mxu0 %v191
    %3558 = vmatpush1.bf16.msra.mxu0 %v190
    %3559 = vmatprep.subr.bf16.mxu0 0
    %3560 = vmatpush1.bf16.msra.mxu0 0
    %3561 = vmatprep.subr.bf16.mxu0 0
    %3562 = vmatpush1.bf16.msra.mxu0 0
    %3563 = vmatprep.subr.bf16.mxu0 0
    %3564 = vmatpush1.bf16.msra.mxu0 0
    %3565 = vmatprep.subr.bf16.mxu0 0
    %3566 = vmatpush1.bf16.msra.mxu0 0
    %3567 = vmatprep.subr.bf16.mxu0 0
    %3568 = vmatpush1.bf16.msra.mxu0 0
    %3569 = vmatprep.subr.bf16.mxu0 0
    %3570 = vmatpush1.bf16.msra.mxu0 0
    %3571 = vmatprep.subr.bf16.mxu0 0
    %3572 = vmatpush1.bf16.msra.mxu0 0
    %3573 = vmatprep.subr.bf16.mxu0 0
    %3574 = vmatpush1.bf16.msra.mxu0 0
    %3575 = vmatprep.mubr.bf16.mxu0 0
    %3576 = vmatmul.mubr.bf16.gmra.mrb[0].mxu0 %v3542
    %v3577 = vpop.f32.mrb[0].mxu0
    %v3578 = vadd.f32 0.0, %v3577
    %v3579 = vpop.f32.mrb[0].mxu0
    %v3580 = vadd.f32 0.0, %v3579
    %v3581 = vpop.f32.mrb[0].mxu0
    %v3582 = vpop.f32.mrb[0].mxu0
    %3583 = vdwg.mxu0
    %3584 = vmatprep.subr.bf16.mxu0 0
    %3585 = vmatpush1.bf16.msra.mxu0 %v171
    %3586 = vmatprep.subr.bf16.mxu0 0
    %3587 = vmatpush1.bf16.msra.mxu0 %v174
    %3588 = vmatprep.subr.bf16.mxu0 0
    %3589 = vmatpush1.bf16.msra.mxu0 %v177
    %3590 = vmatprep.subr.bf16.mxu0 0
    %3591 = vmatpush1.bf16.msra.mxu0 %v180
    %3592 = vmatprep.subr.bf16.mxu0 0
    %3593 = vmatpush1.bf16.msra.mxu0 %v183
    %3594 = vmatprep.subr.bf16.mxu0 0
    %3595 = vmatpush1.bf16.msra.mxu0 %v186
    %3596 = vmatprep.subr.bf16.mxu0 0
    %3597 = vmatpush1.bf16.msra.mxu0 %v189
    %3598 = vmatprep.subr.bf16.mxu0 0
    %3599 = vmatpush1.bf16.msra.mxu0 %v192
    %3600 = vmatprep.subr.bf16.mxu0 0
    %3601 = vmatpush1.bf16.msra.mxu0 0
    %3602 = vmatprep.subr.bf16.mxu0 0
    %3603 = vmatpush1.bf16.msra.mxu0 0
    %3604 = vmatprep.subr.bf16.mxu0 0
    %3605 = vmatpush1.bf16.msra.mxu0 0
    %3606 = vmatprep.subr.bf16.mxu0 0
    %3607 = vmatpush1.bf16.msra.mxu0 0
    %3608 = vmatprep.subr.bf16.mxu0 0
    %3609 = vmatpush1.bf16.msra.mxu0 0
    %3610 = vmatprep.subr.bf16.mxu0 0
    %3611 = vmatpush1.bf16.msra.mxu0 0
    %3612 = vmatprep.subr.bf16.mxu0 0
    %3613 = vmatpush1.bf16.msra.mxu0 0
    %3614 = vmatprep.subr.bf16.mxu0 0
    %3615 = vmatpush1.bf16.msra.mxu0 0
    %3616 = vmatprep.mubr.bf16.mxu0 0
    %3617 = vmatmul.mubr.bf16.gmra.mrb[0].mxu0 %v3542
    %v3618 = vpop.f32.mrb[0].mxu0
    %v3619 = vadd.f32 0.0, %v3618
    %v3620 = vpop.f32.mrb[0].mxu0
    %v3621 = vpop.f32.mrb[0].mxu0
    %v3622 = vpop.f32.mrb[0].mxu0
    %3623 = vdwg.mxu0
    %s3624 = scalar_lea.vmem [#allocation3], 74
    %v3625 = vld [vmem:[%s3624] ss:$8 sm:$0x7]
    %v3628 = vcombine.low %v3578, %v3580
    %v3630 = vunpack.c.l.s4 1966171168
    %v3631 = vunpack.c.0.s8 %v3630
    %v3632 = vlaneseq
    %v3633 = vshrl.u32 %v3632, 7
    %v3634 = vsub.s32 %v3631, %v3633
    %v3635 = vrot.slane %v3628, %v3634
    %v3637 = vunpack.c.l.s4 1966171168
    %v3638 = vunpack.c.0.s8 %v3637
    %v3639 = vlaneseq
    %v3640 = vshrl.u32 %v3639, 7
    %v3641 = vsub.s32 %v3638, %v3640
    %v3642 = vrot.slane %v3635, %v3641
    %v3644 = vadd.f32 %v3625, %v3642
    %v3645 = vxor.u32 %v3644, 2147483648
    %v3646 = vmul.f32 %v3645, 1.442695
    %v3647 = vpow.pop %v3646
    %v3648 = vadd.f32 %v3647, 1.0
    %v3649 = vrcp.pop %v3648
    %v3650 = vmul.f32 1.0, %v3649
    %v3651 = vadd.f32 %v3619, %v85
    %v3652 = vmul.f32 %v3650, %v3651
    %v3654 = vrot.slane %v3625, 2
    %v3656 = vadd.f32 %v3654, %v3652
    %v3657 = vtanh.pop %v3656
    %v3658 = vsub.f32 %v3541, %v3657
    %v3660 = vrot.slane %v3650, 1
    %v3662 = vmul.f32 %v3660, %v3658
    %v3663 = vadd.f32 %v3657, %v3662
    %s3664 = sadd.s32 %s87, 26
    %p3665 = scmp.lt.s32.totalorder %s3664, 8
    %s3666 = scalar_select %p3665, 1, 0
    %v3667 = vstv %s3666
    %vm3668 = vcmp.eq.s32.totalorder %v3667, 1
    %v3669 = vsel %vm3668, %v3663, %v3541
    %v3670 = vpack.c.bf16 %v3669, %v3669
    %3671 = vmatprep.subr.bf16.mxu0 %v170
    %3672 = vmatpush1.bf16.msra.mxu0 %v169
    %3673 = vmatprep.subr.bf16.mxu0 %v173
    %3674 = vmatpush1.bf16.msra.mxu0 %v172
    %3675 = vmatprep.subr.bf16.mxu0 %v176
    %3676 = vmatpush1.bf16.msra.mxu0 %v175
    %3677 = vmatprep.subr.bf16.mxu0 %v179
    %3678 = vmatpush1.bf16.msra.mxu0 %v178
    %3679 = vmatprep.subr.bf16.mxu0 %v182
    %3680 = vmatpush1.bf16.msra.mxu0 %v181
    %3681 = vmatprep.subr.bf16.mxu0 %v185
    %3682 = vmatpush1.bf16.msra.mxu0 %v184
    %3683 = vmatprep.subr.bf16.mxu0 %v188
    %3684 = vmatpush1.bf16.msra.mxu0 %v187
    %3685 = vmatprep.subr.bf16.mxu0 %v191
    %3686 = vmatpush1.bf16.msra.mxu0 %v190
    %3687 = vmatprep.subr.bf16.mxu0 0
    %3688 = vmatpush1.bf16.msra.mxu0 0
    %3689 = vmatprep.subr.bf16.mxu0 0
    %3690 = vmatpush1.bf16.msra.mxu0 0
    %3691 = vmatprep.subr.bf16.mxu0 0
    %3692 = vmatpush1.bf16.msra.mxu0 0
    %3693 = vmatprep.subr.bf16.mxu0 0
    %3694 = vmatpush1.bf16.msra.mxu0 0
    %3695 = vmatprep.subr.bf16.mxu0 0
    %3696 = vmatpush1.bf16.msra.mxu0 0
    %3697 = vmatprep.subr.bf16.mxu0 0
    %3698 = vmatpush1.bf16.msra.mxu0 0
    %3699 = vmatprep.subr.bf16.mxu0 0
    %3700 = vmatpush1.bf16.msra.mxu0 0
    %3701 = vmatprep.subr.bf16.mxu0 0
    %3702 = vmatpush1.bf16.msra.mxu0 0
    %3703 = vmatprep.mubr.bf16.mxu0 0
    %3704 = vmatmul.mubr.bf16.gmra.mrb[0].mxu0 %v3670
    %v3705 = vpop.f32.mrb[0].mxu0
    %v3706 = vadd.f32 0.0, %v3705
    %v3707 = vpop.f32.mrb[0].mxu0
    %v3708 = vadd.f32 0.0, %v3707
    %v3709 = vpop.f32.mrb[0].mxu0
    %v3710 = vpop.f32.mrb[0].mxu0
    %3711 = vdwg.mxu0
    %3712 = vmatprep.subr.bf16.mxu0 0
    %3713 = vmatpush1.bf16.msra.mxu0 %v171
    %3714 = vmatprep.subr.bf16.mxu0 0
    %3715 = vmatpush1.bf16.msra.mxu0 %v174
    %3716 = vmatprep.subr.bf16.mxu0 0
    %3717 = vmatpush1.bf16.msra.mxu0 %v177
    %3718 = vmatprep.subr.bf16.mxu0 0
    %3719 = vmatpush1.bf16.msra.mxu0 %v180
    %3720 = vmatprep.subr.bf16.mxu0 0
    %3721 = vmatpush1.bf16.msra.mxu0 %v183
    %3722 = vmatprep.subr.bf16.mxu0 0
    %3723 = vmatpush1.bf16.msra.mxu0 %v186
    %3724 = vmatprep.subr.bf16.mxu0 0
    %3725 = vmatpush1.bf16.msra.mxu0 %v189
    %3726 = vmatprep.subr.bf16.mxu0 0
    %3727 = vmatpush1.bf16.msra.mxu0 %v192
    %3728 = vmatprep.subr.bf16.mxu0 0
    %3729 = vmatpush1.bf16.msra.mxu0 0
    %3730 = vmatprep.subr.bf16.mxu0 0
    %3731 = vmatpush1.bf16.msra.mxu0 0
    %3732 = vmatprep.subr.bf16.mxu0 0
    %3733 = vmatpush1.bf16.msra.mxu0 0
    %3734 = vmatprep.subr.bf16.mxu0 0
    %3735 = vmatpush1.bf16.msra.mxu0 0
    %3736 = vmatprep.subr.bf16.mxu0 0
    %3737 = vmatpush1.bf16.msra.mxu0 0
    %3738 = vmatprep.subr.bf16.mxu0 0
    %3739 = vmatpush1.bf16.msra.mxu0 0
    %3740 = vmatprep.subr.bf16.mxu0 0
    %3741 = vmatpush1.bf16.msra.mxu0 0
    %3742 = vmatprep.subr.bf16.mxu0 0
    %3743 = vmatpush1.bf16.msra.mxu0 0
    %3744 = vmatprep.mubr.bf16.mxu0 0
    %3745 = vmatmul.mubr.bf16.gmra.mrb[0].mxu0 %v3670
    %v3746 = vpop.f32.mrb[0].mxu0
    %v3747 = vadd.f32 0.0, %v3746
    %v3748 = vpop.f32.mrb[0].mxu0
    %v3749 = vpop.f32.mrb[0].mxu0
    %v3750 = vpop.f32.mrb[0].mxu0
    %3751 = vdwg.mxu0
    %s3752 = scalar_lea.vmem [#allocation3], 75
    %v3753 = vld [vmem:[%s3752] ss:$8 sm:$0x7]
    %v3756 = vcombine.low %v3706, %v3708
    %v3758 = vunpack.c.l.s4 1966171168
    %v3759 = vunpack.c.0.s8 %v3758
    %v3760 = vlaneseq
    %v3761 = vshrl.u32 %v3760, 7
    %v3762 = vsub.s32 %v3759, %v3761
    %v3763 = vrot.slane %v3756, %v3762
    %v3765 = vunpack.c.l.s4 1966171168
    %v3766 = vunpack.c.0.s8 %v3765
    %v3767 = vlaneseq
    %v3768 = vshrl.u32 %v3767, 7
    %v3769 = vsub.s32 %v3766, %v3768
    %v3770 = vrot.slane %v3763, %v3769
    %v3772 = vadd.f32 %v3753, %v3770
    %v3773 = vxor.u32 %v3772, 2147483648
    %v3774 = vmul.f32 %v3773, 1.442695
    %v3775 = vpow.pop %v3774
    %v3776 = vadd.f32 %v3775, 1.0
    %v3777 = vrcp.pop %v3776
    %v3778 = vmul.f32 1.0, %v3777
    %v3779 = vadd.f32 %v3747, %v85
    %v3780 = vmul.f32 %v3778, %v3779
    %v3782 = vrot.slane %v3753, 2
    %v3784 = vadd.f32 %v3782, %v3780
    %v3785 = vtanh.pop %v3784
    %v3786 = vsub.f32 %v3669, %v3785
    %v3788 = vrot.slane %v3778, 1
    %v3790 = vmul.f32 %v3788, %v3786
    %v3791 = vadd.f32 %v3785, %v3790
    %s3792 = sadd.s32 %s87, 27
    %p3793 = scmp.lt.s32.totalorder %s3792, 8
    %s3794 = scalar_select %p3793, 1, 0
    %v3795 = vstv %s3794
    %vm3796 = vcmp.eq.s32.totalorder %v3795, 1
    %v3797 = vsel %vm3796, %v3791, %v3669
    %v3798 = vpack.c.bf16 %v3797, %v3797
    %3799 = vmatprep.subr.bf16.mxu0 %v170
    %3800 = vmatpush1.bf16.msra.mxu0 %v169
    %3801 = vmatprep.subr.bf16.mxu0 %v173
    %3802 = vmatpush1.bf16.msra.mxu0 %v172
    %3803 = vmatprep.subr.bf16.mxu0 %v176
    %3804 = vmatpush1.bf16.msra.mxu0 %v175
    %3805 = vmatprep.subr.bf16.mxu0 %v179
    %3806 = vmatpush1.bf16.msra.mxu0 %v178
    %3807 = vmatprep.subr.bf16.mxu0 %v182
    %3808 = vmatpush1.bf16.msra.mxu0 %v181
    %3809 = vmatprep.subr.bf16.mxu0 %v185
    %3810 = vmatpush1.bf16.msra.mxu0 %v184
    %3811 = vmatprep.subr.bf16.mxu0 %v188
    %3812 = vmatpush1.bf16.msra.mxu0 %v187
    %3813 = vmatprep.subr.bf16.mxu0 %v191
    %3814 = vmatpush1.bf16.msra.mxu0 %v190
    %3815 = vmatprep.subr.bf16.mxu0 0
    %3816 = vmatpush1.bf16.msra.mxu0 0
    %3817 = vmatprep.subr.bf16.mxu0 0
    %3818 = vmatpush1.bf16.msra.mxu0 0
    %3819 = vmatprep.subr.bf16.mxu0 0
    %3820 = vmatpush1.bf16.msra.mxu0 0
    %3821 = vmatprep.subr.bf16.mxu0 0
    %3822 = vmatpush1.bf16.msra.mxu0 0
    %3823 = vmatprep.subr.bf16.mxu0 0
    %3824 = vmatpush1.bf16.msra.mxu0 0
    %3825 = vmatprep.subr.bf16.mxu0 0
    %3826 = vmatpush1.bf16.msra.mxu0 0
    %3827 = vmatprep.subr.bf16.mxu0 0
    %3828 = vmatpush1.bf16.msra.mxu0 0
    %3829 = vmatprep.subr.bf16.mxu0 0
    %3830 = vmatpush1.bf16.msra.mxu0 0
    %3831 = vmatprep.mubr.bf16.mxu0 0
    %3832 = vmatmul.mubr.bf16.gmra.mrb[0].mxu0 %v3798
    %v3833 = vpop.f32.mrb[0].mxu0
    %v3834 = vadd.f32 0.0, %v3833
    %v3835 = vpop.f32.mrb[0].mxu0
    %v3836 = vadd.f32 0.0, %v3835
    %v3837 = vpop.f32.mrb[0].mxu0
    %v3838 = vpop.f32.mrb[0].mxu0
    %3839 = vdwg.mxu0
    %3840 = vmatprep.subr.bf16.mxu0 0
    %3841 = vmatpush1.bf16.msra.mxu0 %v171
    %3842 = vmatprep.subr.bf16.mxu0 0
    %3843 = vmatpush1.bf16.msra.mxu0 %v174
    %3844 = vmatprep.subr.bf16.mxu0 0
    %3845 = vmatpush1.bf16.msra.mxu0 %v177
    %3846 = vmatprep.subr.bf16.mxu0 0
    %3847 = vmatpush1.bf16.msra.mxu0 %v180
    %3848 = vmatprep.subr.bf16.mxu0 0
    %3849 = vmatpush1.bf16.msra.mxu0 %v183
    %3850 = vmatprep.subr.bf16.mxu0 0
    %3851 = vmatpush1.bf16.msra.mxu0 %v186
    %3852 = vmatprep.subr.bf16.mxu0 0
    %3853 = vmatpush1.bf16.msra.mxu0 %v189
    %3854 = vmatprep.subr.bf16.mxu0 0
    %3855 = vmatpush1.bf16.msra.mxu0 %v192
    %3856 = vmatprep.subr.bf16.mxu0 0
    %3857 = vmatpush1.bf16.msra.mxu0 0
    %3858 = vmatprep.subr.bf16.mxu0 0
    %3859 = vmatpush1.bf16.msra.mxu0 0
    %3860 = vmatprep.subr.bf16.mxu0 0
    %3861 = vmatpush1.bf16.msra.mxu0 0
    %3862 = vmatprep.subr.bf16.mxu0 0
    %3863 = vmatpush1.bf16.msra.mxu0 0
    %3864 = vmatprep.subr.bf16.mxu0 0
    %3865 = vmatpush1.bf16.msra.mxu0 0
    %3866 = vmatprep.subr.bf16.mxu0 0
    %3867 = vmatpush1.bf16.msra.mxu0 0
    %3868 = vmatprep.subr.bf16.mxu0 0
    %3869 = vmatpush1.bf16.msra.mxu0 0
    %3870 = vmatprep.subr.bf16.mxu0 0
    %3871 = vmatpush1.bf16.msra.mxu0 0
    %3872 = vmatprep.mubr.bf16.mxu0 0
    %3873 = vmatmul.mubr.bf16.gmra.mrb[0].mxu0 %v3798
    %v3874 = vpop.f32.mrb[0].mxu0
    %v3875 = vadd.f32 0.0, %v3874
    %v3876 = vpop.f32.mrb[0].mxu0
    %v3877 = vpop.f32.mrb[0].mxu0
    %v3878 = vpop.f32.mrb[0].mxu0
    %3879 = vdwg.mxu0
    %s3880 = scalar_lea.vmem [#allocation3], 76
    %v3881 = vld [vmem:[%s3880] ss:$8 sm:$0x7]
    %v3884 = vcombine.low %v3834, %v3836
    %v3886 = vunpack.c.l.s4 1966171168
    %v3887 = vunpack.c.0.s8 %v3886
    %v3888 = vlaneseq
    %v3889 = vshrl.u32 %v3888, 7
    %v3890 = vsub.s32 %v3887, %v3889
    %v3891 = vrot.slane %v3884, %v3890
    %v3893 = vunpack.c.l.s4 1966171168
    %v3894 = vunpack.c.0.s8 %v3893
    %v3895 = vlaneseq
    %v3896 = vshrl.u32 %v3895, 7
    %v3897 = vsub.s32 %v3894, %v3896
    %v3898 = vrot.slane %v3891, %v3897
    %v3900 = vadd.f32 %v3881, %v3898
    %v3901 = vxor.u32 %v3900, 2147483648
    %v3902 = vmul.f32 %v3901, 1.442695
    %v3903 = vpow.pop %v3902
    %v3904 = vadd.f32 %v3903, 1.0
    %v3905 = vrcp.pop %v3904
    %v3906 = vmul.f32 1.0, %v3905
    %v3907 = vadd.f32 %v3875, %v85
    %v3908 = vmul.f32 %v3906, %v3907
    %v3910 = vrot.slane %v3881, 2
    %v3912 = vadd.f32 %v3910, %v3908
    %v3913 = vtanh.pop %v3912
    %v3914 = vsub.f32 %v3797, %v3913
    %v3916 = vrot.slane %v3906, 1
    %v3918 = vmul.f32 %v3916, %v3914
    %v3919 = vadd.f32 %v3913, %v3918
    %s3920 = sadd.s32 %s87, 28
    %p3921 = scmp.lt.s32.totalorder %s3920, 8
    %s3922 = scalar_select %p3921, 1, 0
    %v3923 = vstv %s3922
    %vm3924 = vcmp.eq.s32.totalorder %v3923, 1
    %v3925 = vsel %vm3924, %v3919, %v3797
    %v3926 = vpack.c.bf16 %v3925, %v3925
    %3927 = vmatprep.subr.bf16.mxu0 %v170
    %3928 = vmatpush1.bf16.msra.mxu0 %v169
    %3929 = vmatprep.subr.bf16.mxu0 %v173
    %3930 = vmatpush1.bf16.msra.mxu0 %v172
    %3931 = vmatprep.subr.bf16.mxu0 %v176
    %3932 = vmatpush1.bf16.msra.mxu0 %v175
    %3933 = vmatprep.subr.bf16.mxu0 %v179
    %3934 = vmatpush1.bf16.msra.mxu0 %v178
    %3935 = vmatprep.subr.bf16.mxu0 %v182
    %3936 = vmatpush1.bf16.msra.mxu0 %v181
    %3937 = vmatprep.subr.bf16.mxu0 %v185
    %3938 = vmatpush1.bf16.msra.mxu0 %v184
    %3939 = vmatprep.subr.bf16.mxu0 %v188
    %3940 = vmatpush1.bf16.msra.mxu0 %v187
    %3941 = vmatprep.subr.bf16.mxu0 %v191
    %3942 = vmatpush1.bf16.msra.mxu0 %v190
    %3943 = vmatprep.subr.bf16.mxu0 0
    %3944 = vmatpush1.bf16.msra.mxu0 0
    %3945 = vmatprep.subr.bf16.mxu0 0
    %3946 = vmatpush1.bf16.msra.mxu0 0
    %3947 = vmatprep.subr.bf16.mxu0 0
    %3948 = vmatpush1.bf16.msra.mxu0 0
    %3949 = vmatprep.subr.bf16.mxu0 0
    %3950 = vmatpush1.bf16.msra.mxu0 0
    %3951 = vmatprep.subr.bf16.mxu0 0
    %3952 = vmatpush1.bf16.msra.mxu0 0
    %3953 = vmatprep.subr.bf16.mxu0 0
    %3954 = vmatpush1.bf16.msra.mxu0 0
    %3955 = vmatprep.subr.bf16.mxu0 0
    %3956 = vmatpush1.bf16.msra.mxu0 0
    %3957 = vmatprep.subr.bf16.mxu0 0
    %3958 = vmatpush1.bf16.msra.mxu0 0
    %3959 = vmatprep.mubr.bf16.mxu0 0
    %3960 = vmatmul.mubr.bf16.gmra.mrb[0].mxu0 %v3926
    %v3961 = vpop.f32.mrb[0].mxu0
    %v3962 = vadd.f32 0.0, %v3961
    %v3963 = vpop.f32.mrb[0].mxu0
    %v3964 = vadd.f32 0.0, %v3963
    %v3965 = vpop.f32.mrb[0].mxu0
    %v3966 = vpop.f32.mrb[0].mxu0
    %3967 = vdwg.mxu0
    %3968 = vmatprep.subr.bf16.mxu0 0
    %3969 = vmatpush1.bf16.msra.mxu0 %v171
    %3970 = vmatprep.subr.bf16.mxu0 0
    %3971 = vmatpush1.bf16.msra.mxu0 %v174
    %3972 = vmatprep.subr.bf16.mxu0 0
    %3973 = vmatpush1.bf16.msra.mxu0 %v177
    %3974 = vmatprep.subr.bf16.mxu0 0
    %3975 = vmatpush1.bf16.msra.mxu0 %v180
    %3976 = vmatprep.subr.bf16.mxu0 0
    %3977 = vmatpush1.bf16.msra.mxu0 %v183
    %3978 = vmatprep.subr.bf16.mxu0 0
    %3979 = vmatpush1.bf16.msra.mxu0 %v186
    %3980 = vmatprep.subr.bf16.mxu0 0
    %3981 = vmatpush1.bf16.msra.mxu0 %v189
    %3982 = vmatprep.subr.bf16.mxu0 0
    %3983 = vmatpush1.bf16.msra.mxu0 %v192
    %3984 = vmatprep.subr.bf16.mxu0 0
    %3985 = vmatpush1.bf16.msra.mxu0 0
    %3986 = vmatprep.subr.bf16.mxu0 0
    %3987 = vmatpush1.bf16.msra.mxu0 0
    %3988 = vmatprep.subr.bf16.mxu0 0
    %3989 = vmatpush1.bf16.msra.mxu0 0
    %3990 = vmatprep.subr.bf16.mxu0 0
    %3991 = vmatpush1.bf16.msra.mxu0 0
    %3992 = vmatprep.subr.bf16.mxu0 0
    %3993 = vmatpush1.bf16.msra.mxu0 0
    %3994 = vmatprep.subr.bf16.mxu0 0
    %3995 = vmatpush1.bf16.msra.mxu0 0
    %3996 = vmatprep.subr.bf16.mxu0 0
    %3997 = vmatpush1.bf16.msra.mxu0 0
    %3998 = vmatprep.subr.bf16.mxu0 0
    %3999 = vmatpush1.bf16.msra.mxu0 0
    %4000 = vmatprep.mubr.bf16.mxu0 0
    %4001 = vmatmul.mubr.bf16.gmra.mrb[0].mxu0 %v3926
    %v4002 = vpop.f32.mrb[0].mxu0
    %v4003 = vadd.f32 0.0, %v4002
    %v4004 = vpop.f32.mrb[0].mxu0
    %v4005 = vpop.f32.mrb[0].mxu0
    %v4006 = vpop.f32.mrb[0].mxu0
    %4007 = vdwg.mxu0
    %s4008 = scalar_lea.vmem [#allocation3], 77
    %v4009 = vld [vmem:[%s4008] ss:$8 sm:$0x7]
    %v4012 = vcombine.low %v3962, %v3964
    %v4014 = vunpack.c.l.s4 1966171168
    %v4015 = vunpack.c.0.s8 %v4014
    %v4016 = vlaneseq
    %v4017 = vshrl.u32 %v4016, 7
    %v4018 = vsub.s32 %v4015, %v4017
    %v4019 = vrot.slane %v4012, %v4018
    %v4021 = vunpack.c.l.s4 1966171168
    %v4022 = vunpack.c.0.s8 %v4021
    %v4023 = vlaneseq
    %v4024 = vshrl.u32 %v4023, 7
    %v4025 = vsub.s32 %v4022, %v4024
    %v4026 = vrot.slane %v4019, %v4025
    %v4028 = vadd.f32 %v4009, %v4026
    %v4029 = vxor.u32 %v4028, 2147483648
    %v4030 = vmul.f32 %v4029, 1.442695
    %v4031 = vpow.pop %v4030
    %v4032 = vadd.f32 %v4031, 1.0
    %v4033 = vrcp.pop %v4032
    %v4034 = vmul.f32 1.0, %v4033
    %v4035 = vadd.f32 %v4003, %v85
    %v4036 = vmul.f32 %v4034, %v4035
    %v4038 = vrot.slane %v4009, 2
    %v4040 = vadd.f32 %v4038, %v4036
    %v4041 = vtanh.pop %v4040
    %v4042 = vsub.f32 %v3925, %v4041
    %v4044 = vrot.slane %v4034, 1
    %v4046 = vmul.f32 %v4044, %v4042
    %v4047 = vadd.f32 %v4041, %v4046
    %s4048 = sadd.s32 %s87, 29
    %p4049 = scmp.lt.s32.totalorder %s4048, 8
    %s4050 = scalar_select %p4049, 1, 0
    %v4051 = vstv %s4050
    %vm4052 = vcmp.eq.s32.totalorder %v4051, 1
    %v4053 = vsel %vm4052, %v4047, %v3925
    %v4054 = vpack.c.bf16 %v4053, %v4053
    %4055 = vmatprep.subr.bf16.mxu0 %v170
    %4056 = vmatpush1.bf16.msra.mxu0 %v169
    %4057 = vmatprep.subr.bf16.mxu0 %v173
    %4058 = vmatpush1.bf16.msra.mxu0 %v172
    %4059 = vmatprep.subr.bf16.mxu0 %v176
    %4060 = vmatpush1.bf16.msra.mxu0 %v175
    %4061 = vmatprep.subr.bf16.mxu0 %v179
    %4062 = vmatpush1.bf16.msra.mxu0 %v178
    %4063 = vmatprep.subr.bf16.mxu0 %v182
    %4064 = vmatpush1.bf16.msra.mxu0 %v181
    %4065 = vmatprep.subr.bf16.mxu0 %v185
    %4066 = vmatpush1.bf16.msra.mxu0 %v184
    %4067 = vmatprep.subr.bf16.mxu0 %v188
    %4068 = vmatpush1.bf16.msra.mxu0 %v187
    %4069 = vmatprep.subr.bf16.mxu0 %v191
    %4070 = vmatpush1.bf16.msra.mxu0 %v190
    %4071 = vmatprep.subr.bf16.mxu0 0
    %4072 = vmatpush1.bf16.msra.mxu0 0
    %4073 = vmatprep.subr.bf16.mxu0 0
    %4074 = vmatpush1.bf16.msra.mxu0 0
    %4075 = vmatprep.subr.bf16.mxu0 0
    %4076 = vmatpush1.bf16.msra.mxu0 0
    %4077 = vmatprep.subr.bf16.mxu0 0
    %4078 = vmatpush1.bf16.msra.mxu0 0
    %4079 = vmatprep.subr.bf16.mxu0 0
    %4080 = vmatpush1.bf16.msra.mxu0 0
    %4081 = vmatprep.subr.bf16.mxu0 0
    %4082 = vmatpush1.bf16.msra.mxu0 0
    %4083 = vmatprep.subr.bf16.mxu0 0
    %4084 = vmatpush1.bf16.msra.mxu0 0
    %4085 = vmatprep.subr.bf16.mxu0 0
    %4086 = vmatpush1.bf16.msra.mxu0 0
    %4087 = vmatprep.mubr.bf16.mxu0 0
    %4088 = vmatmul.mubr.bf16.gmra.mrb[0].mxu0 %v4054
    %v4089 = vpop.f32.mrb[0].mxu0
    %v4090 = vadd.f32 0.0, %v4089
    %v4091 = vpop.f32.mrb[0].mxu0
    %v4092 = vadd.f32 0.0, %v4091
    %v4093 = vpop.f32.mrb[0].mxu0
    %v4094 = vpop.f32.mrb[0].mxu0
    %4095 = vdwg.mxu0
    %4096 = vmatprep.subr.bf16.mxu0 0
    %4097 = vmatpush1.bf16.msra.mxu0 %v171
    %4098 = vmatprep.subr.bf16.mxu0 0
    %4099 = vmatpush1.bf16.msra.mxu0 %v174
    %4100 = vmatprep.subr.bf16.mxu0 0
    %4101 = vmatpush1.bf16.msra.mxu0 %v177
    %4102 = vmatprep.subr.bf16.mxu0 0
    %4103 = vmatpush1.bf16.msra.mxu0 %v180
    %4104 = vmatprep.subr.bf16.mxu0 0
    %4105 = vmatpush1.bf16.msra.mxu0 %v183
    %4106 = vmatprep.subr.bf16.mxu0 0
    %4107 = vmatpush1.bf16.msra.mxu0 %v186
    %4108 = vmatprep.subr.bf16.mxu0 0
    %4109 = vmatpush1.bf16.msra.mxu0 %v189
    %4110 = vmatprep.subr.bf16.mxu0 0
    %4111 = vmatpush1.bf16.msra.mxu0 %v192
    %4112 = vmatprep.subr.bf16.mxu0 0
    %4113 = vmatpush1.bf16.msra.mxu0 0
    %4114 = vmatprep.subr.bf16.mxu0 0
    %4115 = vmatpush1.bf16.msra.mxu0 0
    %4116 = vmatprep.subr.bf16.mxu0 0
    %4117 = vmatpush1.bf16.msra.mxu0 0
    %4118 = vmatprep.subr.bf16.mxu0 0
    %4119 = vmatpush1.bf16.msra.mxu0 0
    %4120 = vmatprep.subr.bf16.mxu0 0
    %4121 = vmatpush1.bf16.msra.mxu0 0
    %4122 = vmatprep.subr.bf16.mxu0 0
    %4123 = vmatpush1.bf16.msra.mxu0 0
    %4124 = vmatprep.subr.bf16.mxu0 0
    %4125 = vmatpush1.bf16.msra.mxu0 0
    %4126 = vmatprep.subr.bf16.mxu0 0
    %4127 = vmatpush1.bf16.msra.mxu0 0
    %4128 = vmatprep.mubr.bf16.mxu0 0
    %4129 = vmatmul.mubr.bf16.gmra.mrb[0].mxu0 %v4054
    %v4130 = vpop.f32.mrb[0].mxu0
    %v4131 = vadd.f32 0.0, %v4130
    %v4132 = vpop.f32.mrb[0].mxu0
    %v4133 = vpop.f32.mrb[0].mxu0
    %v4134 = vpop.f32.mrb[0].mxu0
    %4135 = vdwg.mxu0
    %s4136 = scalar_lea.vmem [#allocation3], 78
    %v4137 = vld [vmem:[%s4136] ss:$8 sm:$0x7]
    %v4140 = vcombine.low %v4090, %v4092
    %v4142 = vunpack.c.l.s4 1966171168
    %v4143 = vunpack.c.0.s8 %v4142
    %v4144 = vlaneseq
    %v4145 = vshrl.u32 %v4144, 7
    %v4146 = vsub.s32 %v4143, %v4145
    %v4147 = vrot.slane %v4140, %v4146
    %v4149 = vunpack.c.l.s4 1966171168
    %v4150 = vunpack.c.0.s8 %v4149
    %v4151 = vlaneseq
    %v4152 = vshrl.u32 %v4151, 7
    %v4153 = vsub.s32 %v4150, %v4152
    %v4154 = vrot.slane %v4147, %v4153
    %v4156 = vadd.f32 %v4137, %v4154
    %v4157 = vxor.u32 %v4156, 2147483648
    %v4158 = vmul.f32 %v4157, 1.442695
    %v4159 = vpow.pop %v4158
    %v4160 = vadd.f32 %v4159, 1.0
    %v4161 = vrcp.pop %v4160
    %v4162 = vmul.f32 1.0, %v4161
    %v4163 = vadd.f32 %v4131, %v85
    %v4164 = vmul.f32 %v4162, %v4163
    %v4166 = vrot.slane %v4137, 2
    %v4168 = vadd.f32 %v4166, %v4164
    %v4169 = vtanh.pop %v4168
    %v4170 = vsub.f32 %v4053, %v4169
    %v4172 = vrot.slane %v4162, 1
    %v4174 = vmul.f32 %v4172, %v4170
    %v4175 = vadd.f32 %v4169, %v4174
    %s4176 = sadd.s32 %s87, 30
    %p4177 = scmp.lt.s32.totalorder %s4176, 8
    %s4178 = scalar_select %p4177, 1, 0
    %v4179 = vstv %s4178
    %vm4180 = vcmp.eq.s32.totalorder %v4179, 1
    %v4181 = vsel %vm4180, %v4175, %v4053
    %v4182 = vpack.c.bf16 %v4181, %v4181
    %4183 = vmatprep.subr.bf16.mxu0 %v170
    %4184 = vmatpush1.bf16.msra.mxu0 %v169
    %4185 = vmatprep.subr.bf16.mxu0 %v173
    %4186 = vmatpush1.bf16.msra.mxu0 %v172
    %4187 = vmatprep.subr.bf16.mxu0 %v176
    %4188 = vmatpush1.bf16.msra.mxu0 %v175
    %4189 = vmatprep.subr.bf16.mxu0 %v179
    %4190 = vmatpush1.bf16.msra.mxu0 %v178
    %4191 = vmatprep.subr.bf16.mxu0 %v182
    %4192 = vmatpush1.bf16.msra.mxu0 %v181
    %4193 = vmatprep.subr.bf16.mxu0 %v185
    %4194 = vmatpush1.bf16.msra.mxu0 %v184
    %4195 = vmatprep.subr.bf16.mxu0 %v188
    %4196 = vmatpush1.bf16.msra.mxu0 %v187
    %4197 = vmatprep.subr.bf16.mxu0 %v191
    %4198 = vmatpush1.bf16.msra.mxu0 %v190
    %4199 = vmatprep.subr.bf16.mxu0 0
    %4200 = vmatpush1.bf16.msra.mxu0 0
    %4201 = vmatprep.subr.bf16.mxu0 0
    %4202 = vmatpush1.bf16.msra.mxu0 0
    %4203 = vmatprep.subr.bf16.mxu0 0
    %4204 = vmatpush1.bf16.msra.mxu0 0
    %4205 = vmatprep.subr.bf16.mxu0 0
    %4206 = vmatpush1.bf16.msra.mxu0 0
    %4207 = vmatprep.subr.bf16.mxu0 0
    %4208 = vmatpush1.bf16.msra.mxu0 0
    %4209 = vmatprep.subr.bf16.mxu0 0
    %4210 = vmatpush1.bf16.msra.mxu0 0
    %4211 = vmatprep.subr.bf16.mxu0 0
    %4212 = vmatpush1.bf16.msra.mxu0 0
    %4213 = vmatprep.subr.bf16.mxu0 0
    %4214 = vmatpush1.bf16.msra.mxu0 0
    %4215 = vmatprep.mubr.bf16.mxu0 0
    %4216 = vmatmul.mubr.bf16.gmra.mrb[0].mxu0 %v4182
    %v4217 = vpop.f32.mrb[0].mxu0
    %v4218 = vadd.f32 0.0, %v4217
    %v4219 = vpop.f32.mrb[0].mxu0
    %v4220 = vadd.f32 0.0, %v4219
    %v4221 = vpop.f32.mrb[0].mxu0
    %v4222 = vpop.f32.mrb[0].mxu0
    %4223 = vdwg.mxu0
    %4224 = vmatprep.subr.bf16.mxu0 0
    %4225 = vmatpush1.bf16.msra.mxu0 %v171
    %4226 = vmatprep.subr.bf16.mxu0 0
    %4227 = vmatpush1.bf16.msra.mxu0 %v174
    %4228 = vmatprep.subr.bf16.mxu0 0
    %4229 = vmatpush1.bf16.msra.mxu0 %v177
    %4230 = vmatprep.subr.bf16.mxu0 0
    %4231 = vmatpush1.bf16.msra.mxu0 %v180
    %4232 = vmatprep.subr.bf16.mxu0 0
    %4233 = vmatpush1.bf16.msra.mxu0 %v183
    %4234 = vmatprep.subr.bf16.mxu0 0
    %4235 = vmatpush1.bf16.msra.mxu0 %v186
    %4236 = vmatprep.subr.bf16.mxu0 0
    %4237 = vmatpush1.bf16.msra.mxu0 %v189
    %4238 = vmatprep.subr.bf16.mxu0 0
    %4239 = vmatpush1.bf16.msra.mxu0 %v192
    %4240 = vmatprep.subr.bf16.mxu0 0
    %4241 = vmatpush1.bf16.msra.mxu0 0
    %4242 = vmatprep.subr.bf16.mxu0 0
    %4243 = vmatpush1.bf16.msra.mxu0 0
    %4244 = vmatprep.subr.bf16.mxu0 0
    %4245 = vmatpush1.bf16.msra.mxu0 0
    %4246 = vmatprep.subr.bf16.mxu0 0
    %4247 = vmatpush1.bf16.msra.mxu0 0
    %4248 = vmatprep.subr.bf16.mxu0 0
    %4249 = vmatpush1.bf16.msra.mxu0 0
    %4250 = vmatprep.subr.bf16.mxu0 0
    %4251 = vmatpush1.bf16.msra.mxu0 0
    %4252 = vmatprep.subr.bf16.mxu0 0
    %4253 = vmatpush1.bf16.msra.mxu0 0
    %4254 = vmatprep.subr.bf16.mxu0 0
    %4255 = vmatpush1.bf16.msra.mxu0 0
    %4256 = vmatprep.mubr.bf16.mxu0 0
    %4257 = vmatmul.mubr.bf16.gmra.mrb[0].mxu0 %v4182
    %v4258 = vpop.f32.mrb[0].mxu0
    %v4259 = vadd.f32 0.0, %v4258
    %v4260 = vpop.f32.mrb[0].mxu0
    %v4261 = vpop.f32.mrb[0].mxu0
    %v4262 = vpop.f32.mrb[0].mxu0
    %4263 = vdwg.mxu0
    %s4264 = scalar_lea.vmem [#allocation3], 79
    %v4265 = vld [vmem:[%s4264] ss:$8 sm:$0x7]
    %v4268 = vcombine.low %v4218, %v4220
    %v4270 = vunpack.c.l.s4 1966171168
    %v4271 = vunpack.c.0.s8 %v4270
    %v4272 = vlaneseq
    %v4273 = vshrl.u32 %v4272, 7
    %v4274 = vsub.s32 %v4271, %v4273
    %v4275 = vrot.slane %v4268, %v4274
    %v4277 = vunpack.c.l.s4 1966171168
    %v4278 = vunpack.c.0.s8 %v4277
    %v4279 = vlaneseq
    %v4280 = vshrl.u32 %v4279, 7
    %v4281 = vsub.s32 %v4278, %v4280
    %v4282 = vrot.slane %v4275, %v4281
    %v4284 = vadd.f32 %v4265, %v4282
    %v4285 = vxor.u32 %v4284, 2147483648
    %v4286 = vmul.f32 %v4285, 1.442695
    %v4287 = vpow.pop %v4286
    %v4288 = vadd.f32 %v4287, 1.0
    %v4289 = vrcp.pop %v4288
    %v4290 = vmul.f32 1.0, %v4289
    %v4291 = vadd.f32 %v4259, %v85
    %v4292 = vmul.f32 %v4290, %v4291
    %v4294 = vrot.slane %v4265, 2
    %v4296 = vadd.f32 %v4294, %v4292
    %v4297 = vtanh.pop %v4296
    %v4298 = vsub.f32 %v4181, %v4297
    %v4300 = vrot.slane %v4290, 1
    %v4302 = vmul.f32 %v4300, %v4298
    %v4303 = vadd.f32 %v4297, %v4302
    %s4304 = sadd.s32 %s87, 31
    %p4305 = scmp.lt.s32.totalorder %s4304, 8
    %s4306 = scalar_select %p4305, 1, 0
    %v4307 = vstv %s4306
    %vm4308 = vcmp.eq.s32.totalorder %v4307, 1
    %v4309 = vsel %vm4308, %v4303, %v4181
    %v4311 = vlaneseq
    %v4312 = vshrl.u32 %v4311, 7
    %v4313 = vsub.s32 0, %v4312
    %v4314 = vrot.slane %v469, %v4313
    %v4317 = vlaneseq
    %v4318 = vshrl.u32 %v4317, 7
    %v4319 = vsub.s32 0, %v4318
    %v4320 = vrot.slane %v597, %v4319
    %v4323 = vlaneseq
    %v4324 = vshrl.u32 %v4323, 7
    %v4325 = vsub.s32 0, %v4324
    %v4326 = vrot.slane %v725, %v4325
    %v4329 = vlaneseq
    %v4330 = vshrl.u32 %v4329, 7
    %v4331 = vsub.s32 0, %v4330
    %v4332 = vrot.slane %v853, %v4331
    %v4335 = vlaneseq
    %v4336 = vshrl.u32 %v4335, 7
    %v4337 = vsub.s32 0, %v4336
    %v4338 = vrot.slane %v981, %v4337
    %v4341 = vlaneseq
    %v4342 = vshrl.u32 %v4341, 7
    %v4343 = vsub.s32 0, %v4342
    %v4344 = vrot.slane %v1109, %v4343
    %v4347 = vlaneseq
    %v4348 = vshrl.u32 %v4347, 7
    %v4349 = vsub.s32 0, %v4348
    %v4350 = vrot.slane %v1237, %v4349
    %v4353 = vlaneseq
    %v4354 = vshrl.u32 %v4353, 7
    %v4355 = vsub.s32 0, %v4354
    %v4356 = vrot.slane %v1493, %v4355
    %v4359 = vlaneseq
    %v4360 = vshrl.u32 %v4359, 7
    %v4361 = vsub.s32 0, %v4360
    %v4362 = vrot.slane %v1621, %v4361
    %v4365 = vlaneseq
    %v4366 = vshrl.u32 %v4365, 7
    %v4367 = vsub.s32 0, %v4366
    %v4368 = vrot.slane %v1749, %v4367
    %v4371 = vlaneseq
    %v4372 = vshrl.u32 %v4371, 7
    %v4373 = vsub.s32 0, %v4372
    %v4374 = vrot.slane %v1877, %v4373
    %v4377 = vlaneseq
    %v4378 = vshrl.u32 %v4377, 7
    %v4379 = vsub.s32 0, %v4378
    %v4380 = vrot.slane %v2005, %v4379
    %v4383 = vlaneseq
    %v4384 = vshrl.u32 %v4383, 7
    %v4385 = vsub.s32 0, %v4384
    %v4386 = vrot.slane %v2133, %v4385
    %v4389 = vlaneseq
    %v4390 = vshrl.u32 %v4389, 7
    %v4391 = vsub.s32 0, %v4390
    %v4392 = vrot.slane %v2261, %v4391
    %vm4394 = vcmask 1040384
    %v4395 = vsel %vm4394, %v341, %v4314
    %vm4396 = vcmask 1041408
    %v4397 = vsel %vm4396, %v4395, %v4320
    %vm4398 = vcmask 1042432
    %v4399 = vsel %vm4398, %v4397, %v4326
    %vm4400 = vcmask 1043456
    %v4401 = vsel %vm4400, %v4399, %v4332
    %vm4402 = vcmask 1044480
    %v4403 = vsel %vm4402, %v4401, %v4338
    %vm4404 = vcmask 1045504
    %v4405 = vsel %vm4404, %v4403, %v4344
    %vm4406 = vcmask 1046528
    %v4407 = vsel %vm4406, %v4405, %v4350
    %v4408 = vsel %vm4394, %v1365, %v4356
    %v4409 = vsel %vm4396, %v4408, %v4362
    %v4410 = vsel %vm4398, %v4409, %v4368
    %v4411 = vsel %vm4400, %v4410, %v4374
    %v4412 = vsel %vm4402, %v4411, %v4380
    %v4413 = vsel %vm4404, %v4412, %v4386
    %v4414 = vsel %vm4406, %v4413, %v4392
    %v4416 = vlaneseq
    %v4417 = vshrl.u32 %v4416, 7
    %v4418 = vsub.s32 0, %v4417
    %v4419 = vrot.slane %v2517, %v4418
    %v4422 = vlaneseq
    %v4423 = vshrl.u32 %v4422, 7
    %v4424 = vsub.s32 0, %v4423
    %v4425 = vrot.slane %v2645, %v4424
    %v4428 = vlaneseq
    %v4429 = vshrl.u32 %v4428, 7
    %v4430 = vsub.s32 0, %v4429
    %v4431 = vrot.slane %v2773, %v4430
    %v4434 = vlaneseq
    %v4435 = vshrl.u32 %v4434, 7
    %v4436 = vsub.s32 0, %v4435
    %v4437 = vrot.slane %v2901, %v4436
    %v4440 = vlaneseq
    %v4441 = vshrl.u32 %v4440, 7
    %v4442 = vsub.s32 0, %v4441
    %v4443 = vrot.slane %v3029, %v4442
    %v4446 = vlaneseq
    %v4447 = vshrl.u32 %v4446, 7
    %v4448 = vsub.s32 0, %v4447
    %v4449 = vrot.slane %v3157, %v4448
    %v4452 = vlaneseq
    %v4453 = vshrl.u32 %v4452, 7
    %v4454 = vsub.s32 0, %v4453
    %v4455 = vrot.slane %v3285, %v4454
    %v4458 = vlaneseq
    %v4459 = vshrl.u32 %v4458, 7
    %v4460 = vsub.s32 0, %v4459
    %v4461 = vrot.slane %v3541, %v4460
    %v4464 = vlaneseq
    %v4465 = vshrl.u32 %v4464, 7
    %v4466 = vsub.s32 0, %v4465
    %v4467 = vrot.slane %v3669, %v4466
    %v4470 = vlaneseq
    %v4471 = vshrl.u32 %v4470, 7
    %v4472 = vsub.s32 0, %v4471
    %v4473 = vrot.slane %v3797, %v4472
    %v4476 = vlaneseq
    %v4477 = vshrl.u32 %v4476, 7
    %v4478 = vsub.s32 0, %v4477
    %v4479 = vrot.slane %v3925, %v4478
    %v4482 = vlaneseq
    %v4483 = vshrl.u32 %v4482, 7
    %v4484 = vsub.s32 0, %v4483
    %v4485 = vrot.slane %v4053, %v4484
    %v4488 = vlaneseq
    %v4489 = vshrl.u32 %v4488, 7
    %v4490 = vsub.s32 0, %v4489
    %v4491 = vrot.slane %v4181, %v4490
    %v4494 = vlaneseq
    %v4495 = vshrl.u32 %v4494, 7
    %v4496 = vsub.s32 0, %v4495
    %v4497 = vrot.slane %v4309, %v4496
    %v4499 = vsel %vm4394, %v2389, %v4419
    %v4500 = vsel %vm4396, %v4499, %v4425
    %v4501 = vsel %vm4398, %v4500, %v4431
    %v4502 = vsel %vm4400, %v4501, %v4437
    %v4503 = vsel %vm4402, %v4502, %v4443
    %v4504 = vsel %vm4404, %v4503, %v4449
    %v4505 = vsel %vm4406, %v4504, %v4455
    %v4506 = vsel %vm4394, %v3413, %v4461
    %v4507 = vsel %vm4396, %v4506, %v4467
    %v4508 = vsel %vm4398, %v4507, %v4473
    %v4509 = vsel %vm4400, %v4508, %v4479
    %v4510 = vsel %vm4402, %v4509, %v4485
    %v4511 = vsel %vm4404, %v4510, %v4491
    %v4512 = vsel %vm4406, %v4511, %v4497
    %4513 = vst [vmem:[#allocation8] sm:$0xff] %v4407
    %4514 = vst [vmem:[#allocation8 + $0x8] sm:$0xff] %v4414
    %4515 = vst [vmem:[#allocation8 + $0x10] sm:$0xff] %v4505
    %4516 = vst [vmem:[#allocation8 + $0x18] sm:$0xff] %v4512
    %4517 = vst [vmem:[#allocation2] sm:$0x1] %v4309
    // Predicated region
    $region30: #{tpu_custom_call.1} parent=1 // pred_check
      _
    $region31: #{tpu_custom_call.1} parent=1 // pred_check_branch
      %4519 = sbr.rel (0) target = $region33
    $region32: #{tpu_custom_call.1} parent=1 // pred_region
      %s4521 = ssub.s32 512, 512
      %4522 = vsyncadd [#allocation5], %s4521
      %s4523 = sshll.u32 [#allocation8], 4
      %s4524 = int_to_ptr.vmem [resolvable:$true] %s4523
      %4529 = dma.vmem_to_hbm [thread:$0]  %s4524, 512, %s4, [#allocation5], 128, 128, 8
    $region33: #{tpu_custom_call.1} parent=1 // pred_fallthru
      _
    // Predicated region
    $region34: #{tpu_custom_call.1} parent=1 // pred_check
      _
    $region35: #{tpu_custom_call.1} parent=1 // pred_check_branch
      %4531 = sbr.rel (0) target = $region37
    $region36: #{tpu_custom_call.1} parent=1 // pred_region
      %4532 = dma.done [#allocation5], 512
    $region37: #{tpu_custom_call.1} parent=1 // pred_fallthru
      _
    %4533 = vsyncpa [#allocation4], 1
    %4534 = vsyncpa [#allocation7], 1
    %4535 = vsyncpa [#allocation5], 1

</llo_original>
